<compile_context>
chip_gen: v7x
topology: tpu7x:2x2x1
jax: 0.10.0
libtpu: 0.0.40
codegen_flags: <defaults>
</compile_context>

<pallas_src>
import jax
import jax.numpy as jnp
from jax.experimental import pallas as pl
from jax.experimental.pallas import tpu as pltpu

d_k = d_v = 32
d_model = 128
n_heads = 4


def mha_kernel(mask_ref, xq_ref, kproj_ref, vproj_ref, w_rq_ref, w_o_ref,
               out_ref, attn_ref):
    f32 = jnp.float32
    bf16 = jnp.bfloat16
    bb = xq_ref.shape[0]                     # batch elements per grid step

    w_rq = w_rq_ref[...]                     # (D, 2D) bf16, loaded once
    w_o = w_o_ref[...]                       # (HD, D) bf16, loaded once

    for b in range(bb):                      # static unroll over batch block
        x_q = xq_ref[b]                                   # (TQ, D)  bf16
        k = kproj_ref[b].reshape(-1, n_heads, d_k)        # (S, H, dk) bf16
        v = vproj_ref[b].reshape(-1, n_heads, d_v)        # (S, H, dv) bf16

        # Fused [residual | Q] projection: one (TQ, 2D) bf16 MXU matmul.
        # W_Q was pre-scaled by 1/sqrt(d_k) in the wrapper.
        rq = jnp.dot(x_q, w_rq, preferred_element_type=f32)          # (TQ, 2D)
        residual = rq[:, :d_model]                                    # (TQ, D) f32
        q = rq[:, d_model:].astype(bf16).reshape(-1, n_heads, d_k)    # (TQ, H, dk)

        # Batched-over-heads scores (MXU); masked_fill + softmax in f32.
        scores = jnp.einsum("qhd,khd->hqk", q, k,
                            preferred_element_type=f32)               # (H, TQ, S)
        masked = jnp.broadcast_to(mask_ref[b][None, :, :] != 0, scores.shape)
        scores = jnp.where(masked, jnp.float32(-1e9), scores)         # masked_fill_

        m = jnp.max(scores, axis=-1, keepdims=True)
        e = jnp.exp(scores - m)
        denom = jnp.sum(e, axis=-1, keepdims=True)
        attn = e * pl.reciprocal(denom, approx=True)                  # (H, TQ, S) f32

        attn_q = attn.astype(attn_ref.dtype)
        attn_ref[b] = attn_q                                          # bf16 writeback
        attn_pv = attn_q.astype(bf16)        # no-op when attn output is bf16

        ctx = jnp.einsum("hqk,khd->qhd", attn_pv, v,
                         preferred_element_type=f32)                  # (TQ, H, dv)
        ctx = ctx.reshape(-1, n_heads * d_v).astype(bf16)             # (TQ, 128)
        output = jnp.dot(ctx, w_o, preferred_element_type=f32)        # (TQ, D)

        # Residual add + LayerNorm(d_model) with weight=1, bias=0, eps=1e-5
        # (matches the freshly-constructed nn.LayerNorm in the reference forward).
        y = output + residual
        mean = jnp.mean(y, axis=-1, keepdims=True)
        var = jnp.mean((y - mean) ** 2, axis=-1, keepdims=True)
        out_ref[b] = ((y - mean) * jax.lax.rsqrt(var + 1e-5)).astype(out_ref.dtype)


def _vmem_capacity_bytes():
    try:
        return int(pltpu.get_tpu_info().vmem_capacity_bytes)
    except Exception:
        return 64 * 2**20          # conservative (v7x-sized) fallback


def _vmem_estimate(bb, tq, S, attn_bytes):
    """Rough per-step VMEM footprint: double-buffered blocks + f32 temporaries."""
    D, HD = d_model, n_heads * d_v
    in_blocks = (bb * tq * S * 1                 # int8 mask tile
                 + bb * tq * D * 2               # x_q tile (bf16)
                 + 2 * bb * S * HD * 2           # K_proj / V_proj (bf16, full seq)
                 + D * (2 * D) * 2 + HD * D * 2) # weights
    out_blocks = bb * tq * D * 4 + bb * n_heads * tq * S * attn_bytes
    pipelined = 2 * (in_blocks + out_blocks)     # double buffered
    temps = (bb * n_heads * tq * S * (4 + 4 + attn_bytes + 2)   # scores / e / attn
             + bb * tq * S                                       # mask bool
             + bb * tq * (2 * D) * 4 + 3 * bb * tq * HD * 4)     # rq / ctx / y
    return pipelined + temps


def _choose_tiles(B, S, attn_bytes, budget):
    """Pick (batch_block, query_tile) from the VMEM budget and grid-step rules."""
    # query-tile candidates: full seq (small S) or lane/sublane-friendly sizes
    cands = [t for t in (512, 256, 128, 64, 32) if t <= S and S % t == 0]
    if S <= 512 and S not in cands:
        cands = [S] + cands
    cands = sorted(set(cands), reverse=True) or [S]
    # guarantee >= 2 grid steps for megacore when B == 1 and queries can split
    if B == 1:
        split = [t for t in cands if t < S]
        if split:
            cands = split
    tq = cands[-1]
    for t in cands:                              # largest tile that fits VMEM
        if _vmem_estimate(1, t, S, attn_bytes) <= budget:
            tq = t
            break
    # pack several batch elements per step at small S (amortize step overhead),
    # but keep >= 2 grid steps when possible (v7x has 2 TensorCores).
    bb = 1
    if tq == S and S < 128:
        bb = max(1, min(B, 128 // S))
        while bb > 1 and (B % bb != 0
                          or (B // bb) * (S // tq) < 2
                          or _vmem_estimate(bb, tq, S, attn_bytes) > budget):
            bb -= 1
    return bb, tq


def multi_head_attention(input_Q, input_K, input_V, attn_mask, params,
                         *, tq=None, attn_dtype=jnp.bfloat16):
    B, S, D = input_Q.shape
    assert D == d_model
    wfc0, wq, wk, wv, wfc = params
    HD = n_heads * d_v
    bf16 = jnp.bfloat16
    f32 = jnp.float32
    scale = 1.0 / float(d_k) ** 0.5

    attn_bytes = jnp.dtype(attn_dtype).itemsize
    capacity = _vmem_capacity_bytes()
    budget = min(int(0.7 * capacity), 100 * 2**20)

    if tq is None:
        bb, tq = _choose_tiles(B, S, attn_bytes, budget)
    else:
        bb = 1
    if S % tq != 0:
        raise ValueError(f"seq_len={S} must be a multiple of the query tile tq={tq}")
    if tq != S and tq % 8 != 0:
        raise ValueError(f"query tile tq={tq} must be a multiple of 8 (sublane) "
                         f"or equal to seq_len={S}")
    nq = S // tq
    nb = B // bb

    # PyTorch nn.Linear stores (out, in); pre-transpose once to (in, out), bf16.
    # Fold 1/sqrt(d_k) into W_Q and fuse fc0 (residual) with W_Q -> one matmul.
    w_rq = jnp.concatenate([wfc0.T, (wq * scale).T], axis=1).astype(bf16)   # (D, 2D)
    w_o = wfc.T.astype(bf16)                                                # (HD, D)

    xq = input_Q.astype(bf16)
    # K / V projections hoisted out of the per-query-tile grid: computed once
    # per token (bf16 storage, f32 accumulation) instead of nq times.
    k_proj = jnp.einsum("bsd,de->bse", input_K.astype(bf16), wk.T.astype(bf16),
                        preferred_element_type=f32).astype(bf16)            # (B,S,HD)
    v_proj = jnp.einsum("bsd,de->bse", input_V.astype(bf16), wv.T.astype(bf16),
                        preferred_element_type=f32).astype(bf16)            # (B,S,HD)
    mask_i8 = attn_mask.astype(jnp.int8)                                    # (B,S,S)

    out_shape = (
        jax.ShapeDtypeStruct((B, S, D), jnp.float32),           # layernorm output
        jax.ShapeDtypeStruct((B, n_heads, S, S), attn_dtype),   # attn probabilities
    )
    in_specs = [
        pl.BlockSpec((bb, tq, S), lambda b, q: (b, q, 0)),      # int8 mask tile
        pl.BlockSpec((bb, tq, D), lambda b, q: (b, q, 0)),      # input_Q tile
        pl.BlockSpec((bb, S, HD), lambda b, q: (b, 0, 0)),      # K projection
        pl.BlockSpec((bb, S, HD), lambda b, q: (b, 0, 0)),      # V projection
        pl.BlockSpec((D, 2 * D), lambda b, q: (0, 0)),          # [Wfc0^T | W_Q^T]
        pl.BlockSpec((HD, D), lambda b, q: (0, 0)),             # W_fc^T
    ]
    out_specs = (
        pl.BlockSpec((bb, tq, D), lambda b, q: (b, q, 0)),
        pl.BlockSpec((bb, n_heads, tq, S), lambda b, q: (b, 0, q, 0)),
    )

    flops = (2 * B * S * D * (2 * D)                 # fused residual+Q projection
             + 2 * 2 * B * n_heads * S * S * d_k     # QK^T and PV
             + 2 * B * S * HD * D)                   # output projection
    bytes_accessed = (B * S * S                              # int8 mask
                      + 3 * B * S * D * 2                    # xq, k_proj, v_proj
                      + B * S * D * 4                        # layernorm output
                      + B * n_heads * S * S * attn_bytes     # attn writeback (dominant)
                      + (D * 2 * D + HD * D) * 2)            # weights
    cost = pl.CostEstimate(flops=int(flops),
                           transcendentals=int(B * n_heads * S * S),
                           bytes_accessed=int(bytes_accessed))

    est = _vmem_estimate(bb, tq, S, attn_bytes)
    vmem_limit = int(min(budget, max(2 * est, 16 * 2**20)))

    return pl.pallas_call(
        mha_kernel,
        out_shape=out_shape,
        grid=(nb, nq),
        in_specs=in_specs,
        out_specs=out_specs,
        compiler_params=pltpu.CompilerParams(
            dimension_semantics=("parallel", "parallel"),
            vmem_limit_bytes=vmem_limit,
        ),
        cost_estimate=cost,
    )(mask_i8, xq, k_proj, v_proj, w_rq, w_o)


def reference(input_Q, input_K, input_V, attn_mask, params):
    """Pure-JAX f32 reference mirroring the PyTorch forward."""
    wfc0, wq, wk, wv, wfc = params
    B, S, D = input_Q.shape
    residual = input_Q @ wfc0.T
    Q = (input_Q @ wq.T).reshape(B, S, n_heads, d_k).transpose(0, 2, 1, 3)
    K = (input_K @ wk.T).reshape(B, S, n_heads, d_k).transpose(0, 2, 1, 3)
    V = (input_V @ wv.T).reshape(B, S, n_heads, d_v).transpose(0, 2, 1, 3)
    scores = jnp.einsum("bhqd,bhkd->bhqk", Q, K) / jnp.sqrt(jnp.float32(d_k))
    scores = jnp.where(attn_mask[:, None, :, :], -1e9, scores)
    attn = jax.nn.softmax(scores, axis=-1)
    context = jnp.einsum("bhqk,bhkd->bhqd", attn, V)
    context = context.transpose(0, 2, 1, 3).reshape(B, S, n_heads * d_v)
    output = context @ wfc.T
    y = output + residual
    mean = jnp.mean(y, axis=-1, keepdims=True)
    var = jnp.mean((y - mean) ** 2, axis=-1, keepdims=True)
    return (y - mean) / jnp.sqrt(var + 1e-5), attn


if __name__ == "__main__":
    B, S = 2, 8
    key = jax.random.PRNGKey(0)
    kq, kk, kv, km, k0, k1, k2, k3, k4 = jax.random.split(key, 9)

    input_Q = jax.random.normal(kq, (B, S, d_model), dtype=jnp.float32)
    input_K = jax.random.normal(kk, (B, S, d_model), dtype=jnp.float32)
    input_V = jax.random.normal(kv, (B, S, d_model), dtype=jnp.float32)
    # boolean attention mask (True = masked), as in the PyTorch module
    attn_mask = jax.random.uniform(km, (B, S, S)) < 0.3

    bound = 1.0 / jnp.sqrt(jnp.float32(d_model))

    def init_w(k, shape):
        return jax.random.uniform(k, shape, jnp.float32, -bound, bound)

    params = (
        init_w(k0, (d_model, d_model)),           # fc0
        init_w(k1, (d_k * n_heads, d_model)),     # W_Q
        init_w(k2, (d_k * n_heads, d_model)),     # W_K
        init_w(k3, (d_v * n_heads, d_model)),     # W_V
        init_w(k4, (d_model, n_heads * d_v)),     # fc
    )

    out, attn = multi_head_attention(input_Q, input_K, input_V, attn_mask, params)
    jax.block_until_ready((out, attn))

    ref_out, ref_attn = reference(input_Q, input_K, input_V, attn_mask, params)
    assert out.shape == (B, S, d_model)
    assert attn.shape == (B, n_heads, S, S)
    # bf16 MXU operands + bf16 attn output (f32 softmax/LayerNorm) -> relaxed tol
    assert jnp.allclose(out, ref_out, atol=5e-2, rtol=5e-2)
    assert jnp.allclose(attn.astype(jnp.float32), ref_attn, atol=2e-2, rtol=2e-2)

    print("KERNEL_OK")
</pallas_src>

<mosaic_0001>
module attributes {stable_mosaic.version = 11 : i64} {
  func.func @mha_kernel(%arg0: i32, %arg1: i32, %arg2: memref<1x8x8xi8, #tpu.memory_space<vmem>>, %arg3: memref<1x8x128xbf16, #tpu.memory_space<vmem>>, %arg4: memref<1x8x128xbf16, #tpu.memory_space<vmem>>, %arg5: memref<1x8x128xbf16, #tpu.memory_space<vmem>>, %arg6: memref<128x256xbf16, #tpu.memory_space<vmem>>, %arg7: memref<128x128xbf16, #tpu.memory_space<vmem>>, %arg8: memref<1x8x128xf32, #tpu.memory_space<vmem>>, %arg9: memref<1x4x8x8xbf16, #tpu.memory_space<vmem>>) attributes {dimension_semantics = [#tpu.dimension_semantics<parallel>, #tpu.dimension_semantics<parallel>], iteration_bounds = array<i64: 2, 1>, scalar_prefetch = 0 : i64, scratch_operands = 0 : i64, tpu.core_type = #tpu.core_type<tc>, window_params = [{transform_indices = @transform_0, window_bounds = array<i64: 1, 8, 8>}, {transform_indices = @transform_1, window_bounds = array<i64: 1, 8, 128>}, {transform_indices = @transform_2, window_bounds = array<i64: 1, 8, 128>}, {transform_indices = @transform_3, window_bounds = array<i64: 1, 8, 128>}, {pipeline_mode = #tpu.pipeline_mode<synchronous>, transform_indices = @transform_4, window_bounds = array<i64: 128, 256>}, {pipeline_mode = #tpu.pipeline_mode<synchronous>, transform_indices = @transform_5, window_bounds = array<i64: 128, 128>}, {transform_indices = @transform_6, window_bounds = array<i64: 1, 8, 128>}, {transform_indices = @transform_7, window_bounds = array<i64: 1, 4, 8, 8>}]} {
    %c0 = arith.constant 0 : index
    %c0_0 = arith.constant 0 : index
    %0 = vector.load %arg6[%c0, %c0_0] : memref<128x256xbf16, #tpu.memory_space<vmem>>, vector<128x256xbf16>
    %c0_1 = arith.constant 0 : index
    %c0_2 = arith.constant 0 : index
    %1 = vector.load %arg7[%c0_1, %c0_2] : memref<128x128xbf16, #tpu.memory_space<vmem>>, vector<128x128xbf16>
    %c0_3 = arith.constant 0 : index
    %c0_4 = arith.constant 0 : index
    %c0_5 = arith.constant 0 : index
    %2 = vector.load %arg3[%c0_3, %c0_4, %c0_5] : memref<1x8x128xbf16, #tpu.memory_space<vmem>>, vector<1x8x128xbf16>
    %3 = vector.shape_cast %2 : vector<1x8x128xbf16> to vector<8x128xbf16>
    %c0_6 = arith.constant 0 : index
    %c0_7 = arith.constant 0 : index
    %c0_8 = arith.constant 0 : index
    %4 = vector.load %arg4[%c0_6, %c0_7, %c0_8] : memref<1x8x128xbf16, #tpu.memory_space<vmem>>, vector<1x8x128xbf16>
    %5 = vector.shape_cast %4 : vector<1x8x128xbf16> to vector<8x128xbf16>
    %6 = vector.shape_cast %5 : vector<8x128xbf16> to vector<8x4x32xbf16>
    %c0_9 = arith.constant 0 : index
    %c0_10 = arith.constant 0 : index
    %c0_11 = arith.constant 0 : index
    %7 = vector.load %arg5[%c0_9, %c0_10, %c0_11] : memref<1x8x128xbf16, #tpu.memory_space<vmem>>, vector<1x8x128xbf16>
    %8 = vector.shape_cast %7 : vector<1x8x128xbf16> to vector<8x128xbf16>
    %9 = vector.shape_cast %8 : vector<8x128xbf16> to vector<8x4x32xbf16>
    %cst = arith.constant dense<0.000000e+00> : vector<8x256xf32>
    %10 = tpu.matmul %3, %0, %cst {dimension_numbers = #tpu.dot_dimension_numbers<[1], [0], [0], [1], [0, 0, 1, 1], [], []>} : vector<8x128xbf16>, vector<128x256xbf16>, vector<8x256xf32> -> vector<8x256xf32>
    %11 = vector.extract_strided_slice %10 {offsets = [0, 0], sizes = [8, 128], strides = [1, 1]} : vector<8x256xf32> to vector<8x128xf32>
    %12 = vector.extract_strided_slice %10 {offsets = [0, 128], sizes = [8, 128], strides = [1, 1]} : vector<8x256xf32> to vector<8x128xf32>
    %13 = arith.truncf %12 : vector<8x128xf32> to vector<8x128xbf16>
    %14 = vector.shape_cast %13 : vector<8x128xbf16> to vector<8x4x32xbf16>
    "tpu.trace_start"() <{level = 10 : i32, message = "qhd,khd->hqk"}> : () -> ()
    %cst_12 = arith.constant dense<0.000000e+00> : vector<4x8x8xf32>
    %15 = tpu.matmul %14, %6, %cst_12 {dimension_numbers = #tpu.dot_dimension_numbers<[2], [2], [0], [0], [0, 1, 0, 0, 1, 0], [1], [1]>} : vector<8x4x32xbf16>, vector<8x4x32xbf16>, vector<4x8x8xf32> -> vector<4x8x8xf32>
    "tpu.trace_stop"() : () -> ()
    %c0_13 = arith.constant 0 : index
    %c0_14 = arith.constant 0 : index
    %c0_15 = arith.constant 0 : index
    %16 = vector.load %arg2[%c0_13, %c0_14, %c0_15] : memref<1x8x8xi8, #tpu.memory_space<vmem>>, vector<1x8x8xi8>
    %17 = vector.shape_cast %16 : vector<1x8x8xi8> to vector<8x8xi8>
    %18 = vector.shape_cast %17 : vector<8x8xi8> to vector<1x8x8xi8>
    %c0_i8 = arith.constant 0 : i8
    %19 = vector.broadcast %c0_i8 : i8 to vector<1x8x8xi8>
    %20 = arith.cmpi ne, %18, %19 : vector<1x8x8xi8>
    %21 = vector.shape_cast %20 : vector<1x8x8xi1> to vector<1x8x8xi1>
    %22 = vector.broadcast %21 : vector<1x8x8xi1> to vector<4x8x8xi1>
    %cst_16 = arith.constant -1.000000e+09 : f32
    %23 = vector.broadcast %cst_16 : f32 to vector<4x8x8xf32>
    %24 = arith.select %22, %23, %15 : vector<4x8x8xi1>, vector<4x8x8xf32>
    %cst_17 = arith.constant dense<0xFF800000> : vector<4x8xf32>
    %25 = vector.multi_reduction <maximumf>, %24, %cst_17 [2] : vector<4x8x8xf32> to vector<4x8xf32>
    %26 = vector.shape_cast %25 : vector<4x8xf32> to vector<4x8x1xf32>
    %27 = vector.broadcast %26 : vector<4x8x1xf32> to vector<4x8x8xf32>
    %28 = arith.subf %24, %27 : vector<4x8x8xf32>
    %29 = math.exp %28 : vector<4x8x8xf32>
    %cst_18 = arith.constant dense<0.000000e+00> : vector<4x8xf32>
    %30 = vector.multi_reduction <add>, %29, %cst_18 [2] : vector<4x8x8xf32> to vector<4x8xf32>
    %31 = vector.shape_cast %30 : vector<4x8xf32> to vector<4x8x1xf32>
    %32 = tpu.reciprocal %31 {approx = true} : vector<4x8x1xf32> -> vector<4x8x1xf32>
    %33 = vector.broadcast %32 : vector<4x8x1xf32> to vector<4x8x8xf32>
    %34 = arith.mulf %29, %33 : vector<4x8x8xf32>
    %35 = arith.truncf %34 : vector<4x8x8xf32> to vector<4x8x8xbf16>
    %c0_19 = arith.constant 0 : index
    %c0_20 = arith.constant 0 : index
    %c0_21 = arith.constant 0 : index
    %c0_22 = arith.constant 0 : index
    %36 = vector.load %arg9[%c0_19, %c0_20, %c0_21, %c0_22] : memref<1x4x8x8xbf16, #tpu.memory_space<vmem>>, vector<1x4x8x8xbf16>
    %37 = vector.shape_cast %36 : vector<1x4x8x8xbf16> to vector<4x8x8xbf16>
    %38 = vector.shape_cast %35 : vector<4x8x8xbf16> to vector<1x4x8x8xbf16>
    tpu.vector_store %arg9[%c0_19, %c0_20, %c0_21, %c0_22], %38 {strides = array<i32>} : memref<1x4x8x8xbf16, #tpu.memory_space<vmem>>, vector<1x4x8x8xbf16>,
    "tpu.trace_start"() <{level = 10 : i32, message = "hqk,khd->qhd"}> : () -> ()
    %cst_23 = arith.constant dense<0.000000e+00> : vector<4x32x8xf32>
    %39 = tpu.matmul %9, %35, %cst_23 {dimension_numbers = #tpu.dot_dimension_numbers<[0], [2], [2], [1], [0, 1, 0, 2, 1, 1], [1], [0]>} : vector<8x4x32xbf16>, vector<4x8x8xbf16>, vector<4x32x8xf32> -> vector<4x32x8xf32>
    %40 = tpu.transpose %39, [2, 0, 1] : vector<4x32x8xf32> -> vector<8x4x32xf32>
    "tpu.trace_stop"() : () -> ()
    %41 = vector.shape_cast %40 : vector<8x4x32xf32> to vector<8x128xf32>
    %42 = arith.truncf %41 : vector<8x128xf32> to vector<8x128xbf16>
    %cst_24 = arith.constant dense<0.000000e+00> : vector<8x128xf32>
    %43 = tpu.matmul %42, %1, %cst_24 {dimension_numbers = #tpu.dot_dimension_numbers<[1], [0], [0], [1], [0, 0, 1, 1], [], []>} : vector<8x128xbf16>, vector<128x128xbf16>, vector<8x128xf32> -> vector<8x128xf32>
    %44 = arith.addf %43, %11 : vector<8x128xf32>
    %cst_25 = arith.constant dense<0.000000e+00> : vector<8xf32>
    %45 = vector.multi_reduction <add>, %44, %cst_25 [1] : vector<8x128xf32> to vector<8xf32>
    %46 = vector.shape_cast %45 : vector<8xf32> to vector<8x1xf32>
    %cst_26 = arith.constant 1.280000e+02 : f32
    %47 = vector.broadcast %cst_26 : f32 to vector<8x1xf32>
    %48 = arith.divf %46, %47 : vector<8x1xf32>
    %49 = vector.broadcast %48 : vector<8x1xf32> to vector<8x128xf32>
    %50 = arith.subf %44, %49 : vector<8x128xf32>
    %51 = arith.mulf %50, %50 : vector<8x128xf32>
    %cst_27 = arith.constant dense<0.000000e+00> : vector<8xf32>
    %52 = vector.multi_reduction <add>, %51, %cst_27 [1] : vector<8x128xf32> to vector<8xf32>
    %53 = vector.shape_cast %52 : vector<8xf32> to vector<8x1xf32>
    %cst_28 = arith.constant 1.280000e+02 : f32
    %54 = vector.broadcast %cst_28 : f32 to vector<8x1xf32>
    %55 = arith.divf %53, %54 : vector<8x1xf32>
    %56 = vector.broadcast %48 : vector<8x1xf32> to vector<8x128xf32>
    %57 = arith.subf %44, %56 : vector<8x128xf32>
    %cst_29 = arith.constant 9.99999974E-6 : f32
    %58 = vector.broadcast %cst_29 : f32 to vector<8x1xf32>
    %59 = arith.addf %55, %58 : vector<8x1xf32>
    %60 = math.rsqrt %59 : vector<8x1xf32>
    %61 = vector.broadcast %60 : vector<8x1xf32> to vector<8x128xf32>
    %62 = arith.mulf %57, %61 : vector<8x128xf32>
    %c0_30 = arith.constant 0 : index
    %c0_31 = arith.constant 0 : index
    %c0_32 = arith.constant 0 : index
    %63 = vector.load %arg8[%c0_30, %c0_31, %c0_32] : memref<1x8x128xf32, #tpu.memory_space<vmem>>, vector<1x8x128xf32>
    %64 = vector.shape_cast %63 : vector<1x8x128xf32> to vector<8x128xf32>
    %65 = vector.shape_cast %62 : vector<8x128xf32> to vector<1x8x128xf32>
    tpu.vector_store %arg8[%c0_30, %c0_31, %c0_32], %65 {strides = array<i32>} : memref<1x8x128xf32, #tpu.memory_space<vmem>>, vector<1x8x128xf32>,
    return
  }
  func.func @transform_0(%arg0: i32, %arg1: i32) -> (i32, i32, i32) {
    %c0_i32 = arith.constant 0 : i32
    %c0_i32_0 = arith.constant 0 : i32
    return %arg0, %arg1, %c0_i32 : i32, i32, i32
  }
  func.func @transform_1(%arg0: i32, %arg1: i32) -> (i32, i32, i32) {
    %c0_i32 = arith.constant 0 : i32
    %c0_i32_0 = arith.constant 0 : i32
    return %arg0, %arg1, %c0_i32 : i32, i32, i32
  }
  func.func @transform_2(%arg0: i32, %arg1: i32) -> (i32, i32, i32) {
    %c0_i32 = arith.constant 0 : i32
    %c0_i32_0 = arith.constant 0 : i32
    %c0_i32_1 = arith.constant 0 : i32
    return %arg0, %c0_i32, %c0_i32_0 : i32, i32, i32
  }
  func.func @transform_3(%arg0: i32, %arg1: i32) -> (i32, i32, i32) {
    %c0_i32 = arith.constant 0 : i32
    %c0_i32_0 = arith.constant 0 : i32
    %c0_i32_1 = arith.constant 0 : i32
    return %arg0, %c0_i32, %c0_i32_0 : i32, i32, i32
  }
  func.func @transform_4(%arg0: i32, %arg1: i32) -> (i32, i32) {
    %c0_i32 = arith.constant 0 : i32
    %c0_i32_0 = arith.constant 0 : i32
    %c0_i32_1 = arith.constant 0 : i32
    return %c0_i32, %c0_i32_0 : i32, i32
  }
  func.func @transform_5(%arg0: i32, %arg1: i32) -> (i32, i32) {
    %c0_i32 = arith.constant 0 : i32
    %c0_i32_0 = arith.constant 0 : i32
    %c0_i32_1 = arith.constant 0 : i32
    return %c0_i32, %c0_i32_0 : i32, i32
  }
  func.func @transform_6(%arg0: i32, %arg1: i32) -> (i32, i32, i32) {
    %c0_i32 = arith.constant 0 : i32
    %c0_i32_0 = arith.constant 0 : i32
    return %arg0, %arg1, %c0_i32 : i32, i32, i32
  }
  func.func @transform_7(%arg0: i32, %arg1: i32) -> (i32, i32, i32, i32) {
    %c0_i32 = arith.constant 0 : i32
    %c0_i32_0 = arith.constant 0 : i32
    %c0_i32_1 = arith.constant 0 : i32
    return %arg0, %c0_i32, %arg1, %c0_i32_0 : i32, i32, i32, i32
  }
}

</mosaic_0001>

<llo_original>
// kernel: tpu_custom_call.1
$region0: #{tpu_custom_call.1}
  #allocation0 [shape = 'u32[]', space=smem, size = 0x4, offset = 0x4, fixed_abs, tag = 'smem constant byte address 0x4 - core index']
  #allocation1 [shape = 'u32[144,128]{1,0:T(1,128)}', space=vmem, size = 0x12000, scoped, tag = 'internal scratch']
  %s0 = inlined_call_operand.hbm [shape: s8[2,8,8], index: 0, kind: input, shape index: {}]
  %s1 = inlined_call_operand.hbm [shape: bf16[2,8,128], index: 1, kind: input, shape index: {}]
  %s2 = inlined_call_operand.hbm [shape: bf16[2,8,128], index: 2, kind: input, shape index: {}]
  %s3 = inlined_call_operand.vmem [shape: bf16[2,8,128], index: 3, kind: input, shape index: {}]
  %s4 = inlined_call_operand.hbm [shape: bf16[128,256], index: 4, kind: input, shape index: {}]
  %s5 = inlined_call_operand.hbm [shape: bf16[128,128], index: 5, kind: input, shape index: {}]
  %s6 = inlined_call_operand.hbm [shape: f32[2,8,128], index: 6, kind: output, shape index: {0}]
  %s7 = inlined_call_operand.hbm [shape: bf16[2,4,8,8], index: 7, kind: output, shape index: {1}]
  %8 = xla_tuple %s6, %s7
  %s9 = sld [smem:[#allocation0]]
  $region85: #{tpu_custom_call.1} parent=0
    _
  %s11 = ssub.s32 1, %s9
  %s12 = scalar_select 0, %s11, %s9
  $region1: #{tpu_custom_call.1} parent=0
    #allocation2 [shape = 'u8[2048]{0}', space=vmem, size = 0x800, scoped, tag = 'input window, operand 0']
    #allocation3 [shape = 's32[2]{0}', space=sflag, size = 0x8, scoped, tag = 'scoped memory for tpu_custom_call.1']
    #allocation4 [shape = 's32[2]{0}', space=sflag, size = 0x8, scoped, tag = 'scoped memory for tpu_custom_call.1']
    #allocation5 [shape = 'u8[4096]{0}', space=vmem, size = 0x1000, scoped, tag = 'input window, operand 1']
    #allocation6 [shape = 's32[2]{0}', space=sflag, size = 0x8, scoped, tag = 'scoped memory for tpu_custom_call.1']
    #allocation7 [shape = 'u8[4096]{0}', space=vmem, size = 0x1000, scoped, tag = 'input window, operand 2']
    #allocation8 [shape = 'u8[65536]{0}', space=vmem, size = 0x10000, scoped, tag = 'input window, operand 4, single buffered']
    #allocation9 [shape = 's32[1]{0}', space=sflag, size = 0x4, scoped, tag = 'scoped memory for tpu_custom_call.1']
    #allocation10 [shape = 'u8[32768]{0}', space=vmem, size = 0x8000, scoped, tag = 'input window, operand 5, single buffered']
    #allocation11 [shape = 'u8[8192]{0}', space=vmem, size = 0x2000, scoped, tag = 'output window, operand 0']
    #allocation12 [shape = 'u8[16384]{0}', space=vmem, size = 0x4000, scoped, tag = 'output window, operand 1']
    #allocation13 [shape = 's32[2]{0}', space=sflag, size = 0x8, scoped, tag = 'scoped memory for tpu_custom_call.1']
    %13 = vsyncpa [#allocation3], 0
    %s14 = scalar_lea.sflag [#allocation3], 1
    %15 = vsyncpa %s14, 0
    %16 = vsyncpa [#allocation6], 0
    %s17 = scalar_lea.sflag [#allocation6], 1
    %18 = vsyncpa %s17, 0
    %19 = vsyncpa [#allocation9], 0
    %20 = vsyncpa [#allocation4], 0
    %s21 = scalar_lea.sflag [#allocation4], 1
    %22 = vsyncpa %s21, 0
    %23 = vsyncpa [#allocation13], 0
    %s24 = scalar_lea.sflag [#allocation13], 1
    %25 = vsyncpa %s24, 0
    loop: start=0, step=1, limit=4
    $region2: #{tpu_custom_call.1} parent=1 // loop_pre_header
      _
    $region3: #{tpu_custom_call.1} parent=1 // loop_header
      %s27 = sphi 0, %s31
      %p28 = scmp.ge.s32.totalorder %s27, 4
      %s34 = sphi 0, %s46
      %s35 = sphi 0, %s42
      %s36 = sphi 0, %s34
      %s37 = sphi 0, %s35
      %s38 = sphi 0, %s36
      %s39 = sphi 0, %s37
      %s51 = sphi 0, %s53
      %s54 = sphi 0, %s51
      %s55 = sphi 0, %s54
      %s71 = sphi 0, %s55
      %s79 = sphi 0, %s81
      %s82 = sphi 0, %s79
      %s83 = sphi 0, %s82
      %s99 = sphi 0, %s83
      %s105 = sphi 0, %s107
      %s108 = sphi 0, %s105
      %s109 = sphi 0, %s108
      %s125 = sphi 0, %s109
      %s131 = sphi 0, %s133
      %s134 = sphi 0, %s131
      %s135 = sphi 0, %s134
      %s151 = sphi 0, %s135
      %s155 = sphi 0, %s155
      %s157 = sphi 0, %s155
      %s158 = sphi 0, %s157
      %s172 = sphi 0, %s158
      %s176 = sphi 0, %s176
      %s178 = sphi 0, %s176
      %s179 = sphi 0, %s178
      %s193 = sphi 0, %s179
      %s201 = sphi 0, %s203
      %s204 = sphi 0, %s201
      %s205 = sphi 0, %s204
      %s221 = sphi 0, %s205
      %s229 = sphi 0, %s231
      %s232 = sphi 0, %s229
      %s233 = sphi 0, %s232
      %s249 = sphi 0, %s233
    $region4: #{tpu_custom_call.1} parent=1 // loop_header_branch
      %30 = sbr.rel (%p28) target = $region8
    $region5: #{tpu_custom_call.1} parent=1 // loop_body
      %s32 = ssub.s32 %s27, 1
      %s33 = ssub.s32 %s27, 2
      %s40 = sadd.s32 1, %s35
      %p41 = scmp.ge.s32.totalorder %s40, 1
      %s42 = scalar_select %p41, 0, %s40
      %s43 = sadd.s32 1, %s34
      %s44 = scalar_select %p41, %s43, %s34
      %p45 = scmp.ge.s32.totalorder %s44, 2
      %s46 = scalar_select %p45, 0, %s44
      %s47 = ssub.s32 %s34, %s46
      %s48 = ssub.s32 %s35, %s42
      %s49 = sor.u32 %s47, %s48
      %p50 = scmp.eq.s32.totalorder %s49, 0
      %s52 = sadd.s32 %s51, 1
      %s53 = scalar_select %p50, %s51, %s52
      %p56 = pneg %p50
      %p57 = scmp.eq.s32.totalorder %s27, 1
      %p58 = por %p56, %p57
      %p59 = scmp.ne.s32.totalorder %s51, %s54
      %p60 = scmp.eq.s32.totalorder %s27, 0
      %p61 = por %p59, %p60
      %p62 = scmp.ne.s32.totalorder %s51, %s54
      %p63 = scmp.eq.s32.totalorder %s32, 1
      %p64 = por %p62, %p63
      %p65 = scmp.ne.s32.totalorder %s54, %s55
      %p66 = scmp.eq.s32.totalorder %s32, 0
      %p67 = por %p65, %p66
      %p68 = scmp.ne.s32.totalorder %s54, %s55
      %p69 = scmp.eq.s32.totalorder %s33, 1
      %p70 = por %p68, %p69
      %p72 = scmp.ne.s32.totalorder %s55, %s71
      %p73 = scmp.eq.s32.totalorder %s33, 0
      %p74 = por %p72, %p73
      %s75 = ssub.s32 %s34, %s46
      %s76 = ssub.s32 %s35, %s42
      %s77 = sor.u32 %s75, %s76
      %p78 = scmp.eq.s32.totalorder %s77, 0
      %s80 = sadd.s32 %s79, 1
      %s81 = scalar_select %p78, %s79, %s80
      %p84 = pneg %p78
      %p85 = scmp.eq.s32.totalorder %s27, 1
      %p86 = por %p84, %p85
      %p87 = scmp.ne.s32.totalorder %s79, %s82
      %p88 = scmp.eq.s32.totalorder %s27, 0
      %p89 = por %p87, %p88
      %p90 = scmp.ne.s32.totalorder %s79, %s82
      %p91 = scmp.eq.s32.totalorder %s32, 1
      %p92 = por %p90, %p91
      %p93 = scmp.ne.s32.totalorder %s82, %s83
      %p94 = scmp.eq.s32.totalorder %s32, 0
      %p95 = por %p93, %p94
      %p96 = scmp.ne.s32.totalorder %s82, %s83
      %p97 = scmp.eq.s32.totalorder %s33, 1
      %p98 = por %p96, %p97
      %p100 = scmp.ne.s32.totalorder %s83, %s99
      %p101 = scmp.eq.s32.totalorder %s33, 0
      %p102 = por %p100, %p101
      %s103 = ssub.s32 %s34, %s46
      %p104 = scmp.eq.s32.totalorder %s103, 0
      %s106 = sadd.s32 %s105, 1
      %s107 = scalar_select %p104, %s105, %s106
      %p110 = pneg %p104
      %p111 = scmp.eq.s32.totalorder %s27, 1
      %p112 = por %p110, %p111
      %p113 = scmp.ne.s32.totalorder %s105, %s108
      %p114 = scmp.eq.s32.totalorder %s27, 0
      %p115 = por %p113, %p114
      %p116 = scmp.ne.s32.totalorder %s105, %s108
      %p117 = scmp.eq.s32.totalorder %s32, 1
      %p118 = por %p116, %p117
      %p119 = scmp.ne.s32.totalorder %s108, %s109
      %p120 = scmp.eq.s32.totalorder %s32, 0
      %p121 = por %p119, %p120
      %p122 = scmp.ne.s32.totalorder %s108, %s109
      %p123 = scmp.eq.s32.totalorder %s33, 1
      %p124 = por %p122, %p123
      %p126 = scmp.ne.s32.totalorder %s109, %s125
      %p127 = scmp.eq.s32.totalorder %s33, 0
      %p128 = por %p126, %p127
      %s129 = ssub.s32 %s34, %s46
      %p130 = scmp.eq.s32.totalorder %s129, 0
      %s132 = sadd.s32 %s131, 1
      %s133 = scalar_select %p130, %s131, %s132
      %p136 = pneg %p130
      %p137 = scmp.eq.s32.totalorder %s27, 1
      %p138 = por %p136, %p137
      %p139 = scmp.ne.s32.totalorder %s131, %s134
      %p140 = scmp.eq.s32.totalorder %s27, 0
      %p141 = por %p139, %p140
      %p142 = scmp.ne.s32.totalorder %s131, %s134
      %p143 = scmp.eq.s32.totalorder %s32, 1
      %p144 = por %p142, %p143
      %p145 = scmp.ne.s32.totalorder %s134, %s135
      %p146 = scmp.eq.s32.totalorder %s32, 0
      %p147 = por %p145, %p146
      %p148 = scmp.ne.s32.totalorder %s134, %s135
      %p149 = scmp.eq.s32.totalorder %s33, 1
      %p150 = por %p148, %p149
      %p152 = scmp.ne.s32.totalorder %s135, %s151
      %p153 = scmp.eq.s32.totalorder %s33, 0
      %p154 = por %p152, %p153
      %s156 = sadd.s32 %s155, 1
      %p159 = scmp.eq.s32.totalorder %s27, 1
      %p160 = scmp.ne.s32.totalorder %s155, %s157
      %p161 = scmp.eq.s32.totalorder %s27, 0
      %p162 = por %p160, %p161
      %p163 = scmp.ne.s32.totalorder %s155, %s157
      %p164 = scmp.eq.s32.totalorder %s32, 1
      %p165 = por %p163, %p164
      %p166 = scmp.ne.s32.totalorder %s157, %s158
      %p167 = scmp.eq.s32.totalorder %s32, 0
      %p168 = por %p166, %p167
      %p169 = scmp.ne.s32.totalorder %s157, %s158
      %p170 = scmp.eq.s32.totalorder %s33, 1
      %p171 = por %p169, %p170
      %p173 = scmp.ne.s32.totalorder %s158, %s172
      %p174 = scmp.eq.s32.totalorder %s33, 0
      %p175 = por %p173, %p174
      %s177 = sadd.s32 %s176, 1
      %p180 = scmp.eq.s32.totalorder %s27, 1
      %p181 = scmp.ne.s32.totalorder %s176, %s178
      %p182 = scmp.eq.s32.totalorder %s27, 0
      %p183 = por %p181, %p182
      %p184 = scmp.ne.s32.totalorder %s176, %s178
      %p185 = scmp.eq.s32.totalorder %s32, 1
      %p186 = por %p184, %p185
      %p187 = scmp.ne.s32.totalorder %s178, %s179
      %p188 = scmp.eq.s32.totalorder %s32, 0
      %p189 = por %p187, %p188
      %p190 = scmp.ne.s32.totalorder %s178, %s179
      %p191 = scmp.eq.s32.totalorder %s33, 1
      %p192 = por %p190, %p191
      %p194 = scmp.ne.s32.totalorder %s179, %s193
      %p195 = scmp.eq.s32.totalorder %s33, 0
      %p196 = por %p194, %p195
      %s197 = ssub.s32 %s34, %s46
      %s198 = ssub.s32 %s35, %s42
      %s199 = sor.u32 %s197, %s198
      %p200 = scmp.eq.s32.totalorder %s199, 0
      %s202 = sadd.s32 %s201, 1
      %s203 = scalar_select %p200, %s201, %s202
      %p206 = pneg %p200
      %p207 = scmp.eq.s32.totalorder %s27, 1
      %p208 = por %p206, %p207
      %p209 = scmp.ne.s32.totalorder %s201, %s204
      %p210 = scmp.eq.s32.totalorder %s27, 0
      %p211 = por %p209, %p210
      %p212 = scmp.ne.s32.totalorder %s201, %s204
      %p213 = scmp.eq.s32.totalorder %s32, 1
      %p214 = por %p212, %p213
      %p215 = scmp.ne.s32.totalorder %s204, %s205
      %p216 = scmp.eq.s32.totalorder %s32, 0
      %p217 = por %p215, %p216
      %p218 = scmp.ne.s32.totalorder %s204, %s205
      %p219 = scmp.eq.s32.totalorder %s33, 1
      %p220 = por %p218, %p219
      %p222 = scmp.ne.s32.totalorder %s205, %s221
      %p223 = scmp.eq.s32.totalorder %s33, 0
      %p224 = por %p222, %p223
      %s225 = ssub.s32 %s34, %s46
      %s226 = ssub.s32 %s35, %s42
      %s227 = sor.u32 %s225, %s226
      %p228 = scmp.eq.s32.totalorder %s227, 0
      %s230 = sadd.s32 %s229, 1
      %s231 = scalar_select %p228, %s229, %s230
      %p234 = pneg %p228
      %p235 = scmp.eq.s32.totalorder %s27, 1
      %p236 = por %p234, %p235
      %p237 = scmp.ne.s32.totalorder %s229, %s232
      %p238 = scmp.eq.s32.totalorder %s27, 0
      %p239 = por %p237, %p238
      %p240 = scmp.ne.s32.totalorder %s229, %s232
      %p241 = scmp.eq.s32.totalorder %s32, 1
      %p242 = por %p240, %p241
      %p243 = scmp.ne.s32.totalorder %s232, %s233
      %p244 = scmp.eq.s32.totalorder %s32, 0
      %p245 = por %p243, %p244
      %p246 = scmp.ne.s32.totalorder %s232, %s233
      %p247 = scmp.eq.s32.totalorder %s33, 1
      %p248 = por %p246, %p247
      %p250 = scmp.ne.s32.totalorder %s233, %s249
      %p251 = scmp.eq.s32.totalorder %s33, 0
      %p252 = por %p250, %p251
      %p253 = scmp.le.s32.totalorder 1, %s27
      %p254 = scmp.lt.s32.totalorder %s27, 3
      %p255 = pnand %p253, %p254
      %p256 = pneg %p255
      // Predicated region
      $region9: #{tpu_custom_call.1} parent=5 // pred_check
        _
      $region10: #{tpu_custom_call.1} parent=5 // pred_check_branch
        %258 = sbr.rel (%p255) target = $region12
      $region11: #{tpu_custom_call.1} parent=5 // pred_region
        %s259 = ssub.s32 %s27, 1
        // Predicated region
        $region13: #{tpu_custom_call.1} parent=11 // pred_check
          %p260 = pneg %p168
        $region14: #{tpu_custom_call.1} parent=11 // pred_check_branch
          %262 = sbr.rel (%p260) target = $region16
        $region15: #{tpu_custom_call.1} parent=11 // pred_region
          %s264 = ssub.s32 2048, 2048
          %265 = vsyncadd [#allocation9], %s264
          %s266 = sshll.u32 [#allocation8], 4
          %s267 = int_to_ptr.vmem [resolvable:$true] %s266
          %272 = dma.hbm_to_vmem [thread:$0]  %s4, 2048, %s267, [#allocation9], 128, 128, 8
        $region16: #{tpu_custom_call.1} parent=11 // pred_fallthru
          _
        // Predicated region
        $region17: #{tpu_custom_call.1} parent=11 // pred_check
          %p273 = pneg %p189
        $region18: #{tpu_custom_call.1} parent=11 // pred_check_branch
          %275 = sbr.rel (%p273) target = $region20
        $region19: #{tpu_custom_call.1} parent=11 // pred_region
          %s277 = ssub.s32 1024, 1024
          %278 = vsyncadd [#allocation9], %s277
          %s279 = sshll.u32 [#allocation10], 4
          %s280 = int_to_ptr.vmem [resolvable:$true] %s279
          %285 = dma.hbm_to_vmem [thread:$0]  %s5, 1024, %s280, [#allocation9], 64, 64, 4
        $region20: #{tpu_custom_call.1} parent=11 // pred_fallthru
          _
      $region12: #{tpu_custom_call.1} parent=5 // pred_fallthru
        _
      %p286 = scmp.lt.s32.totalorder %s27, 2
      // Predicated region
      $region21: #{tpu_custom_call.1} parent=5 // pred_check
        %p287 = pneg %p286
      $region22: #{tpu_custom_call.1} parent=5 // pred_check_branch
        %289 = sbr.rel (%p287) target = $region24
      $region23: #{tpu_custom_call.1} parent=5 // pred_region
        // Predicated region
        $region25: #{tpu_custom_call.1} parent=23 // pred_check
          %p290 = pneg %p61
        $region26: #{tpu_custom_call.1} parent=23 // pred_check_branch
          %292 = sbr.rel (%p290) target = $region28
        $region27: #{tpu_custom_call.1} parent=23 // pred_region
          %s293 = sand.u32 %s51, 1
          %s294 = scalar_lea.sflag [#allocation3], %s293
          %s295 = sand.u32 %s51, 1
          %s296 = smul.addr %s295, 2
          %s297 = scalar_lea.vmem [#allocation2], %s296
          %s299 = ssub.s32 32, 32
          %300 = vsyncadd %s294, %s299
          %s301 = sadd.s32 %s35, %s34
          %s302 = smul.addr %s301, 32
          %s303 = scalar_lea.hbm %s0, %s302
          %s305 = sshll.u32 %s297, 4
          %s306 = int_to_ptr.vmem [resolvable:$true] %s305
          %308 = dma.hbm_to_vmem [thread:$0]  %s303, 32, %s306, %s294
        $region28: #{tpu_custom_call.1} parent=23 // pred_fallthru
          _
        // Predicated region
        $region29: #{tpu_custom_call.1} parent=23 // pred_check
          %p309 = pneg %p89
        $region30: #{tpu_custom_call.1} parent=23 // pred_check_branch
          %311 = sbr.rel (%p309) target = $region32
        $region31: #{tpu_custom_call.1} parent=23 // pred_region
          %s312 = sand.u32 %s27, 1
          %s313 = scalar_lea.sflag [#allocation6], %s312
          %s314 = sand.u32 %s79, 1
          %s315 = smul.addr %s314, 4
          %s316 = scalar_lea.vmem [#allocation5], %s315
          %s318 = ssub.s32 64, 64
          %319 = vsyncadd %s313, %s318
          %s320 = sadd.s32 %s35, %s34
          %s321 = smul.addr %s320, 64
          %s322 = scalar_lea.hbm %s1, %s321
          %s324 = sshll.u32 %s316, 4
          %s325 = int_to_ptr.vmem [resolvable:$true] %s324
          %327 = dma.hbm_to_vmem [thread:$0]  %s322, 64, %s325, %s313
        $region32: #{tpu_custom_call.1} parent=23 // pred_fallthru
          _
        // Predicated region
        $region33: #{tpu_custom_call.1} parent=23 // pred_check
          %p328 = pneg %p115
        $region34: #{tpu_custom_call.1} parent=23 // pred_check_branch
          %330 = sbr.rel (%p328) target = $region36
        $region35: #{tpu_custom_call.1} parent=23 // pred_region
          %s331 = sand.u32 %s27, 1
          %s332 = scalar_lea.sflag [#allocation6], %s331
          %s333 = sand.u32 %s105, 1
          %s334 = smul.addr %s333, 4
          %s335 = scalar_lea.vmem [#allocation7], %s334
          %s337 = ssub.s32 64, 64
          %338 = vsyncadd %s332, %s337
          %s339 = smul.addr %s34, 64
          %s340 = scalar_lea.hbm %s2, %s339
          %s342 = sshll.u32 %s335, 4
          %s343 = int_to_ptr.vmem [resolvable:$true] %s342
          %345 = dma.hbm_to_vmem [thread:$0]  %s340, 64, %s343, %s332
        $region36: #{tpu_custom_call.1} parent=23 // pred_fallthru
          _
        // Predicated region
        $region37: #{tpu_custom_call.1} parent=23 // pred_check
          %p346 = pneg %p141
        $region38: #{tpu_custom_call.1} parent=23 // pred_check_branch
          %348 = sbr.rel (%p346) target = $region40
        $region39: #{tpu_custom_call.1} parent=23 // pred_region
          %p349 = scmp.lt.s32.totalorder %s34, 1
          %s350 = scalar_select %p349, %s34, 1
          %s351 = smul.addr %s350, 4
          %s352 = scalar_lea.vmem %s3, %s351
        $region40: #{tpu_custom_call.1} parent=23 // pred_fallthru
          _
      $region24: #{tpu_custom_call.1} parent=5 // pred_fallthru
        _
      %p353 = scmp.le.s32.totalorder 1, %s27
      %p354 = scmp.lt.s32.totalorder %s27, 3
      %p355 = pnand %p353, %p354
      %p356 = pneg %p355
      // Predicated region
      $region41: #{tpu_custom_call.1} parent=5 // pred_check
        _
      $region42: #{tpu_custom_call.1} parent=5 // pred_check_branch
        %358 = sbr.rel (%p355) target = $region44
      $region43: #{tpu_custom_call.1} parent=5 // pred_region
        %s359 = ssub.s32 %s27, 1
        %s360 = sand.u32 %s54, 1
        %s361 = scalar_lea.sflag [#allocation3], %s360
        %s362 = sand.u32 %s54, 1
        %s363 = smul.addr %s362, 2
        %s364 = scalar_lea.vmem [#allocation2], %s363
        // Predicated region
        $region45: #{tpu_custom_call.1} parent=43 // pred_check
          %p365 = pneg %p67
        $region46: #{tpu_custom_call.1} parent=43 // pred_check_branch
          %367 = sbr.rel (%p365) target = $region48
        $region47: #{tpu_custom_call.1} parent=43 // pred_region
          %368 = dma.done %s361, 32
        $region48: #{tpu_custom_call.1} parent=43 // pred_fallthru
          _
        %s369 = sand.u32 %s32, 1
        %s370 = scalar_lea.sflag [#allocation6], %s369
        %s371 = sand.u32 %s82, 1
        %s372 = smul.addr %s371, 4
        %s373 = scalar_lea.vmem [#allocation5], %s372
        // Predicated region
        $region49: #{tpu_custom_call.1} parent=43 // pred_check
          %p374 = pneg %p95
        $region50: #{tpu_custom_call.1} parent=43 // pred_check_branch
          %376 = sbr.rel (%p374) target = $region52
        $region51: #{tpu_custom_call.1} parent=43 // pred_region
          %377 = dma.done %s370, 64
        $region52: #{tpu_custom_call.1} parent=43 // pred_fallthru
          _
        %s378 = sand.u32 %s32, 1
        %s379 = scalar_lea.sflag [#allocation6], %s378
        %s380 = sand.u32 %s108, 1
        %s381 = smul.addr %s380, 4
        %s382 = scalar_lea.vmem [#allocation7], %s381
        // Predicated region
        $region53: #{tpu_custom_call.1} parent=43 // pred_check
          %p383 = pneg %p121
        $region54: #{tpu_custom_call.1} parent=43 // pred_check_branch
          %385 = sbr.rel (%p383) target = $region56
        $region55: #{tpu_custom_call.1} parent=43 // pred_region
          %386 = dma.done %s379, 64
        $region56: #{tpu_custom_call.1} parent=43 // pred_fallthru
          _
        // Predicated region
        $region57: #{tpu_custom_call.1} parent=43 // pred_check
          %p387 = pneg %p168
        $region58: #{tpu_custom_call.1} parent=43 // pred_check_branch
          %389 = sbr.rel (%p387) target = $region60
        $region59: #{tpu_custom_call.1} parent=43 // pred_region
          %390 = dma.done [#allocation9], 2048
        $region60: #{tpu_custom_call.1} parent=43 // pred_fallthru
          _
        // Predicated region
        $region61: #{tpu_custom_call.1} parent=43 // pred_check
          %p391 = pneg %p189
        $region62: #{tpu_custom_call.1} parent=43 // pred_check_branch
          %393 = sbr.rel (%p391) target = $region64
        $region63: #{tpu_custom_call.1} parent=43 // pred_region
          %394 = dma.done [#allocation9], 1024
        $region64: #{tpu_custom_call.1} parent=43 // pred_fallthru
          _
        %s395 = sand.u32 %s54, 1
        %s396 = scalar_lea.sflag [#allocation3], %s395
        %s397 = sand.u32 %s54, 1
        %s398 = smul.addr %s397, 2
        %s399 = scalar_lea.vmem [#allocation2], %s398
        %p400 = pneg %p67
        %p401 = pneg %p64
        %s402 = sand.u32 %s32, 1
        %s403 = scalar_lea.sflag [#allocation6], %s402
        %s404 = sand.u32 %s82, 1
        %s405 = smul.addr %s404, 4
        %s406 = scalar_lea.vmem [#allocation5], %s405
        %p407 = pneg %p95
        %p408 = pneg %p92
        %s409 = sand.u32 %s32, 1
        %s410 = scalar_lea.sflag [#allocation6], %s409
        %s411 = sand.u32 %s108, 1
        %s412 = smul.addr %s411, 4
        %s413 = scalar_lea.vmem [#allocation7], %s412
        %p414 = pneg %p121
        %p415 = pneg %p118
        %p416 = scmp.lt.s32.totalorder %s36, 1
        %s417 = scalar_select %p416, %s36, 1
        %s418 = smul.addr %s417, 4
        %s419 = scalar_lea.vmem %s3, %s418
        %p420 = pneg %p147
        %p421 = pneg %p144
        %p422 = pneg %p168
        %p423 = pneg %p165
        %p424 = pneg %p189
        %p425 = pneg %p186
        %p426 = pneg %p217
        %p427 = pneg %p214
        %s428 = sand.u32 %s204, 1
        %s429 = scalar_lea.sflag [#allocation4], %s428
        %s430 = sand.u32 %s204, 1
        %s431 = smul.addr %s430, 8
        %s432 = scalar_lea.vmem [#allocation11], %s431
        %p433 = pneg %p245
        %p434 = pneg %p242
        %s435 = sand.u32 %s232, 1
        %s436 = scalar_lea.sflag [#allocation13], %s435
        %s437 = sand.u32 %s232, 1
        %s438 = smul.addr %s437, 16
        %s439 = scalar_lea.vmem [#allocation12], %s438
        %p440 = scmp.lt.s32.totalorder %s36, 1
        %s441 = scalar_select %p440, %s36, 1
        %s442 = smul.addr %s441, 4
        %s443 = scalar_lea.vmem %s3, %s442
        %v447 = vld [vmem:[#allocation8] sm:$0xff]
        %v448 = vld [vmem:[#allocation8 + $0x8] sm:$0xff]
        %v449 = vld [vmem:[#allocation8 + $0x10] sm:$0xff]
        %v450 = vld [vmem:[#allocation8 + $0x18] sm:$0xff]
        %v451 = vld [vmem:[#allocation8 + $0x20] sm:$0xff]
        %v452 = vld [vmem:[#allocation8 + $0x28] sm:$0xff]
        %v453 = vld [vmem:[#allocation8 + $0x30] sm:$0xff]
        %v454 = vld [vmem:[#allocation8 + $0x38] sm:$0xff]
        %v455 = vld [vmem:[#allocation8 + $0x40] sm:$0xff]
        %v456 = vld [vmem:[#allocation8 + $0x48] sm:$0xff]
        %v457 = vld [vmem:[#allocation8 + $0x50] sm:$0xff]
        %v458 = vld [vmem:[#allocation8 + $0x58] sm:$0xff]
        %v459 = vld [vmem:[#allocation8 + $0x60] sm:$0xff]
        %v460 = vld [vmem:[#allocation8 + $0x68] sm:$0xff]
        %v461 = vld [vmem:[#allocation8 + $0x70] sm:$0xff]
        %v462 = vld [vmem:[#allocation8 + $0x78] sm:$0xff]
        %v463 = vld [vmem:[#allocation10] sm:$0xf]
        %v464 = vld [vmem:[#allocation10 + $0x4] sm:$0xf]
        %v465 = vld [vmem:[#allocation10 + $0x8] sm:$0xf]
        %v466 = vld [vmem:[#allocation10 + $0xc] sm:$0xf]
        %v467 = vld [vmem:[#allocation10 + $0x10] sm:$0xf]
        %v468 = vld [vmem:[#allocation10 + $0x14] sm:$0xf]
        %v469 = vld [vmem:[#allocation10 + $0x18] sm:$0xf]
        %v470 = vld [vmem:[#allocation10 + $0x1c] sm:$0xf]
        %v471 = vld [vmem:[#allocation10 + $0x20] sm:$0xf]
        %v472 = vld [vmem:[#allocation10 + $0x24] sm:$0xf]
        %v473 = vld [vmem:[#allocation10 + $0x28] sm:$0xf]
        %v474 = vld [vmem:[#allocation10 + $0x2c] sm:$0xf]
        %v475 = vld [vmem:[#allocation10 + $0x30] sm:$0xf]
        %v476 = vld [vmem:[#allocation10 + $0x34] sm:$0xf]
        %v477 = vld [vmem:[#allocation10 + $0x38] sm:$0xf]
        %v478 = vld [vmem:[#allocation10 + $0x3c] sm:$0xf]
        %v479 = vld [vmem:[%s373] sm:$0xf]
        %v480 = vld [vmem:[%s382] sm:$0xf]
        %482 = vrot.lane.b32.xlu0 %v480, 96
        %v483 = vpop.permute.xlu0 %482
        %484 = vrot.lane.b32.xlu0 %v480, 64
        %v485 = vpop.permute.xlu0 %484
        %486 = vrot.lane.b32.xlu0 %v480, 32
        %v487 = vpop.permute.xlu0 %486
        %v490 = vpack.i.b16 %v483, %v480
        %v491 = vshrl.u32 %v480, 16
        %v492 = vshrl.u32 %v483, 16
        %v493 = vpack.i.b16 %v492, %v491
        %v496 = vpack.i.b16 %v487, %v485
        %v497 = vshrl.u32 %v485, 16
        %v498 = vshrl.u32 %v487, 16
        %v499 = vpack.i.b16 %v498, %v497
        %v502 = vunpack.c.l.s4 1983009808
        %v503 = vunpack.c.0.s8 %v502
        %v504 = vlaneseq
        %v505 = vshrl.u32 %v504, 7
        %v506 = vsub.s32 %v503, %v505
        %v507 = vrot.slane %v490, %v506
        %v510 = vunpack.c.l.s4 1983009808
        %v511 = vunpack.c.0.s8 %v510
        %v512 = vlaneseq
        %v513 = vshrl.u32 %v512, 7
        %v514 = vsub.s32 %v511, %v513
        %v515 = vrot.slane %v496, %v514
        %v516 = vcombine.low %v507, %v515
        %v517 = vcombine.high %v507, %v515
        %v519 = vunpack.c.l.s4 1934713408
        %v520 = vunpack.c.0.s8 %v519
        %v521 = vlaneseq
        %v522 = vshrl.u32 %v521, 7
        %v523 = vsub.s32 %v520, %v522
        %v524 = vrot.slane %v516, %v523
        %v526 = vunpack.c.l.s4 1934713408
        %v527 = vunpack.c.0.s8 %v526
        %v528 = vlaneseq
        %v529 = vshrl.u32 %v528, 7
        %v530 = vsub.s32 %v527, %v529
        %v531 = vrot.slane %v517, %v530
        %v532 = vcombine.high %v524, 0
        %v533 = vcombine.high %v531, 0
        %v536 = vunpack.c.l.s4 1983009808
        %v537 = vunpack.c.0.s8 %v536
        %v538 = vlaneseq
        %v539 = vshrl.u32 %v538, 7
        %v540 = vsub.s32 %v537, %v539
        %v541 = vrot.slane %v493, %v540
        %v544 = vunpack.c.l.s4 1983009808
        %v545 = vunpack.c.0.s8 %v544
        %v546 = vlaneseq
        %v547 = vshrl.u32 %v546, 7
        %v548 = vsub.s32 %v545, %v547
        %v549 = vrot.slane %v499, %v548
        %v550 = vcombine.low %v541, %v549
        %v551 = vcombine.high %v541, %v549
        %v553 = vunpack.c.l.s4 1934713408
        %v554 = vunpack.c.0.s8 %v553
        %v555 = vlaneseq
        %v556 = vshrl.u32 %v555, 7
        %v557 = vsub.s32 %v554, %v556
        %v558 = vrot.slane %v550, %v557
        %v560 = vunpack.c.l.s4 1934713408
        %v561 = vunpack.c.0.s8 %v560
        %v562 = vlaneseq
        %v563 = vshrl.u32 %v562, 7
        %v564 = vsub.s32 %v561, %v563
        %v565 = vrot.slane %v551, %v564
        %v566 = vcombine.high %v558, 0
        %v567 = vcombine.high %v565, 0
        %v568 = vld [vmem:[%s443] sm:$0xf]
        %570 = vrot.lane.b32.xlu0 %v568, 96
        %v571 = vpop.permute.xlu0 %570
        %572 = vrot.lane.b32.xlu0 %v568, 64
        %v573 = vpop.permute.xlu0 %572
        %574 = vrot.lane.b32.xlu0 %v568, 32
        %v575 = vpop.permute.xlu0 %574
        %v578 = vpack.i.b16 %v571, %v568
        %v579 = vshrl.u32 %v568, 16
        %v580 = vshrl.u32 %v571, 16
        %v581 = vpack.i.b16 %v580, %v579
        %v584 = vpack.i.b16 %v575, %v573
        %v585 = vshrl.u32 %v573, 16
        %v586 = vshrl.u32 %v575, 16
        %v587 = vpack.i.b16 %v586, %v585
        %v590 = vunpack.c.l.s4 1983009808
        %v591 = vunpack.c.0.s8 %v590
        %v592 = vlaneseq
        %v593 = vshrl.u32 %v592, 7
        %v594 = vsub.s32 %v591, %v593
        %v595 = vrot.slane %v578, %v594
        %v598 = vunpack.c.l.s4 1983009808
        %v599 = vunpack.c.0.s8 %v598
        %v600 = vlaneseq
        %v601 = vshrl.u32 %v600, 7
        %v602 = vsub.s32 %v599, %v601
        %v603 = vrot.slane %v584, %v602
        %v604 = vcombine.low %v595, %v603
        %v605 = vcombine.high %v595, %v603
        %v607 = vunpack.c.l.s4 1934713408
        %v608 = vunpack.c.0.s8 %v607
        %v609 = vlaneseq
        %v610 = vshrl.u32 %v609, 7
        %v611 = vsub.s32 %v608, %v610
        %v612 = vrot.slane %v604, %v611
        %v614 = vunpack.c.l.s4 1934713408
        %v615 = vunpack.c.0.s8 %v614
        %v616 = vlaneseq
        %v617 = vshrl.u32 %v616, 7
        %v618 = vsub.s32 %v615, %v617
        %v619 = vrot.slane %v605, %v618
        %v620 = vcombine.high %v612, 0
        %v621 = vcombine.high %v619, 0
        %v624 = vunpack.c.l.s4 1983009808
        %v625 = vunpack.c.0.s8 %v624
        %v626 = vlaneseq
        %v627 = vshrl.u32 %v626, 7
        %v628 = vsub.s32 %v625, %v627
        %v629 = vrot.slane %v581, %v628
        %v632 = vunpack.c.l.s4 1983009808
        %v633 = vunpack.c.0.s8 %v632
        %v634 = vlaneseq
        %v635 = vshrl.u32 %v634, 7
        %v636 = vsub.s32 %v633, %v635
        %v637 = vrot.slane %v587, %v636
        %v638 = vcombine.low %v629, %v637
        %v639 = vcombine.high %v629, %v637
        %v641 = vunpack.c.l.s4 1934713408
        %v642 = vunpack.c.0.s8 %v641
        %v643 = vlaneseq
        %v644 = vshrl.u32 %v643, 7
        %v645 = vsub.s32 %v642, %v644
        %v646 = vrot.slane %v638, %v645
        %v648 = vunpack.c.l.s4 1934713408
        %v649 = vunpack.c.0.s8 %v648
        %v650 = vlaneseq
        %v651 = vshrl.u32 %v650, 7
        %v652 = vsub.s32 %v649, %v651
        %v653 = vrot.slane %v639, %v652
        %v654 = vcombine.high %v646, 0
        %v655 = vcombine.high %v653, 0
        %v672 = vunpack.c.l.b16 %v447
        %v673 = vunpack.c.h.b16 %v447
        %v674 = vunpack.c.l.b16 %v448
        %v675 = vunpack.c.h.b16 %v448
        %v676 = vunpack.c.l.b16 %v449
        %v677 = vunpack.c.h.b16 %v449
        %v678 = vunpack.c.l.b16 %v450
        %v679 = vunpack.c.h.b16 %v450
        %v680 = vunpack.c.l.b16 %v451
        %v681 = vunpack.c.h.b16 %v451
        %v682 = vunpack.c.l.b16 %v452
        %v683 = vunpack.c.h.b16 %v452
        %v684 = vunpack.c.l.b16 %v453
        %v685 = vunpack.c.h.b16 %v453
        %v686 = vunpack.c.l.b16 %v454
        %v687 = vunpack.c.h.b16 %v454
        %v688 = vunpack.c.l.b16 %v455
        %v689 = vunpack.c.h.b16 %v455
        %v690 = vunpack.c.l.b16 %v456
        %v691 = vunpack.c.h.b16 %v456
        %v692 = vunpack.c.l.b16 %v457
        %v693 = vunpack.c.h.b16 %v457
        %v694 = vunpack.c.l.b16 %v458
        %v695 = vunpack.c.h.b16 %v458
        %v696 = vunpack.c.l.b16 %v459
        %v697 = vunpack.c.h.b16 %v459
        %v698 = vunpack.c.l.b16 %v460
        %v699 = vunpack.c.h.b16 %v460
        %v700 = vunpack.c.l.b16 %v461
        %v701 = vunpack.c.h.b16 %v461
        %v702 = vunpack.c.l.b16 %v462
        %v703 = vunpack.c.h.b16 %v462
        %v704 = vpack.c.b16 %v674, %v672
        %v705 = vpack.c.b16 %v675, %v673
        %v706 = vpack.c.b16 %v678, %v676
        %v707 = vpack.c.b16 %v679, %v677
        %v708 = vpack.c.b16 %v682, %v680
        %v709 = vpack.c.b16 %v683, %v681
        %v710 = vpack.c.b16 %v686, %v684
        %v711 = vpack.c.b16 %v687, %v685
        %v712 = vpack.c.b16 %v690, %v688
        %v713 = vpack.c.b16 %v691, %v689
        %v714 = vpack.c.b16 %v694, %v692
        %v715 = vpack.c.b16 %v695, %v693
        %v716 = vpack.c.b16 %v698, %v696
        %v717 = vpack.c.b16 %v699, %v697
        %v718 = vpack.c.b16 %v702, %v700
        %v719 = vpack.c.b16 %v703, %v701
        %736 = vmatprep.subr.bf16.mxu0 %v705
        %737 = vmatpush1.bf16.msra.mxu0 %v704
        %738 = vmatprep.subr.bf16.mxu0 %v707
        %739 = vmatpush1.bf16.msra.mxu0 %v706
        %740 = vmatprep.subr.bf16.mxu0 %v709
        %741 = vmatpush1.bf16.msra.mxu0 %v708
        %742 = vmatprep.subr.bf16.mxu0 %v711
        %743 = vmatpush1.bf16.msra.mxu0 %v710
        %744 = vmatprep.subr.bf16.mxu0 %v713
        %745 = vmatpush1.bf16.msra.mxu0 %v712
        %746 = vmatprep.subr.bf16.mxu0 %v715
        %747 = vmatpush1.bf16.msra.mxu0 %v714
        %748 = vmatprep.subr.bf16.mxu0 %v717
        %749 = vmatpush1.bf16.msra.mxu0 %v716
        %750 = vmatprep.subr.bf16.mxu0 %v719
        %751 = vmatpush1.bf16.msra.mxu0 %v718
        %752 = vmatprep.subr.bf16.mxu0 0
        %753 = vmatpush1.bf16.msra.mxu0 0
        %754 = vmatprep.subr.bf16.mxu0 0
        %755 = vmatpush1.bf16.msra.mxu0 0
        %756 = vmatprep.subr.bf16.mxu0 0
        %757 = vmatpush1.bf16.msra.mxu0 0
        %758 = vmatprep.subr.bf16.mxu0 0
        %759 = vmatpush1.bf16.msra.mxu0 0
        %760 = vmatprep.subr.bf16.mxu0 0
        %761 = vmatpush1.bf16.msra.mxu0 0
        %762 = vmatprep.subr.bf16.mxu0 0
        %763 = vmatpush1.bf16.msra.mxu0 0
        %764 = vmatprep.subr.bf16.mxu0 0
        %765 = vmatpush1.bf16.msra.mxu0 0
        %766 = vmatprep.subr.bf16.mxu0 0
        %767 = vmatpush1.bf16.msra.mxu0 0
        %768 = vmatprep.mubr.bf16.mxu0 0
        %769 = vmatmul.mubr.bf16.gmra.mrb[0].mxu0 %v479
        %v770 = vpop.f32.mrb[0].mxu0
        %v771 = vadd.f32 0.0, %v770
        %v772 = vpop.f32.mrb[0].mxu0
        %v773 = vadd.f32 0.0, %v772
        %v774 = vpop.f32.mrb[0].mxu0
        %v775 = vpop.f32.mrb[0].mxu0
        %776 = vdwg.mxu0
        %v777 = vpack.c.bf16 %v773, %v773
        %779 = vrot.lane.b32.xlu0 %v777, 96
        %v780 = vpop.permute.xlu0 %779
        %781 = vrot.lane.b32.xlu0 %v777, 64
        %v782 = vpop.permute.xlu0 %781
        %783 = vrot.lane.b32.xlu0 %v777, 32
        %v784 = vpop.permute.xlu0 %783
        %785 = vxpose.xlu0.c.b16.start [1/8] %v524, 128
        %786 = vxpose.xlu0.c.b16.cont [2/8] 0, 128
        %787 = vxpose.xlu0.c.b16.cont [3/8] 0, 128
        %788 = vxpose.xlu0.c.b16.cont [4/8] 0, 128
        %789 = vxpose.xlu0.c.b16.cont [5/8] 0, 128
        %790 = vxpose.xlu0.c.b16.cont [6/8] 0, 128
        %791 = vxpose.xlu0.c.b16.cont [7/8] 0, 128
        %792 = vxpose.xlu0.c.b16.end [8/8] 0, 128
        %v793 = vpop.trf.xlu0
        %v794 = vpop.trf.xlu0
        %v795 = vpop.trf.xlu0
        %v796 = vpop.trf.xlu0
        %v797 = vpop.trf.xlu0
        %v798 = vpop.trf.xlu0
        %v799 = vpop.trf.xlu0
        %v800 = vpop.trf.xlu0
        %801 = vxpose.xlu0.c.b16.start [1/8] %v558, 128
        %802 = vxpose.xlu0.c.b16.cont [2/8] 0, 128
        %803 = vxpose.xlu0.c.b16.cont [3/8] 0, 128
        %804 = vxpose.xlu0.c.b16.cont [4/8] 0, 128
        %805 = vxpose.xlu0.c.b16.cont [5/8] 0, 128
        %806 = vxpose.xlu0.c.b16.cont [6/8] 0, 128
        %807 = vxpose.xlu0.c.b16.cont [7/8] 0, 128
        %808 = vxpose.xlu0.c.b16.end [8/8] 0, 128
        %v809 = vpop.trf.xlu0
        %v810 = vpop.trf.xlu0
        %v811 = vpop.trf.xlu0
        %v812 = vpop.trf.xlu0
        %v813 = vpop.trf.xlu0
        %v814 = vpop.trf.xlu0
        %v815 = vpop.trf.xlu0
        %v816 = vpop.trf.xlu0
        %817 = vxpose.xlu0.c.b16.start [1/8] %v532, 128
        %818 = vxpose.xlu0.c.b16.cont [2/8] 0, 128
        %819 = vxpose.xlu0.c.b16.cont [3/8] 0, 128
        %820 = vxpose.xlu0.c.b16.cont [4/8] 0, 128
        %821 = vxpose.xlu0.c.b16.cont [5/8] 0, 128
        %822 = vxpose.xlu0.c.b16.cont [6/8] 0, 128
        %823 = vxpose.xlu0.c.b16.cont [7/8] 0, 128
        %824 = vxpose.xlu0.c.b16.end [8/8] 0, 128
        %v825 = vpop.trf.xlu0
        %v826 = vpop.trf.xlu0
        %v827 = vpop.trf.xlu0
        %v828 = vpop.trf.xlu0
        %v829 = vpop.trf.xlu0
        %v830 = vpop.trf.xlu0
        %v831 = vpop.trf.xlu0
        %v832 = vpop.trf.xlu0
        %833 = vxpose.xlu0.c.b16.start [1/8] %v566, 128
        %834 = vxpose.xlu0.c.b16.cont [2/8] 0, 128
        %835 = vxpose.xlu0.c.b16.cont [3/8] 0, 128
        %836 = vxpose.xlu0.c.b16.cont [4/8] 0, 128
        %837 = vxpose.xlu0.c.b16.cont [5/8] 0, 128
        %838 = vxpose.xlu0.c.b16.cont [6/8] 0, 128
        %839 = vxpose.xlu0.c.b16.cont [7/8] 0, 128
        %840 = vxpose.xlu0.c.b16.end [8/8] 0, 128
        %v841 = vpop.trf.xlu0
        %v842 = vpop.trf.xlu0
        %v843 = vpop.trf.xlu0
        %v844 = vpop.trf.xlu0
        %v845 = vpop.trf.xlu0
        %v846 = vpop.trf.xlu0
        %v847 = vpop.trf.xlu0
        %v848 = vpop.trf.xlu0
        %849 = vxpose.xlu0.c.b16.start [1/8] %v531, 128
        %850 = vxpose.xlu0.c.b16.cont [2/8] 0, 128
        %851 = vxpose.xlu0.c.b16.cont [3/8] 0, 128
        %852 = vxpose.xlu0.c.b16.cont [4/8] 0, 128
        %853 = vxpose.xlu0.c.b16.cont [5/8] 0, 128
        %854 = vxpose.xlu0.c.b16.cont [6/8] 0, 128
        %855 = vxpose.xlu0.c.b16.cont [7/8] 0, 128
        %856 = vxpose.xlu0.c.b16.end [8/8] 0, 128
        %v857 = vpop.trf.xlu0
        %v858 = vpop.trf.xlu0
        %v859 = vpop.trf.xlu0
        %v860 = vpop.trf.xlu0
        %v861 = vpop.trf.xlu0
        %v862 = vpop.trf.xlu0
        %v863 = vpop.trf.xlu0
        %v864 = vpop.trf.xlu0
        %865 = vxpose.xlu0.c.b16.start [1/8] %v565, 128
        %866 = vxpose.xlu0.c.b16.cont [2/8] 0, 128
        %867 = vxpose.xlu0.c.b16.cont [3/8] 0, 128
        %868 = vxpose.xlu0.c.b16.cont [4/8] 0, 128
        %869 = vxpose.xlu0.c.b16.cont [5/8] 0, 128
        %870 = vxpose.xlu0.c.b16.cont [6/8] 0, 128
        %871 = vxpose.xlu0.c.b16.cont [7/8] 0, 128
        %872 = vxpose.xlu0.c.b16.end [8/8] 0, 128
        %v873 = vpop.trf.xlu0
        %v874 = vpop.trf.xlu0
        %v875 = vpop.trf.xlu0
        %v876 = vpop.trf.xlu0
        %v877 = vpop.trf.xlu0
        %v878 = vpop.trf.xlu0
        %v879 = vpop.trf.xlu0
        %v880 = vpop.trf.xlu0
        %881 = vxpose.xlu0.c.b16.start [1/8] %v533, 128
        %882 = vxpose.xlu0.c.b16.cont [2/8] 0, 128
        %883 = vxpose.xlu0.c.b16.cont [3/8] 0, 128
        %884 = vxpose.xlu0.c.b16.cont [4/8] 0, 128
        %885 = vxpose.xlu0.c.b16.cont [5/8] 0, 128
        %886 = vxpose.xlu0.c.b16.cont [6/8] 0, 128
        %887 = vxpose.xlu0.c.b16.cont [7/8] 0, 128
        %888 = vxpose.xlu0.c.b16.end [8/8] 0, 128
        %v889 = vpop.trf.xlu0
        %v890 = vpop.trf.xlu0
        %v891 = vpop.trf.xlu0
        %v892 = vpop.trf.xlu0
        %v893 = vpop.trf.xlu0
        %v894 = vpop.trf.xlu0
        %v895 = vpop.trf.xlu0
        %v896 = vpop.trf.xlu0
        %897 = vxpose.xlu0.c.b16.start [1/8] %v567, 128
        %898 = vxpose.xlu0.c.b16.cont [2/8] 0, 128
        %899 = vxpose.xlu0.c.b16.cont [3/8] 0, 128
        %900 = vxpose.xlu0.c.b16.cont [4/8] 0, 128
        %901 = vxpose.xlu0.c.b16.cont [5/8] 0, 128
        %902 = vxpose.xlu0.c.b16.cont [6/8] 0, 128
        %903 = vxpose.xlu0.c.b16.cont [7/8] 0, 128
        %904 = vxpose.xlu0.c.b16.end [8/8] 0, 128
        %v905 = vpop.trf.xlu0
        %v906 = vpop.trf.xlu0
        %v907 = vpop.trf.xlu0
        %v908 = vpop.trf.xlu0
        %v909 = vpop.trf.xlu0
        %v910 = vpop.trf.xlu0
        %v911 = vpop.trf.xlu0
        %v912 = vpop.trf.xlu0
        %v915 = vpack.i.b16 %v809, %v793
        %v917 = vshrl.u32 %v793, 16
        %v918 = vshrl.u32 %v809, 16
        %v919 = vpack.i.b16 %v918, %v917
        %v923 = vpack.i.b16 %v841, %v825
        %v925 = vshrl.u32 %v825, 16
        %v926 = vshrl.u32 %v841, 16
        %v927 = vpack.i.b16 %v926, %v925
        %v931 = vpack.i.b16 %v873, %v857
        %v933 = vshrl.u32 %v857, 16
        %v934 = vshrl.u32 %v873, 16
        %v935 = vpack.i.b16 %v934, %v933
        %v939 = vpack.i.b16 %v905, %v889
        %v941 = vshrl.u32 %v889, 16
        %v942 = vshrl.u32 %v905, 16
        %v943 = vpack.i.b16 %v942, %v941
        %v947 = vpack.i.b16 %v810, %v794
        %v949 = vshrl.u32 %v794, 16
        %v950 = vshrl.u32 %v810, 16
        %v951 = vpack.i.b16 %v950, %v949
        %v955 = vpack.i.b16 %v842, %v826
        %v957 = vshrl.u32 %v826, 16
        %v958 = vshrl.u32 %v842, 16
        %v959 = vpack.i.b16 %v958, %v957
        %v963 = vpack.i.b16 %v874, %v858
        %v965 = vshrl.u32 %v858, 16
        %v966 = vshrl.u32 %v874, 16
        %v967 = vpack.i.b16 %v966, %v965
        %v971 = vpack.i.b16 %v906, %v890
        %v973 = vshrl.u32 %v890, 16
        %v974 = vshrl.u32 %v906, 16
        %v975 = vpack.i.b16 %v974, %v973
        %v977 = vcombine.low %v915, %v931
        %v978 = vcombine.high %v915, %v931
        %v980 = vunpack.c.l.s4 1983009808
        %v981 = vunpack.c.0.s8 %v980
        %v982 = vlaneseq
        %v983 = vshrl.u32 %v982, 7
        %v984 = vsub.s32 %v981, %v983
        %v985 = vrot.slane %v977, %v984
        %v987 = vunpack.c.l.s4 1983009808
        %v988 = vunpack.c.0.s8 %v987
        %v989 = vlaneseq
        %v990 = vshrl.u32 %v989, 7
        %v991 = vsub.s32 %v988, %v990
        %v992 = vrot.slane %v978, %v991
        %v993 = vcombine.low %v923, %v939
        %v994 = vcombine.high %v923, %v939
        %v996 = vunpack.c.l.s4 1983009808
        %v997 = vunpack.c.0.s8 %v996
        %v998 = vlaneseq
        %v999 = vshrl.u32 %v998, 7
        %v1000 = vsub.s32 %v997, %v999
        %v1001 = vrot.slane %v993, %v1000
        %v1003 = vunpack.c.l.s4 1983009808
        %v1004 = vunpack.c.0.s8 %v1003
        %v1005 = vlaneseq
        %v1006 = vshrl.u32 %v1005, 7
        %v1007 = vsub.s32 %v1004, %v1006
        %v1008 = vrot.slane %v994, %v1007
        %v1009 = vcombine.low %v985, %v1001
        %v1010 = vcombine.high %v985, %v1001
        %v1012 = vunpack.c.l.s4 1934713408
        %v1013 = vunpack.c.0.s8 %v1012
        %v1014 = vlaneseq
        %v1015 = vshrl.u32 %v1014, 7
        %v1016 = vsub.s32 %v1013, %v1015
        %v1017 = vrot.slane %v1009, %v1016
        %v1019 = vunpack.c.l.s4 1934713408
        %v1020 = vunpack.c.0.s8 %v1019
        %v1021 = vlaneseq
        %v1022 = vshrl.u32 %v1021, 7
        %v1023 = vsub.s32 %v1020, %v1022
        %v1024 = vrot.slane %v1010, %v1023
        %v1025 = vcombine.low %v992, %v1008
        %v1026 = vcombine.high %v992, %v1008
        %v1028 = vunpack.c.l.s4 1934713408
        %v1029 = vunpack.c.0.s8 %v1028
        %v1030 = vlaneseq
        %v1031 = vshrl.u32 %v1030, 7
        %v1032 = vsub.s32 %v1029, %v1031
        %v1033 = vrot.slane %v1025, %v1032
        %v1035 = vunpack.c.l.s4 1934713408
        %v1036 = vunpack.c.0.s8 %v1035
        %v1037 = vlaneseq
        %v1038 = vshrl.u32 %v1037, 7
        %v1039 = vsub.s32 %v1036, %v1038
        %v1040 = vrot.slane %v1026, %v1039
        %v1041 = vcombine.high %v1017, 0
        %v1042 = vcombine.high %v1024, 0
        %v1043 = vcombine.high %v1033, 0
        %v1044 = vcombine.high %v1040, 0
        %v1045 = vcombine.low %v919, %v935
        %v1046 = vcombine.high %v919, %v935
        %v1048 = vunpack.c.l.s4 1983009808
        %v1049 = vunpack.c.0.s8 %v1048
        %v1050 = vlaneseq
        %v1051 = vshrl.u32 %v1050, 7
        %v1052 = vsub.s32 %v1049, %v1051
        %v1053 = vrot.slane %v1045, %v1052
        %v1055 = vunpack.c.l.s4 1983009808
        %v1056 = vunpack.c.0.s8 %v1055
        %v1057 = vlaneseq
        %v1058 = vshrl.u32 %v1057, 7
        %v1059 = vsub.s32 %v1056, %v1058
        %v1060 = vrot.slane %v1046, %v1059
        %v1061 = vcombine.low %v927, %v943
        %v1062 = vcombine.high %v927, %v943
        %v1064 = vunpack.c.l.s4 1983009808
        %v1065 = vunpack.c.0.s8 %v1064
        %v1066 = vlaneseq
        %v1067 = vshrl.u32 %v1066, 7
        %v1068 = vsub.s32 %v1065, %v1067
        %v1069 = vrot.slane %v1061, %v1068
        %v1071 = vunpack.c.l.s4 1983009808
        %v1072 = vunpack.c.0.s8 %v1071
        %v1073 = vlaneseq
        %v1074 = vshrl.u32 %v1073, 7
        %v1075 = vsub.s32 %v1072, %v1074
        %v1076 = vrot.slane %v1062, %v1075
        %v1077 = vcombine.low %v1053, %v1069
        %v1078 = vcombine.high %v1053, %v1069
        %v1080 = vunpack.c.l.s4 1934713408
        %v1081 = vunpack.c.0.s8 %v1080
        %v1082 = vlaneseq
        %v1083 = vshrl.u32 %v1082, 7
        %v1084 = vsub.s32 %v1081, %v1083
        %v1085 = vrot.slane %v1077, %v1084
        %v1087 = vunpack.c.l.s4 1934713408
        %v1088 = vunpack.c.0.s8 %v1087
        %v1089 = vlaneseq
        %v1090 = vshrl.u32 %v1089, 7
        %v1091 = vsub.s32 %v1088, %v1090
        %v1092 = vrot.slane %v1078, %v1091
        %v1093 = vcombine.low %v1060, %v1076
        %v1094 = vcombine.high %v1060, %v1076
        %v1096 = vunpack.c.l.s4 1934713408
        %v1097 = vunpack.c.0.s8 %v1096
        %v1098 = vlaneseq
        %v1099 = vshrl.u32 %v1098, 7
        %v1100 = vsub.s32 %v1097, %v1099
        %v1101 = vrot.slane %v1093, %v1100
        %v1103 = vunpack.c.l.s4 1934713408
        %v1104 = vunpack.c.0.s8 %v1103
        %v1105 = vlaneseq
        %v1106 = vshrl.u32 %v1105, 7
        %v1107 = vsub.s32 %v1104, %v1106
        %v1108 = vrot.slane %v1094, %v1107
        %v1109 = vcombine.high %v1085, 0
        %v1110 = vcombine.high %v1092, 0
        %v1111 = vcombine.high %v1101, 0
        %v1112 = vcombine.high %v1108, 0
        %v1113 = vcombine.low %v947, %v963
        %v1114 = vcombine.high %v947, %v963
        %v1116 = vunpack.c.l.s4 1983009808
        %v1117 = vunpack.c.0.s8 %v1116
        %v1118 = vlaneseq
        %v1119 = vshrl.u32 %v1118, 7
        %v1120 = vsub.s32 %v1117, %v1119
        %v1121 = vrot.slane %v1113, %v1120
        %v1123 = vunpack.c.l.s4 1983009808
        %v1124 = vunpack.c.0.s8 %v1123
        %v1125 = vlaneseq
        %v1126 = vshrl.u32 %v1125, 7
        %v1127 = vsub.s32 %v1124, %v1126
        %v1128 = vrot.slane %v1114, %v1127
        %v1129 = vcombine.low %v955, %v971
        %v1130 = vcombine.high %v955, %v971
        %v1132 = vunpack.c.l.s4 1983009808
        %v1133 = vunpack.c.0.s8 %v1132
        %v1134 = vlaneseq
        %v1135 = vshrl.u32 %v1134, 7
        %v1136 = vsub.s32 %v1133, %v1135
        %v1137 = vrot.slane %v1129, %v1136
        %v1139 = vunpack.c.l.s4 1983009808
        %v1140 = vunpack.c.0.s8 %v1139
        %v1141 = vlaneseq
        %v1142 = vshrl.u32 %v1141, 7
        %v1143 = vsub.s32 %v1140, %v1142
        %v1144 = vrot.slane %v1130, %v1143
        %v1145 = vcombine.low %v1121, %v1137
        %v1146 = vcombine.high %v1121, %v1137
        %v1148 = vunpack.c.l.s4 1934713408
        %v1149 = vunpack.c.0.s8 %v1148
        %v1150 = vlaneseq
        %v1151 = vshrl.u32 %v1150, 7
        %v1152 = vsub.s32 %v1149, %v1151
        %v1153 = vrot.slane %v1145, %v1152
        %v1155 = vunpack.c.l.s4 1934713408
        %v1156 = vunpack.c.0.s8 %v1155
        %v1157 = vlaneseq
        %v1158 = vshrl.u32 %v1157, 7
        %v1159 = vsub.s32 %v1156, %v1158
        %v1160 = vrot.slane %v1146, %v1159
        %v1161 = vcombine.low %v1128, %v1144
        %v1162 = vcombine.high %v1128, %v1144
        %v1164 = vunpack.c.l.s4 1934713408
        %v1165 = vunpack.c.0.s8 %v1164
        %v1166 = vlaneseq
        %v1167 = vshrl.u32 %v1166, 7
        %v1168 = vsub.s32 %v1165, %v1167
        %v1169 = vrot.slane %v1161, %v1168
        %v1171 = vunpack.c.l.s4 1934713408
        %v1172 = vunpack.c.0.s8 %v1171
        %v1173 = vlaneseq
        %v1174 = vshrl.u32 %v1173, 7
        %v1175 = vsub.s32 %v1172, %v1174
        %v1176 = vrot.slane %v1162, %v1175
        %v1177 = vcombine.high %v1153, 0
        %v1178 = vcombine.high %v1160, 0
        %v1179 = vcombine.high %v1169, 0
        %v1180 = vcombine.high %v1176, 0
        %v1181 = vcombine.low %v951, %v967
        %v1182 = vcombine.high %v951, %v967
        %v1184 = vunpack.c.l.s4 1983009808
        %v1185 = vunpack.c.0.s8 %v1184
        %v1186 = vlaneseq
        %v1187 = vshrl.u32 %v1186, 7
        %v1188 = vsub.s32 %v1185, %v1187
        %v1189 = vrot.slane %v1181, %v1188
        %v1191 = vunpack.c.l.s4 1983009808
        %v1192 = vunpack.c.0.s8 %v1191
        %v1193 = vlaneseq
        %v1194 = vshrl.u32 %v1193, 7
        %v1195 = vsub.s32 %v1192, %v1194
        %v1196 = vrot.slane %v1182, %v1195
        %v1197 = vcombine.low %v959, %v975
        %v1198 = vcombine.high %v959, %v975
        %v1200 = vunpack.c.l.s4 1983009808
        %v1201 = vunpack.c.0.s8 %v1200
        %v1202 = vlaneseq
        %v1203 = vshrl.u32 %v1202, 7
        %v1204 = vsub.s32 %v1201, %v1203
        %v1205 = vrot.slane %v1197, %v1204
        %v1207 = vunpack.c.l.s4 1983009808
        %v1208 = vunpack.c.0.s8 %v1207
        %v1209 = vlaneseq
        %v1210 = vshrl.u32 %v1209, 7
        %v1211 = vsub.s32 %v1208, %v1210
        %v1212 = vrot.slane %v1198, %v1211
        %v1213 = vcombine.low %v1189, %v1205
        %v1214 = vcombine.high %v1189, %v1205
        %v1216 = vunpack.c.l.s4 1934713408
        %v1217 = vunpack.c.0.s8 %v1216
        %v1218 = vlaneseq
        %v1219 = vshrl.u32 %v1218, 7
        %v1220 = vsub.s32 %v1217, %v1219
        %v1221 = vrot.slane %v1213, %v1220
        %v1223 = vunpack.c.l.s4 1934713408
        %v1224 = vunpack.c.0.s8 %v1223
        %v1225 = vlaneseq
        %v1226 = vshrl.u32 %v1225, 7
        %v1227 = vsub.s32 %v1224, %v1226
        %v1228 = vrot.slane %v1214, %v1227
        %v1229 = vcombine.low %v1196, %v1212
        %v1230 = vcombine.high %v1196, %v1212
        %v1232 = vunpack.c.l.s4 1934713408
        %v1233 = vunpack.c.0.s8 %v1232
        %v1234 = vlaneseq
        %v1235 = vshrl.u32 %v1234, 7
        %v1236 = vsub.s32 %v1233, %v1235
        %v1237 = vrot.slane %v1229, %v1236
        %v1239 = vunpack.c.l.s4 1934713408
        %v1240 = vunpack.c.0.s8 %v1239
        %v1241 = vlaneseq
        %v1242 = vshrl.u32 %v1241, 7
        %v1243 = vsub.s32 %v1240, %v1242
        %v1244 = vrot.slane %v1230, %v1243
        %v1245 = vcombine.high %v1221, 0
        %v1246 = vcombine.high %v1228, 0
        %v1247 = vcombine.high %v1237, 0
        %v1248 = vcombine.high %v1244, 0
        %1249 = vxpose.xlu0.c.b16.start [1/8] %v1017, 128
        %1250 = vxpose.xlu0.c.b16.cont [2/8] 0, 128
        %1251 = vxpose.xlu0.c.b16.cont [3/8] 0, 128
        %1252 = vxpose.xlu0.c.b16.cont [4/8] 0, 128
        %1253 = vxpose.xlu0.c.b16.cont [5/8] 0, 128
        %1254 = vxpose.xlu0.c.b16.cont [6/8] 0, 128
        %1255 = vxpose.xlu0.c.b16.cont [7/8] 0, 128
        %1256 = vxpose.xlu0.c.b16.end [8/8] 0, 128
        %v1257 = vpop.trf.xlu0
        %v1258 = vpop.trf.xlu0
        %v1259 = vpop.trf.xlu0
        %v1260 = vpop.trf.xlu0
        %v1261 = vpop.trf.xlu0
        %v1262 = vpop.trf.xlu0
        %v1263 = vpop.trf.xlu0
        %v1264 = vpop.trf.xlu0
        %1265 = vxpose.xlu0.c.b16.start [1/8] %v1085, 128
        %1266 = vxpose.xlu0.c.b16.cont [2/8] 0, 128
        %1267 = vxpose.xlu0.c.b16.cont [3/8] 0, 128
        %1268 = vxpose.xlu0.c.b16.cont [4/8] 0, 128
        %1269 = vxpose.xlu0.c.b16.cont [5/8] 0, 128
        %1270 = vxpose.xlu0.c.b16.cont [6/8] 0, 128
        %1271 = vxpose.xlu0.c.b16.cont [7/8] 0, 128
        %1272 = vxpose.xlu0.c.b16.end [8/8] 0, 128
        %v1273 = vpop.trf.xlu0
        %v1274 = vpop.trf.xlu0
        %v1275 = vpop.trf.xlu0
        %v1276 = vpop.trf.xlu0
        %v1277 = vpop.trf.xlu0
        %v1278 = vpop.trf.xlu0
        %v1279 = vpop.trf.xlu0
        %v1280 = vpop.trf.xlu0
        %1281 = vxpose.xlu0.c.b16.start [1/8] %v1041, 128
        %1282 = vxpose.xlu0.c.b16.cont [2/8] 0, 128
        %1283 = vxpose.xlu0.c.b16.cont [3/8] 0, 128
        %1284 = vxpose.xlu0.c.b16.cont [4/8] 0, 128
        %1285 = vxpose.xlu0.c.b16.cont [5/8] 0, 128
        %1286 = vxpose.xlu0.c.b16.cont [6/8] 0, 128
        %1287 = vxpose.xlu0.c.b16.cont [7/8] 0, 128
        %1288 = vxpose.xlu0.c.b16.end [8/8] 0, 128
        %v1289 = vpop.trf.xlu0
        %v1290 = vpop.trf.xlu0
        %v1291 = vpop.trf.xlu0
        %v1292 = vpop.trf.xlu0
        %v1293 = vpop.trf.xlu0
        %v1294 = vpop.trf.xlu0
        %v1295 = vpop.trf.xlu0
        %v1296 = vpop.trf.xlu0
        %1297 = vxpose.xlu0.c.b16.start [1/8] %v1109, 128
        %1298 = vxpose.xlu0.c.b16.cont [2/8] 0, 128
        %1299 = vxpose.xlu0.c.b16.cont [3/8] 0, 128
        %1300 = vxpose.xlu0.c.b16.cont [4/8] 0, 128
        %1301 = vxpose.xlu0.c.b16.cont [5/8] 0, 128
        %1302 = vxpose.xlu0.c.b16.cont [6/8] 0, 128
        %1303 = vxpose.xlu0.c.b16.cont [7/8] 0, 128
        %1304 = vxpose.xlu0.c.b16.end [8/8] 0, 128
        %v1305 = vpop.trf.xlu0
        %v1306 = vpop.trf.xlu0
        %v1307 = vpop.trf.xlu0
        %v1308 = vpop.trf.xlu0
        %v1309 = vpop.trf.xlu0
        %v1310 = vpop.trf.xlu0
        %v1311 = vpop.trf.xlu0
        %v1312 = vpop.trf.xlu0
        %1313 = vxpose.xlu0.c.b16.start [1/8] %v1024, 128
        %1314 = vxpose.xlu0.c.b16.cont [2/8] 0, 128
        %1315 = vxpose.xlu0.c.b16.cont [3/8] 0, 128
        %1316 = vxpose.xlu0.c.b16.cont [4/8] 0, 128
        %1317 = vxpose.xlu0.c.b16.cont [5/8] 0, 128
        %1318 = vxpose.xlu0.c.b16.cont [6/8] 0, 128
        %1319 = vxpose.xlu0.c.b16.cont [7/8] 0, 128
        %1320 = vxpose.xlu0.c.b16.end [8/8] 0, 128
        %v1321 = vpop.trf.xlu0
        %v1322 = vpop.trf.xlu0
        %v1323 = vpop.trf.xlu0
        %v1324 = vpop.trf.xlu0
        %v1325 = vpop.trf.xlu0
        %v1326 = vpop.trf.xlu0
        %v1327 = vpop.trf.xlu0
        %v1328 = vpop.trf.xlu0
        %1329 = vxpose.xlu0.c.b16.start [1/8] %v1092, 128
        %1330 = vxpose.xlu0.c.b16.cont [2/8] 0, 128
        %1331 = vxpose.xlu0.c.b16.cont [3/8] 0, 128
        %1332 = vxpose.xlu0.c.b16.cont [4/8] 0, 128
        %1333 = vxpose.xlu0.c.b16.cont [5/8] 0, 128
        %1334 = vxpose.xlu0.c.b16.cont [6/8] 0, 128
        %1335 = vxpose.xlu0.c.b16.cont [7/8] 0, 128
        %1336 = vxpose.xlu0.c.b16.end [8/8] 0, 128
        %v1337 = vpop.trf.xlu0
        %v1338 = vpop.trf.xlu0
        %v1339 = vpop.trf.xlu0
        %v1340 = vpop.trf.xlu0
        %v1341 = vpop.trf.xlu0
        %v1342 = vpop.trf.xlu0
        %v1343 = vpop.trf.xlu0
        %v1344 = vpop.trf.xlu0
        %1345 = vxpose.xlu0.c.b16.start [1/8] %v1042, 128
        %1346 = vxpose.xlu0.c.b16.cont [2/8] 0, 128
        %1347 = vxpose.xlu0.c.b16.cont [3/8] 0, 128
        %1348 = vxpose.xlu0.c.b16.cont [4/8] 0, 128
        %1349 = vxpose.xlu0.c.b16.cont [5/8] 0, 128
        %1350 = vxpose.xlu0.c.b16.cont [6/8] 0, 128
        %1351 = vxpose.xlu0.c.b16.cont [7/8] 0, 128
        %1352 = vxpose.xlu0.c.b16.end [8/8] 0, 128
        %v1353 = vpop.trf.xlu0
        %v1354 = vpop.trf.xlu0
        %v1355 = vpop.trf.xlu0
        %v1356 = vpop.trf.xlu0
        %v1357 = vpop.trf.xlu0
        %v1358 = vpop.trf.xlu0
        %v1359 = vpop.trf.xlu0
        %v1360 = vpop.trf.xlu0
        %1361 = vxpose.xlu0.c.b16.start [1/8] %v1110, 128
        %1362 = vxpose.xlu0.c.b16.cont [2/8] 0, 128
        %1363 = vxpose.xlu0.c.b16.cont [3/8] 0, 128
        %1364 = vxpose.xlu0.c.b16.cont [4/8] 0, 128
        %1365 = vxpose.xlu0.c.b16.cont [5/8] 0, 128
        %1366 = vxpose.xlu0.c.b16.cont [6/8] 0, 128
        %1367 = vxpose.xlu0.c.b16.cont [7/8] 0, 128
        %1368 = vxpose.xlu0.c.b16.end [8/8] 0, 128
        %v1369 = vpop.trf.xlu0
        %v1370 = vpop.trf.xlu0
        %v1371 = vpop.trf.xlu0
        %v1372 = vpop.trf.xlu0
        %v1373 = vpop.trf.xlu0
        %v1374 = vpop.trf.xlu0
        %v1375 = vpop.trf.xlu0
        %v1376 = vpop.trf.xlu0
        %1377 = vxpose.xlu0.c.b16.start [1/8] %v1033, 128
        %1378 = vxpose.xlu0.c.b16.cont [2/8] 0, 128
        %1379 = vxpose.xlu0.c.b16.cont [3/8] 0, 128
        %1380 = vxpose.xlu0.c.b16.cont [4/8] 0, 128
        %1381 = vxpose.xlu0.c.b16.cont [5/8] 0, 128
        %1382 = vxpose.xlu0.c.b16.cont [6/8] 0, 128
        %1383 = vxpose.xlu0.c.b16.cont [7/8] 0, 128
        %1384 = vxpose.xlu0.c.b16.end [8/8] 0, 128
        %v1385 = vpop.trf.xlu0
        %v1386 = vpop.trf.xlu0
        %v1387 = vpop.trf.xlu0
        %v1388 = vpop.trf.xlu0
        %v1389 = vpop.trf.xlu0
        %v1390 = vpop.trf.xlu0
        %v1391 = vpop.trf.xlu0
        %v1392 = vpop.trf.xlu0
        %1393 = vxpose.xlu0.c.b16.start [1/8] %v1101, 128
        %1394 = vxpose.xlu0.c.b16.cont [2/8] 0, 128
        %1395 = vxpose.xlu0.c.b16.cont [3/8] 0, 128
        %1396 = vxpose.xlu0.c.b16.cont [4/8] 0, 128
        %1397 = vxpose.xlu0.c.b16.cont [5/8] 0, 128
        %1398 = vxpose.xlu0.c.b16.cont [6/8] 0, 128
        %1399 = vxpose.xlu0.c.b16.cont [7/8] 0, 128
        %1400 = vxpose.xlu0.c.b16.end [8/8] 0, 128
        %v1401 = vpop.trf.xlu0
        %v1402 = vpop.trf.xlu0
        %v1403 = vpop.trf.xlu0
        %v1404 = vpop.trf.xlu0
        %v1405 = vpop.trf.xlu0
        %v1406 = vpop.trf.xlu0
        %v1407 = vpop.trf.xlu0
        %v1408 = vpop.trf.xlu0
        %1409 = vxpose.xlu0.c.b16.start [1/8] %v1043, 128
        %1410 = vxpose.xlu0.c.b16.cont [2/8] 0, 128
        %1411 = vxpose.xlu0.c.b16.cont [3/8] 0, 128
        %1412 = vxpose.xlu0.c.b16.cont [4/8] 0, 128
        %1413 = vxpose.xlu0.c.b16.cont [5/8] 0, 128
        %1414 = vxpose.xlu0.c.b16.cont [6/8] 0, 128
        %1415 = vxpose.xlu0.c.b16.cont [7/8] 0, 128
        %1416 = vxpose.xlu0.c.b16.end [8/8] 0, 128
        %v1417 = vpop.trf.xlu0
        %v1418 = vpop.trf.xlu0
        %v1419 = vpop.trf.xlu0
        %v1420 = vpop.trf.xlu0
        %v1421 = vpop.trf.xlu0
        %v1422 = vpop.trf.xlu0
        %v1423 = vpop.trf.xlu0
        %v1424 = vpop.trf.xlu0
        %1425 = vxpose.xlu0.c.b16.start [1/8] %v1111, 128
        %1426 = vxpose.xlu0.c.b16.cont [2/8] 0, 128
        %1427 = vxpose.xlu0.c.b16.cont [3/8] 0, 128
        %1428 = vxpose.xlu0.c.b16.cont [4/8] 0, 128
        %1429 = vxpose.xlu0.c.b16.cont [5/8] 0, 128
        %1430 = vxpose.xlu0.c.b16.cont [6/8] 0, 128
        %1431 = vxpose.xlu0.c.b16.cont [7/8] 0, 128
        %1432 = vxpose.xlu0.c.b16.end [8/8] 0, 128
        %v1433 = vpop.trf.xlu0
        %v1434 = vpop.trf.xlu0
        %v1435 = vpop.trf.xlu0
        %v1436 = vpop.trf.xlu0
        %v1437 = vpop.trf.xlu0
        %v1438 = vpop.trf.xlu0
        %v1439 = vpop.trf.xlu0
        %v1440 = vpop.trf.xlu0
        %1441 = vxpose.xlu0.c.b16.start [1/8] %v1040, 128
        %1442 = vxpose.xlu0.c.b16.cont [2/8] 0, 128
        %1443 = vxpose.xlu0.c.b16.cont [3/8] 0, 128
        %1444 = vxpose.xlu0.c.b16.cont [4/8] 0, 128
        %1445 = vxpose.xlu0.c.b16.cont [5/8] 0, 128
        %1446 = vxpose.xlu0.c.b16.cont [6/8] 0, 128
        %1447 = vxpose.xlu0.c.b16.cont [7/8] 0, 128
        %1448 = vxpose.xlu0.c.b16.end [8/8] 0, 128
        %v1449 = vpop.trf.xlu0
        %v1450 = vpop.trf.xlu0
        %v1451 = vpop.trf.xlu0
        %v1452 = vpop.trf.xlu0
        %v1453 = vpop.trf.xlu0
        %v1454 = vpop.trf.xlu0
        %v1455 = vpop.trf.xlu0
        %v1456 = vpop.trf.xlu0
        %1457 = vxpose.xlu0.c.b16.start [1/8] %v1108, 128
        %1458 = vxpose.xlu0.c.b16.cont [2/8] 0, 128
        %1459 = vxpose.xlu0.c.b16.cont [3/8] 0, 128
        %1460 = vxpose.xlu0.c.b16.cont [4/8] 0, 128
        %1461 = vxpose.xlu0.c.b16.cont [5/8] 0, 128
        %1462 = vxpose.xlu0.c.b16.cont [6/8] 0, 128
        %1463 = vxpose.xlu0.c.b16.cont [7/8] 0, 128
        %1464 = vxpose.xlu0.c.b16.end [8/8] 0, 128
        %v1465 = vpop.trf.xlu0
        %v1466 = vpop.trf.xlu0
        %v1467 = vpop.trf.xlu0
        %v1468 = vpop.trf.xlu0
        %v1469 = vpop.trf.xlu0
        %v1470 = vpop.trf.xlu0
        %v1471 = vpop.trf.xlu0
        %v1472 = vpop.trf.xlu0
        %1473 = vxpose.xlu0.c.b16.start [1/8] %v1044, 128
        %1474 = vxpose.xlu0.c.b16.cont [2/8] 0, 128
        %1475 = vxpose.xlu0.c.b16.cont [3/8] 0, 128
        %1476 = vxpose.xlu0.c.b16.cont [4/8] 0, 128
        %1477 = vxpose.xlu0.c.b16.cont [5/8] 0, 128
        %1478 = vxpose.xlu0.c.b16.cont [6/8] 0, 128
        %1479 = vxpose.xlu0.c.b16.cont [7/8] 0, 128
        %1480 = vxpose.xlu0.c.b16.end [8/8] 0, 128
        %v1481 = vpop.trf.xlu0
        %v1482 = vpop.trf.xlu0
        %v1483 = vpop.trf.xlu0
        %v1484 = vpop.trf.xlu0
        %v1485 = vpop.trf.xlu0
        %v1486 = vpop.trf.xlu0
        %v1487 = vpop.trf.xlu0
        %v1488 = vpop.trf.xlu0
        %1489 = vxpose.xlu0.c.b16.start [1/8] %v1112, 128
        %1490 = vxpose.xlu0.c.b16.cont [2/8] 0, 128
        %1491 = vxpose.xlu0.c.b16.cont [3/8] 0, 128
        %1492 = vxpose.xlu0.c.b16.cont [4/8] 0, 128
        %1493 = vxpose.xlu0.c.b16.cont [5/8] 0, 128
        %1494 = vxpose.xlu0.c.b16.cont [6/8] 0, 128
        %1495 = vxpose.xlu0.c.b16.cont [7/8] 0, 128
        %1496 = vxpose.xlu0.c.b16.end [8/8] 0, 128
        %v1497 = vpop.trf.xlu0
        %v1498 = vpop.trf.xlu0
        %v1499 = vpop.trf.xlu0
        %v1500 = vpop.trf.xlu0
        %v1501 = vpop.trf.xlu0
        %v1502 = vpop.trf.xlu0
        %v1503 = vpop.trf.xlu0
        %v1504 = vpop.trf.xlu0
        %1505 = vxpose.xlu0.c.b16.start [1/8] %v1153, 128
        %1506 = vxpose.xlu0.c.b16.cont [2/8] 0, 128
        %1507 = vxpose.xlu0.c.b16.cont [3/8] 0, 128
        %1508 = vxpose.xlu0.c.b16.cont [4/8] 0, 128
        %1509 = vxpose.xlu0.c.b16.cont [5/8] 0, 128
        %1510 = vxpose.xlu0.c.b16.cont [6/8] 0, 128
        %1511 = vxpose.xlu0.c.b16.cont [7/8] 0, 128
        %1512 = vxpose.xlu0.c.b16.end [8/8] 0, 128
        %v1513 = vpop.trf.xlu0
        %v1514 = vpop.trf.xlu0
        %v1515 = vpop.trf.xlu0
        %v1516 = vpop.trf.xlu0
        %v1517 = vpop.trf.xlu0
        %v1518 = vpop.trf.xlu0
        %v1519 = vpop.trf.xlu0
        %v1520 = vpop.trf.xlu0
        %1521 = vxpose.xlu0.c.b16.start [1/8] %v1221, 128
        %1522 = vxpose.xlu0.c.b16.cont [2/8] 0, 128
        %1523 = vxpose.xlu0.c.b16.cont [3/8] 0, 128
        %1524 = vxpose.xlu0.c.b16.cont [4/8] 0, 128
        %1525 = vxpose.xlu0.c.b16.cont [5/8] 0, 128
        %1526 = vxpose.xlu0.c.b16.cont [6/8] 0, 128
        %1527 = vxpose.xlu0.c.b16.cont [7/8] 0, 128
        %1528 = vxpose.xlu0.c.b16.end [8/8] 0, 128
        %v1529 = vpop.trf.xlu0
        %v1530 = vpop.trf.xlu0
        %v1531 = vpop.trf.xlu0
        %v1532 = vpop.trf.xlu0
        %v1533 = vpop.trf.xlu0
        %v1534 = vpop.trf.xlu0
        %v1535 = vpop.trf.xlu0
        %v1536 = vpop.trf.xlu0
        %1537 = vxpose.xlu0.c.b16.start [1/8] %v1177, 128
        %1538 = vxpose.xlu0.c.b16.cont [2/8] 0, 128
        %1539 = vxpose.xlu0.c.b16.cont [3/8] 0, 128
        %1540 = vxpose.xlu0.c.b16.cont [4/8] 0, 128
        %1541 = vxpose.xlu0.c.b16.cont [5/8] 0, 128
        %1542 = vxpose.xlu0.c.b16.cont [6/8] 0, 128
        %1543 = vxpose.xlu0.c.b16.cont [7/8] 0, 128
        %1544 = vxpose.xlu0.c.b16.end [8/8] 0, 128
        %v1545 = vpop.trf.xlu0
        %v1546 = vpop.trf.xlu0
        %v1547 = vpop.trf.xlu0
        %v1548 = vpop.trf.xlu0
        %v1549 = vpop.trf.xlu0
        %v1550 = vpop.trf.xlu0
        %v1551 = vpop.trf.xlu0
        %v1552 = vpop.trf.xlu0
        %1553 = vxpose.xlu0.c.b16.start [1/8] %v1245, 128
        %1554 = vxpose.xlu0.c.b16.cont [2/8] 0, 128
        %1555 = vxpose.xlu0.c.b16.cont [3/8] 0, 128
        %1556 = vxpose.xlu0.c.b16.cont [4/8] 0, 128
        %1557 = vxpose.xlu0.c.b16.cont [5/8] 0, 128
        %1558 = vxpose.xlu0.c.b16.cont [6/8] 0, 128
        %1559 = vxpose.xlu0.c.b16.cont [7/8] 0, 128
        %1560 = vxpose.xlu0.c.b16.end [8/8] 0, 128
        %v1561 = vpop.trf.xlu0
        %v1562 = vpop.trf.xlu0
        %v1563 = vpop.trf.xlu0
        %v1564 = vpop.trf.xlu0
        %v1565 = vpop.trf.xlu0
        %v1566 = vpop.trf.xlu0
        %v1567 = vpop.trf.xlu0
        %v1568 = vpop.trf.xlu0
        %1569 = vxpose.xlu0.c.b16.start [1/8] %v1160, 128
        %1570 = vxpose.xlu0.c.b16.cont [2/8] 0, 128
        %1571 = vxpose.xlu0.c.b16.cont [3/8] 0, 128
        %1572 = vxpose.xlu0.c.b16.cont [4/8] 0, 128
        %1573 = vxpose.xlu0.c.b16.cont [5/8] 0, 128
        %1574 = vxpose.xlu0.c.b16.cont [6/8] 0, 128
        %1575 = vxpose.xlu0.c.b16.cont [7/8] 0, 128
        %1576 = vxpose.xlu0.c.b16.end [8/8] 0, 128
        %v1577 = vpop.trf.xlu0
        %v1578 = vpop.trf.xlu0
        %v1579 = vpop.trf.xlu0
        %v1580 = vpop.trf.xlu0
        %v1581 = vpop.trf.xlu0
        %v1582 = vpop.trf.xlu0
        %v1583 = vpop.trf.xlu0
        %v1584 = vpop.trf.xlu0
        %1585 = vxpose.xlu0.c.b16.start [1/8] %v1228, 128
        %1586 = vxpose.xlu0.c.b16.cont [2/8] 0, 128
        %1587 = vxpose.xlu0.c.b16.cont [3/8] 0, 128
        %1588 = vxpose.xlu0.c.b16.cont [4/8] 0, 128
        %1589 = vxpose.xlu0.c.b16.cont [5/8] 0, 128
        %1590 = vxpose.xlu0.c.b16.cont [6/8] 0, 128
        %1591 = vxpose.xlu0.c.b16.cont [7/8] 0, 128
        %1592 = vxpose.xlu0.c.b16.end [8/8] 0, 128
        %v1593 = vpop.trf.xlu0
        %v1594 = vpop.trf.xlu0
        %v1595 = vpop.trf.xlu0
        %v1596 = vpop.trf.xlu0
        %v1597 = vpop.trf.xlu0
        %v1598 = vpop.trf.xlu0
        %v1599 = vpop.trf.xlu0
        %v1600 = vpop.trf.xlu0
        %1601 = vxpose.xlu0.c.b16.start [1/8] %v1178, 128
        %1602 = vxpose.xlu0.c.b16.cont [2/8] 0, 128
        %1603 = vxpose.xlu0.c.b16.cont [3/8] 0, 128
        %1604 = vxpose.xlu0.c.b16.cont [4/8] 0, 128
        %1605 = vxpose.xlu0.c.b16.cont [5/8] 0, 128
        %1606 = vxpose.xlu0.c.b16.cont [6/8] 0, 128
        %1607 = vxpose.xlu0.c.b16.cont [7/8] 0, 128
        %1608 = vxpose.xlu0.c.b16.end [8/8] 0, 128
        %v1609 = vpop.trf.xlu0
        %v1610 = vpop.trf.xlu0
        %v1611 = vpop.trf.xlu0
        %v1612 = vpop.trf.xlu0
        %v1613 = vpop.trf.xlu0
        %v1614 = vpop.trf.xlu0
        %v1615 = vpop.trf.xlu0
        %v1616 = vpop.trf.xlu0
        %1617 = vxpose.xlu0.c.b16.start [1/8] %v1246, 128
        %1618 = vxpose.xlu0.c.b16.cont [2/8] 0, 128
        %1619 = vxpose.xlu0.c.b16.cont [3/8] 0, 128
        %1620 = vxpose.xlu0.c.b16.cont [4/8] 0, 128
        %1621 = vxpose.xlu0.c.b16.cont [5/8] 0, 128
        %1622 = vxpose.xlu0.c.b16.cont [6/8] 0, 128
        %1623 = vxpose.xlu0.c.b16.cont [7/8] 0, 128
        %1624 = vxpose.xlu0.c.b16.end [8/8] 0, 128
        %v1625 = vpop.trf.xlu0
        %v1626 = vpop.trf.xlu0
        %v1627 = vpop.trf.xlu0
        %v1628 = vpop.trf.xlu0
        %v1629 = vpop.trf.xlu0
        %v1630 = vpop.trf.xlu0
        %v1631 = vpop.trf.xlu0
        %v1632 = vpop.trf.xlu0
        %1633 = vxpose.xlu0.c.b16.start [1/8] %v1169, 128
        %1634 = vxpose.xlu0.c.b16.cont [2/8] 0, 128
        %1635 = vxpose.xlu0.c.b16.cont [3/8] 0, 128
        %1636 = vxpose.xlu0.c.b16.cont [4/8] 0, 128
        %1637 = vxpose.xlu0.c.b16.cont [5/8] 0, 128
        %1638 = vxpose.xlu0.c.b16.cont [6/8] 0, 128
        %1639 = vxpose.xlu0.c.b16.cont [7/8] 0, 128
        %1640 = vxpose.xlu0.c.b16.end [8/8] 0, 128
        %v1641 = vpop.trf.xlu0
        %v1642 = vpop.trf.xlu0
        %v1643 = vpop.trf.xlu0
        %v1644 = vpop.trf.xlu0
        %v1645 = vpop.trf.xlu0
        %v1646 = vpop.trf.xlu0
        %v1647 = vpop.trf.xlu0
        %v1648 = vpop.trf.xlu0
        %1649 = vxpose.xlu0.c.b16.start [1/8] %v1237, 128
        %1650 = vxpose.xlu0.c.b16.cont [2/8] 0, 128
        %1651 = vxpose.xlu0.c.b16.cont [3/8] 0, 128
        %1652 = vxpose.xlu0.c.b16.cont [4/8] 0, 128
        %1653 = vxpose.xlu0.c.b16.cont [5/8] 0, 128
        %1654 = vxpose.xlu0.c.b16.cont [6/8] 0, 128
        %1655 = vxpose.xlu0.c.b16.cont [7/8] 0, 128
        %1656 = vxpose.xlu0.c.b16.end [8/8] 0, 128
        %v1657 = vpop.trf.xlu0
        %v1658 = vpop.trf.xlu0
        %v1659 = vpop.trf.xlu0
        %v1660 = vpop.trf.xlu0
        %v1661 = vpop.trf.xlu0
        %v1662 = vpop.trf.xlu0
        %v1663 = vpop.trf.xlu0
        %v1664 = vpop.trf.xlu0
        %1665 = vxpose.xlu0.c.b16.start [1/8] %v1179, 128
        %1666 = vxpose.xlu0.c.b16.cont [2/8] 0, 128
        %1667 = vxpose.xlu0.c.b16.cont [3/8] 0, 128
        %1668 = vxpose.xlu0.c.b16.cont [4/8] 0, 128
        %1669 = vxpose.xlu0.c.b16.cont [5/8] 0, 128
        %1670 = vxpose.xlu0.c.b16.cont [6/8] 0, 128
        %1671 = vxpose.xlu0.c.b16.cont [7/8] 0, 128
        %1672 = vxpose.xlu0.c.b16.end [8/8] 0, 128
        %v1673 = vpop.trf.xlu0
        %v1674 = vpop.trf.xlu0
        %v1675 = vpop.trf.xlu0
        %v1676 = vpop.trf.xlu0
        %v1677 = vpop.trf.xlu0
        %v1678 = vpop.trf.xlu0
        %v1679 = vpop.trf.xlu0
        %v1680 = vpop.trf.xlu0
        %1681 = vxpose.xlu0.c.b16.start [1/8] %v1247, 128
        %1682 = vxpose.xlu0.c.b16.cont [2/8] 0, 128
        %1683 = vxpose.xlu0.c.b16.cont [3/8] 0, 128
        %1684 = vxpose.xlu0.c.b16.cont [4/8] 0, 128
        %1685 = vxpose.xlu0.c.b16.cont [5/8] 0, 128
        %1686 = vxpose.xlu0.c.b16.cont [6/8] 0, 128
        %1687 = vxpose.xlu0.c.b16.cont [7/8] 0, 128
        %1688 = vxpose.xlu0.c.b16.end [8/8] 0, 128
        %v1689 = vpop.trf.xlu0
        %v1690 = vpop.trf.xlu0
        %v1691 = vpop.trf.xlu0
        %v1692 = vpop.trf.xlu0
        %v1693 = vpop.trf.xlu0
        %v1694 = vpop.trf.xlu0
        %v1695 = vpop.trf.xlu0
        %v1696 = vpop.trf.xlu0
        %1697 = vxpose.xlu0.c.b16.start [1/8] %v1176, 128
        %1698 = vxpose.xlu0.c.b16.cont [2/8] 0, 128
        %1699 = vxpose.xlu0.c.b16.cont [3/8] 0, 128
        %1700 = vxpose.xlu0.c.b16.cont [4/8] 0, 128
        %1701 = vxpose.xlu0.c.b16.cont [5/8] 0, 128
        %1702 = vxpose.xlu0.c.b16.cont [6/8] 0, 128
        %1703 = vxpose.xlu0.c.b16.cont [7/8] 0, 128
        %1704 = vxpose.xlu0.c.b16.end [8/8] 0, 128
        %v1705 = vpop.trf.xlu0
        %v1706 = vpop.trf.xlu0
        %v1707 = vpop.trf.xlu0
        %v1708 = vpop.trf.xlu0
        %v1709 = vpop.trf.xlu0
        %v1710 = vpop.trf.xlu0
        %v1711 = vpop.trf.xlu0
        %v1712 = vpop.trf.xlu0
        %1713 = vxpose.xlu0.c.b16.start [1/8] %v1244, 128
        %1714 = vxpose.xlu0.c.b16.cont [2/8] 0, 128
        %1715 = vxpose.xlu0.c.b16.cont [3/8] 0, 128
        %1716 = vxpose.xlu0.c.b16.cont [4/8] 0, 128
        %1717 = vxpose.xlu0.c.b16.cont [5/8] 0, 128
        %1718 = vxpose.xlu0.c.b16.cont [6/8] 0, 128
        %1719 = vxpose.xlu0.c.b16.cont [7/8] 0, 128
        %1720 = vxpose.xlu0.c.b16.end [8/8] 0, 128
        %v1721 = vpop.trf.xlu0
        %v1722 = vpop.trf.xlu0
        %v1723 = vpop.trf.xlu0
        %v1724 = vpop.trf.xlu0
        %v1725 = vpop.trf.xlu0
        %v1726 = vpop.trf.xlu0
        %v1727 = vpop.trf.xlu0
        %v1728 = vpop.trf.xlu0
        %1729 = vxpose.xlu0.c.b16.start [1/8] %v1180, 128
        %1730 = vxpose.xlu0.c.b16.cont [2/8] 0, 128
        %1731 = vxpose.xlu0.c.b16.cont [3/8] 0, 128
        %1732 = vxpose.xlu0.c.b16.cont [4/8] 0, 128
        %1733 = vxpose.xlu0.c.b16.cont [5/8] 0, 128
        %1734 = vxpose.xlu0.c.b16.cont [6/8] 0, 128
        %1735 = vxpose.xlu0.c.b16.cont [7/8] 0, 128
        %1736 = vxpose.xlu0.c.b16.end [8/8] 0, 128
        %v1737 = vpop.trf.xlu0
        %v1738 = vpop.trf.xlu0
        %v1739 = vpop.trf.xlu0
        %v1740 = vpop.trf.xlu0
        %v1741 = vpop.trf.xlu0
        %v1742 = vpop.trf.xlu0
        %v1743 = vpop.trf.xlu0
        %v1744 = vpop.trf.xlu0
        %1745 = vxpose.xlu0.c.b16.start [1/8] %v1248, 128
        %1746 = vxpose.xlu0.c.b16.cont [2/8] 0, 128
        %1747 = vxpose.xlu0.c.b16.cont [3/8] 0, 128
        %1748 = vxpose.xlu0.c.b16.cont [4/8] 0, 128
        %1749 = vxpose.xlu0.c.b16.cont [5/8] 0, 128
        %1750 = vxpose.xlu0.c.b16.cont [6/8] 0, 128
        %1751 = vxpose.xlu0.c.b16.cont [7/8] 0, 128
        %1752 = vxpose.xlu0.c.b16.end [8/8] 0, 128
        %v1753 = vpop.trf.xlu0
        %v1754 = vpop.trf.xlu0
        %v1755 = vpop.trf.xlu0
        %v1756 = vpop.trf.xlu0
        %v1757 = vpop.trf.xlu0
        %v1758 = vpop.trf.xlu0
        %v1759 = vpop.trf.xlu0
        %v1760 = vpop.trf.xlu0
        %v1761 = vcombine.low %v1257, %v1321
        %v1763 = vunpack.c.l.s4 1983009808
        %v1764 = vunpack.c.0.s8 %v1763
        %v1765 = vlaneseq
        %v1766 = vshrl.u32 %v1765, 7
        %v1767 = vsub.s32 %v1764, %v1766
        %v1768 = vrot.slane %v1761, %v1767
        %v1769 = vcombine.low %v1289, %v1353
        %v1771 = vunpack.c.l.s4 1983009808
        %v1772 = vunpack.c.0.s8 %v1771
        %v1773 = vlaneseq
        %v1774 = vshrl.u32 %v1773, 7
        %v1775 = vsub.s32 %v1772, %v1774
        %v1776 = vrot.slane %v1769, %v1775
        %v1777 = vcombine.low %v1385, %v1449
        %v1779 = vunpack.c.l.s4 1983009808
        %v1780 = vunpack.c.0.s8 %v1779
        %v1781 = vlaneseq
        %v1782 = vshrl.u32 %v1781, 7
        %v1783 = vsub.s32 %v1780, %v1782
        %v1784 = vrot.slane %v1777, %v1783
        %v1785 = vcombine.low %v1417, %v1481
        %v1787 = vunpack.c.l.s4 1983009808
        %v1788 = vunpack.c.0.s8 %v1787
        %v1789 = vlaneseq
        %v1790 = vshrl.u32 %v1789, 7
        %v1791 = vsub.s32 %v1788, %v1790
        %v1792 = vrot.slane %v1785, %v1791
        %v1793 = vcombine.low %v1768, %v1776
        %v1795 = vunpack.c.l.s4 1934713408
        %v1796 = vunpack.c.0.s8 %v1795
        %v1797 = vlaneseq
        %v1798 = vshrl.u32 %v1797, 7
        %v1799 = vsub.s32 %v1796, %v1798
        %v1800 = vrot.slane %v1793, %v1799
        %v1801 = vcombine.low %v1784, %v1792
        %v1803 = vunpack.c.l.s4 1934713408
        %v1804 = vunpack.c.0.s8 %v1803
        %v1805 = vlaneseq
        %v1806 = vshrl.u32 %v1805, 7
        %v1807 = vsub.s32 %v1804, %v1806
        %v1808 = vrot.slane %v1801, %v1807
        %v1809 = vcombine.low %v1800, %v1808
        %v1810 = vcombine.high %v1800, %v1808
        %v1811 = vcombine.low %v1273, %v1337
        %v1813 = vunpack.c.l.s4 1983009808
        %v1814 = vunpack.c.0.s8 %v1813
        %v1815 = vlaneseq
        %v1816 = vshrl.u32 %v1815, 7
        %v1817 = vsub.s32 %v1814, %v1816
        %v1818 = vrot.slane %v1811, %v1817
        %v1819 = vcombine.low %v1305, %v1369
        %v1821 = vunpack.c.l.s4 1983009808
        %v1822 = vunpack.c.0.s8 %v1821
        %v1823 = vlaneseq
        %v1824 = vshrl.u32 %v1823, 7
        %v1825 = vsub.s32 %v1822, %v1824
        %v1826 = vrot.slane %v1819, %v1825
        %v1827 = vcombine.low %v1401, %v1465
        %v1829 = vunpack.c.l.s4 1983009808
        %v1830 = vunpack.c.0.s8 %v1829
        %v1831 = vlaneseq
        %v1832 = vshrl.u32 %v1831, 7
        %v1833 = vsub.s32 %v1830, %v1832
        %v1834 = vrot.slane %v1827, %v1833
        %v1835 = vcombine.low %v1433, %v1497
        %v1837 = vunpack.c.l.s4 1983009808
        %v1838 = vunpack.c.0.s8 %v1837
        %v1839 = vlaneseq
        %v1840 = vshrl.u32 %v1839, 7
        %v1841 = vsub.s32 %v1838, %v1840
        %v1842 = vrot.slane %v1835, %v1841
        %v1843 = vcombine.low %v1818, %v1826
        %v1845 = vunpack.c.l.s4 1934713408
        %v1846 = vunpack.c.0.s8 %v1845
        %v1847 = vlaneseq
        %v1848 = vshrl.u32 %v1847, 7
        %v1849 = vsub.s32 %v1846, %v1848
        %v1850 = vrot.slane %v1843, %v1849
        %v1851 = vcombine.low %v1834, %v1842
        %v1853 = vunpack.c.l.s4 1934713408
        %v1854 = vunpack.c.0.s8 %v1853
        %v1855 = vlaneseq
        %v1856 = vshrl.u32 %v1855, 7
        %v1857 = vsub.s32 %v1854, %v1856
        %v1858 = vrot.slane %v1851, %v1857
        %v1859 = vcombine.low %v1850, %v1858
        %v1860 = vcombine.high %v1850, %v1858
        %v1861 = vcombine.low %v1513, %v1577
        %v1863 = vunpack.c.l.s4 1983009808
        %v1864 = vunpack.c.0.s8 %v1863
        %v1865 = vlaneseq
        %v1866 = vshrl.u32 %v1865, 7
        %v1867 = vsub.s32 %v1864, %v1866
        %v1868 = vrot.slane %v1861, %v1867
        %v1869 = vcombine.low %v1545, %v1609
        %v1871 = vunpack.c.l.s4 1983009808
        %v1872 = vunpack.c.0.s8 %v1871
        %v1873 = vlaneseq
        %v1874 = vshrl.u32 %v1873, 7
        %v1875 = vsub.s32 %v1872, %v1874
        %v1876 = vrot.slane %v1869, %v1875
        %v1877 = vcombine.low %v1641, %v1705
        %v1879 = vunpack.c.l.s4 1983009808
        %v1880 = vunpack.c.0.s8 %v1879
        %v1881 = vlaneseq
        %v1882 = vshrl.u32 %v1881, 7
        %v1883 = vsub.s32 %v1880, %v1882
        %v1884 = vrot.slane %v1877, %v1883
        %v1885 = vcombine.low %v1673, %v1737
        %v1887 = vunpack.c.l.s4 1983009808
        %v1888 = vunpack.c.0.s8 %v1887
        %v1889 = vlaneseq
        %v1890 = vshrl.u32 %v1889, 7
        %v1891 = vsub.s32 %v1888, %v1890
        %v1892 = vrot.slane %v1885, %v1891
        %v1893 = vcombine.low %v1868, %v1876
        %v1895 = vunpack.c.l.s4 1934713408
        %v1896 = vunpack.c.0.s8 %v1895
        %v1897 = vlaneseq
        %v1898 = vshrl.u32 %v1897, 7
        %v1899 = vsub.s32 %v1896, %v1898
        %v1900 = vrot.slane %v1893, %v1899
        %v1901 = vcombine.low %v1884, %v1892
        %v1903 = vunpack.c.l.s4 1934713408
        %v1904 = vunpack.c.0.s8 %v1903
        %v1905 = vlaneseq
        %v1906 = vshrl.u32 %v1905, 7
        %v1907 = vsub.s32 %v1904, %v1906
        %v1908 = vrot.slane %v1901, %v1907
        %v1909 = vcombine.low %v1900, %v1908
        %v1910 = vcombine.high %v1900, %v1908
        %v1911 = vcombine.low %v1529, %v1593
        %v1913 = vunpack.c.l.s4 1983009808
        %v1914 = vunpack.c.0.s8 %v1913
        %v1915 = vlaneseq
        %v1916 = vshrl.u32 %v1915, 7
        %v1917 = vsub.s32 %v1914, %v1916
        %v1918 = vrot.slane %v1911, %v1917
        %v1919 = vcombine.low %v1561, %v1625
        %v1921 = vunpack.c.l.s4 1983009808
        %v1922 = vunpack.c.0.s8 %v1921
        %v1923 = vlaneseq
        %v1924 = vshrl.u32 %v1923, 7
        %v1925 = vsub.s32 %v1922, %v1924
        %v1926 = vrot.slane %v1919, %v1925
        %v1927 = vcombine.low %v1657, %v1721
        %v1929 = vunpack.c.l.s4 1983009808
        %v1930 = vunpack.c.0.s8 %v1929
        %v1931 = vlaneseq
        %v1932 = vshrl.u32 %v1931, 7
        %v1933 = vsub.s32 %v1930, %v1932
        %v1934 = vrot.slane %v1927, %v1933
        %v1935 = vcombine.low %v1689, %v1753
        %v1937 = vunpack.c.l.s4 1983009808
        %v1938 = vunpack.c.0.s8 %v1937
        %v1939 = vlaneseq
        %v1940 = vshrl.u32 %v1939, 7
        %v1941 = vsub.s32 %v1938, %v1940
        %v1942 = vrot.slane %v1935, %v1941
        %v1943 = vcombine.low %v1918, %v1926
        %v1945 = vunpack.c.l.s4 1934713408
        %v1946 = vunpack.c.0.s8 %v1945
        %v1947 = vlaneseq
        %v1948 = vshrl.u32 %v1947, 7
        %v1949 = vsub.s32 %v1946, %v1948
        %v1950 = vrot.slane %v1943, %v1949
        %v1951 = vcombine.low %v1934, %v1942
        %v1953 = vunpack.c.l.s4 1934713408
        %v1954 = vunpack.c.0.s8 %v1953
        %v1955 = vlaneseq
        %v1956 = vshrl.u32 %v1955, 7
        %v1957 = vsub.s32 %v1954, %v1956
        %v1958 = vrot.slane %v1951, %v1957
        %v1959 = vcombine.low %v1950, %v1958
        %v1960 = vcombine.high %v1950, %v1958
        %v1963 = vpack.i.b16 %v1859, %v1809
        %v1965 = vshrl.u32 %v1809, 16
        %v1966 = vshrl.u32 %v1859, 16
        %v1967 = vpack.i.b16 %v1966, %v1965
        %v1971 = vpack.i.b16 %v1860, %v1810
        %v1973 = vshrl.u32 %v1810, 16
        %v1974 = vshrl.u32 %v1860, 16
        %v1975 = vpack.i.b16 %v1974, %v1973
        %v1979 = vpack.i.b16 %v1959, %v1909
        %v1981 = vshrl.u32 %v1909, 16
        %v1982 = vshrl.u32 %v1959, 16
        %v1983 = vpack.i.b16 %v1982, %v1981
        %v1987 = vpack.i.b16 %v1960, %v1910
        %v1989 = vshrl.u32 %v1910, 16
        %v1990 = vshrl.u32 %v1960, 16
        %v1991 = vpack.i.b16 %v1990, %v1989
        %vm1993 = vcmask 261120
        %v1995 = vsel %vm1993, %v777, 0
        %1997 = vmatprep.subr.bf16.mxu0 0
        %1998 = vmatpush1.bf16.msra.mxu0 %v1963
        %1999 = vmatprep.subr.bf16.mxu0 0
        %2000 = vmatpush1.bf16.msra.mxu0 %v1979
        %2001 = vmatprep.subr.bf16.mxu0 0
        %2002 = vmatpush1.bf16.msra.mxu0 0
        %2003 = vmatprep.subr.bf16.mxu0 0
        %2004 = vmatpush1.bf16.msra.mxu0 0
        %2005 = vmatprep.subr.bf16.mxu0 0
        %2006 = vmatpush1.bf16.msra.mxu0 0
        %2007 = vmatprep.subr.bf16.mxu0 0
        %2008 = vmatpush1.bf16.msra.mxu0 0
        %2009 = vmatprep.subr.bf16.mxu0 0
        %2010 = vmatpush1.bf16.msra.mxu0 0
        %2011 = vmatprep.subr.bf16.mxu0 0
        %2012 = vmatpush1.bf16.msra.mxu0 0
        %2013 = vmatprep.subr.bf16.mxu0 0
        %2014 = vmatpush1.bf16.msra.mxu0 0
        %2015 = vmatprep.subr.bf16.mxu0 0
        %2016 = vmatpush1.bf16.msra.mxu0 0
        %2017 = vmatprep.subr.bf16.mxu0 0
        %2018 = vmatpush1.bf16.msra.mxu0 0
        %2019 = vmatprep.subr.bf16.mxu0 0
        %2020 = vmatpush1.bf16.msra.mxu0 0
        %2021 = vmatprep.subr.bf16.mxu0 0
        %2022 = vmatpush1.bf16.msra.mxu0 0
        %2023 = vmatprep.subr.bf16.mxu0 0
        %2024 = vmatpush1.bf16.msra.mxu0 0
        %2025 = vmatprep.subr.bf16.mxu0 0
        %2026 = vmatpush1.bf16.msra.mxu0 0
        %2027 = vmatprep.subr.bf16.mxu0 0
        %2028 = vmatpush1.bf16.msra.mxu0 0
        %2029 = vmatprep.mubr.bf16.mxu0 0
        %2030 = vmatmul.mubr.bf16.gmra.mrb[0].mxu0 %v1995
        %v2031 = vpop.f32.mrb[0].mxu0
        %v2032 = vadd.f32 0.0, %v2031
        %v2033 = vpop.f32.mrb[0].mxu0
        %v2034 = vpop.f32.mrb[0].mxu0
        %v2035 = vpop.f32.mrb[0].mxu0
        %2036 = vdwg.mxu0
        %v2038 = vsel %vm1993, %v780, 0
        %2040 = vmatprep.subr.bf16.mxu0 0
        %2041 = vmatpush1.bf16.msra.mxu0 %v1967
        %2042 = vmatprep.subr.bf16.mxu0 0
        %2043 = vmatpush1.bf16.msra.mxu0 %v1983
        %2044 = vmatprep.subr.bf16.mxu0 0
        %2045 = vmatpush1.bf16.msra.mxu0 0
        %2046 = vmatprep.subr.bf16.mxu0 0
        %2047 = vmatpush1.bf16.msra.mxu0 0
        %2048 = vmatprep.subr.bf16.mxu0 0
        %2049 = vmatpush1.bf16.msra.mxu0 0
        %2050 = vmatprep.subr.bf16.mxu0 0
        %2051 = vmatpush1.bf16.msra.mxu0 0
        %2052 = vmatprep.subr.bf16.mxu0 0
        %2053 = vmatpush1.bf16.msra.mxu0 0
        %2054 = vmatprep.subr.bf16.mxu0 0
        %2055 = vmatpush1.bf16.msra.mxu0 0
        %2056 = vmatprep.subr.bf16.mxu0 0
        %2057 = vmatpush1.bf16.msra.mxu0 0
        %2058 = vmatprep.subr.bf16.mxu0 0
        %2059 = vmatpush1.bf16.msra.mxu0 0
        %2060 = vmatprep.subr.bf16.mxu0 0
        %2061 = vmatpush1.bf16.msra.mxu0 0
        %2062 = vmatprep.subr.bf16.mxu0 0
        %2063 = vmatpush1.bf16.msra.mxu0 0
        %2064 = vmatprep.subr.bf16.mxu0 0
        %2065 = vmatpush1.bf16.msra.mxu0 0
        %2066 = vmatprep.subr.bf16.mxu0 0
        %2067 = vmatpush1.bf16.msra.mxu0 0
        %2068 = vmatprep.subr.bf16.mxu0 0
        %2069 = vmatpush1.bf16.msra.mxu0 0
        %2070 = vmatprep.subr.bf16.mxu0 0
        %2071 = vmatpush1.bf16.msra.mxu0 0
        %2072 = vmatprep.mubr.bf16.mxu0 0
        %2073 = vmatmul.mubr.bf16.gmra.mrb[0].mxu0 %v2038
        %v2074 = vpop.f32.mrb[0].mxu0
        %v2075 = vadd.f32 0.0, %v2074
        %v2076 = vpop.f32.mrb[0].mxu0
        %v2077 = vpop.f32.mrb[0].mxu0
        %v2078 = vpop.f32.mrb[0].mxu0
        %2079 = vdwg.mxu0
        %v2081 = vsel %vm1993, %v782, 0
        %2083 = vmatprep.subr.bf16.mxu0 0
        %2084 = vmatpush1.bf16.msra.mxu0 %v1971
        %2085 = vmatprep.subr.bf16.mxu0 0
        %2086 = vmatpush1.bf16.msra.mxu0 %v1987
        %2087 = vmatprep.subr.bf16.mxu0 0
        %2088 = vmatpush1.bf16.msra.mxu0 0
        %2089 = vmatprep.subr.bf16.mxu0 0
        %2090 = vmatpush1.bf16.msra.mxu0 0
        %2091 = vmatprep.subr.bf16.mxu0 0
        %2092 = vmatpush1.bf16.msra.mxu0 0
        %2093 = vmatprep.subr.bf16.mxu0 0
        %2094 = vmatpush1.bf16.msra.mxu0 0
        %2095 = vmatprep.subr.bf16.mxu0 0
        %2096 = vmatpush1.bf16.msra.mxu0 0
        %2097 = vmatprep.subr.bf16.mxu0 0
        %2098 = vmatpush1.bf16.msra.mxu0 0
        %2099 = vmatprep.subr.bf16.mxu0 0
        %2100 = vmatpush1.bf16.msra.mxu0 0
        %2101 = vmatprep.subr.bf16.mxu0 0
        %2102 = vmatpush1.bf16.msra.mxu0 0
        %2103 = vmatprep.subr.bf16.mxu0 0
        %2104 = vmatpush1.bf16.msra.mxu0 0
        %2105 = vmatprep.subr.bf16.mxu0 0
        %2106 = vmatpush1.bf16.msra.mxu0 0
        %2107 = vmatprep.subr.bf16.mxu0 0
        %2108 = vmatpush1.bf16.msra.mxu0 0
        %2109 = vmatprep.subr.bf16.mxu0 0
        %2110 = vmatpush1.bf16.msra.mxu0 0
        %2111 = vmatprep.subr.bf16.mxu0 0
        %2112 = vmatpush1.bf16.msra.mxu0 0
        %2113 = vmatprep.subr.bf16.mxu0 0
        %2114 = vmatpush1.bf16.msra.mxu0 0
        %2115 = vmatprep.mubr.bf16.mxu0 0
        %2116 = vmatmul.mubr.bf16.gmra.mrb[0].mxu0 %v2081
        %v2117 = vpop.f32.mrb[0].mxu0
        %v2118 = vadd.f32 0.0, %v2117
        %v2119 = vpop.f32.mrb[0].mxu0
        %v2120 = vpop.f32.mrb[0].mxu0
        %v2121 = vpop.f32.mrb[0].mxu0
        %2122 = vdwg.mxu0
        %v2124 = vsel %vm1993, %v784, 0
        %2126 = vmatprep.subr.bf16.mxu0 0
        %2127 = vmatpush1.bf16.msra.mxu0 %v1975
        %2128 = vmatprep.subr.bf16.mxu0 0
        %2129 = vmatpush1.bf16.msra.mxu0 %v1991
        %2130 = vmatprep.subr.bf16.mxu0 0
        %2131 = vmatpush1.bf16.msra.mxu0 0
        %2132 = vmatprep.subr.bf16.mxu0 0
        %2133 = vmatpush1.bf16.msra.mxu0 0
        %2134 = vmatprep.subr.bf16.mxu0 0
        %2135 = vmatpush1.bf16.msra.mxu0 0
        %2136 = vmatprep.subr.bf16.mxu0 0
        %2137 = vmatpush1.bf16.msra.mxu0 0
        %2138 = vmatprep.subr.bf16.mxu0 0
        %2139 = vmatpush1.bf16.msra.mxu0 0
        %2140 = vmatprep.subr.bf16.mxu0 0
        %2141 = vmatpush1.bf16.msra.mxu0 0
        %2142 = vmatprep.subr.bf16.mxu0 0
        %2143 = vmatpush1.bf16.msra.mxu0 0
        %2144 = vmatprep.subr.bf16.mxu0 0
        %2145 = vmatpush1.bf16.msra.mxu0 0
        %2146 = vmatprep.subr.bf16.mxu0 0
        %2147 = vmatpush1.bf16.msra.mxu0 0
        %2148 = vmatprep.subr.bf16.mxu0 0
        %2149 = vmatpush1.bf16.msra.mxu0 0
        %2150 = vmatprep.subr.bf16.mxu0 0
        %2151 = vmatpush1.bf16.msra.mxu0 0
        %2152 = vmatprep.subr.bf16.mxu0 0
        %2153 = vmatpush1.bf16.msra.mxu0 0
        %2154 = vmatprep.subr.bf16.mxu0 0
        %2155 = vmatpush1.bf16.msra.mxu0 0
        %2156 = vmatprep.subr.bf16.mxu0 0
        %2157 = vmatpush1.bf16.msra.mxu0 0
        %2158 = vmatprep.mubr.bf16.mxu0 0
        %2159 = vmatmul.mubr.bf16.gmra.mrb[0].mxu0 %v2124
        %v2160 = vpop.f32.mrb[0].mxu0
        %v2161 = vadd.f32 0.0, %v2160
        %v2162 = vpop.f32.mrb[0].mxu0
        %v2163 = vpop.f32.mrb[0].mxu0
        %v2164 = vpop.f32.mrb[0].mxu0
        %2165 = vdwg.mxu0
        %v2166 = vld [vmem:[%s364] sm:$0x3]
        %vm2167 = vnez %v2166
        %v2168 = vsel %vm2167, 16843009, 0
        %v2169 = vunpack.c.0.s8 %v2168
        %vm2170 = vcmp.ne.s32.totalorder %v2169, 0
        %v2171 = vsel %vm2170, 1, 0
        %vm2172 = vcmp.eq.s32.totalorder %v2171, 1
        %v2173 = vsel %vm2172, -1e+09, %v2032
        %v2174 = vsel %vm2172, -1e+09, %v2075
        %v2175 = vsel %vm2172, -1e+09, %v2118
        %v2176 = vsel %vm2172, -1e+09, %v2161
        %vm2177 = vcmask 64512
        %v2178 = vsel %vm2177, %v2173, -inf
        %2179 = vmax.xlane.f32.xlu0 %v2178
        %v2180 = vpop.xlane.xlu0 %2179
        %v2181 = vsel %vm2177, %v2174, -inf
        %2182 = vmax.xlane.f32.xlu0 %v2181
        %v2183 = vpop.xlane.xlu0 %2182
        %v2184 = vsel %vm2177, %v2175, -inf
        %2185 = vmax.xlane.f32.xlu0 %v2184
        %v2186 = vpop.xlane.xlu0 %2185
        %v2187 = vsel %vm2177, %v2176, -inf
        %2188 = vmax.xlane.f32.xlu0 %v2187
        %v2189 = vpop.xlane.xlu0 %2188
        %v2190 = vsub.f32 %v2173, %v2180
        %v2191 = vsub.f32 %v2174, %v2183
        %v2192 = vsub.f32 %v2175, %v2186
        %v2193 = vsub.f32 %v2176, %v2189
        %v2194 = vmul.f32 %v2190, 1.442695
        %v2195 = vpow.pop %v2194
        %v2196 = vmul.f32 %v2191, 1.442695
        %v2197 = vpow.pop %v2196
        %v2198 = vmul.f32 %v2192, 1.442695
        %v2199 = vpow.pop %v2198
        %v2200 = vmul.f32 %v2193, 1.442695
        %v2201 = vpow.pop %v2200
        %v2202 = vsel %vm2177, %v2195, 0.0
        %2203 = vadd.xlane.f32.xlu0 %v2202
        %v2204 = vpop.xlane.xlu0 %2203
        %v2205 = vsel %vm2177, %v2197, 0.0
        %2206 = vadd.xlane.f32.xlu0 %v2205
        %v2207 = vpop.xlane.xlu0 %2206
        %v2208 = vsel %vm2177, %v2199, 0.0
        %2209 = vadd.xlane.f32.xlu0 %v2208
        %v2210 = vpop.xlane.xlu0 %2209
        %v2211 = vsel %vm2177, %v2201, 0.0
        %2212 = vadd.xlane.f32.xlu0 %v2211
        %v2213 = vpop.xlane.xlu0 %2212
        %v2214 = vrcp.pop %v2204
        %v2215 = vrcp.pop %v2207
        %v2216 = vrcp.pop %v2210
        %v2217 = vrcp.pop %v2213
        %v2218 = vmul.f32 %v2195, %v2214
        %v2219 = vmul.f32 %v2197, %v2215
        %v2220 = vmul.f32 %v2199, %v2216
        %v2221 = vmul.f32 %v2201, %v2217
        %v2222 = vpack.c.bf16 %v2218, %v2218
        %v2223 = vpack.c.bf16 %v2219, %v2219
        %v2224 = vpack.c.bf16 %v2220, %v2220
        %v2225 = vpack.c.bf16 %v2221, %v2221
        %vm2226 = vcmask 60416
        %2227 = vst.msk [vmem:[%s439] sm:$0xf] %vm2226, %v2222
        %2228 = vst.msk [vmem:[%s439 + $0x4] sm:$0xf] %vm2226, %v2223
        %2229 = vst.msk [vmem:[%s439 + $0x8] sm:$0xf] %vm2226, %v2224
        %2230 = vst.msk [vmem:[%s439 + $0xc] sm:$0xf] %vm2226, %v2225
        %2231 = vxpose.xlu0.c.b16.start [1/8] %v612, 128
        %2232 = vxpose.xlu0.c.b16.cont [2/8] 0, 128
        %2233 = vxpose.xlu0.c.b16.cont [3/8] 0, 128
        %2234 = vxpose.xlu0.c.b16.cont [4/8] 0, 128
        %2235 = vxpose.xlu0.c.b16.cont [5/8] 0, 128
        %2236 = vxpose.xlu0.c.b16.cont [6/8] 0, 128
        %2237 = vxpose.xlu0.c.b16.cont [7/8] 0, 128
        %2238 = vxpose.xlu0.c.b16.end [8/8] 0, 128
        %v2239 = vpop.trf.xlu0
        %v2240 = vpop.trf.xlu0
        %v2241 = vpop.trf.xlu0
        %v2242 = vpop.trf.xlu0
        %v2243 = vpop.trf.xlu0
        %v2244 = vpop.trf.xlu0
        %v2245 = vpop.trf.xlu0
        %v2246 = vpop.trf.xlu0
        %2247 = vxpose.xlu0.c.b16.start [1/8] %v646, 128
        %2248 = vxpose.xlu0.c.b16.cont [2/8] 0, 128
        %2249 = vxpose.xlu0.c.b16.cont [3/8] 0, 128
        %2250 = vxpose.xlu0.c.b16.cont [4/8] 0, 128
        %2251 = vxpose.xlu0.c.b16.cont [5/8] 0, 128
        %2252 = vxpose.xlu0.c.b16.cont [6/8] 0, 128
        %2253 = vxpose.xlu0.c.b16.cont [7/8] 0, 128
        %2254 = vxpose.xlu0.c.b16.end [8/8] 0, 128
        %v2255 = vpop.trf.xlu0
        %v2256 = vpop.trf.xlu0
        %v2257 = vpop.trf.xlu0
        %v2258 = vpop.trf.xlu0
        %v2259 = vpop.trf.xlu0
        %v2260 = vpop.trf.xlu0
        %v2261 = vpop.trf.xlu0
        %v2262 = vpop.trf.xlu0
        %2263 = vxpose.xlu0.c.b16.start [1/8] %v620, 128
        %2264 = vxpose.xlu0.c.b16.cont [2/8] 0, 128
        %2265 = vxpose.xlu0.c.b16.cont [3/8] 0, 128
        %2266 = vxpose.xlu0.c.b16.cont [4/8] 0, 128
        %2267 = vxpose.xlu0.c.b16.cont [5/8] 0, 128
        %2268 = vxpose.xlu0.c.b16.cont [6/8] 0, 128
        %2269 = vxpose.xlu0.c.b16.cont [7/8] 0, 128
        %2270 = vxpose.xlu0.c.b16.end [8/8] 0, 128
        %v2271 = vpop.trf.xlu0
        %v2272 = vpop.trf.xlu0
        %v2273 = vpop.trf.xlu0
        %v2274 = vpop.trf.xlu0
        %v2275 = vpop.trf.xlu0
        %v2276 = vpop.trf.xlu0
        %v2277 = vpop.trf.xlu0
        %v2278 = vpop.trf.xlu0
        %2279 = vxpose.xlu0.c.b16.start [1/8] %v654, 128
        %2280 = vxpose.xlu0.c.b16.cont [2/8] 0, 128
        %2281 = vxpose.xlu0.c.b16.cont [3/8] 0, 128
        %2282 = vxpose.xlu0.c.b16.cont [4/8] 0, 128
        %2283 = vxpose.xlu0.c.b16.cont [5/8] 0, 128
        %2284 = vxpose.xlu0.c.b16.cont [6/8] 0, 128
        %2285 = vxpose.xlu0.c.b16.cont [7/8] 0, 128
        %2286 = vxpose.xlu0.c.b16.end [8/8] 0, 128
        %v2287 = vpop.trf.xlu0
        %v2288 = vpop.trf.xlu0
        %v2289 = vpop.trf.xlu0
        %v2290 = vpop.trf.xlu0
        %v2291 = vpop.trf.xlu0
        %v2292 = vpop.trf.xlu0
        %v2293 = vpop.trf.xlu0
        %v2294 = vpop.trf.xlu0
        %2295 = vxpose.xlu0.c.b16.start [1/8] %v619, 128
        %2296 = vxpose.xlu0.c.b16.cont [2/8] 0, 128
        %2297 = vxpose.xlu0.c.b16.cont [3/8] 0, 128
        %2298 = vxpose.xlu0.c.b16.cont [4/8] 0, 128
        %2299 = vxpose.xlu0.c.b16.cont [5/8] 0, 128
        %2300 = vxpose.xlu0.c.b16.cont [6/8] 0, 128
        %2301 = vxpose.xlu0.c.b16.cont [7/8] 0, 128
        %2302 = vxpose.xlu0.c.b16.end [8/8] 0, 128
        %v2303 = vpop.trf.xlu0
        %v2304 = vpop.trf.xlu0
        %v2305 = vpop.trf.xlu0
        %v2306 = vpop.trf.xlu0
        %v2307 = vpop.trf.xlu0
        %v2308 = vpop.trf.xlu0
        %v2309 = vpop.trf.xlu0
        %v2310 = vpop.trf.xlu0
        %2311 = vxpose.xlu0.c.b16.start [1/8] %v653, 128
        %2312 = vxpose.xlu0.c.b16.cont [2/8] 0, 128
        %2313 = vxpose.xlu0.c.b16.cont [3/8] 0, 128
        %2314 = vxpose.xlu0.c.b16.cont [4/8] 0, 128
        %2315 = vxpose.xlu0.c.b16.cont [5/8] 0, 128
        %2316 = vxpose.xlu0.c.b16.cont [6/8] 0, 128
        %2317 = vxpose.xlu0.c.b16.cont [7/8] 0, 128
        %2318 = vxpose.xlu0.c.b16.end [8/8] 0, 128
        %v2319 = vpop.trf.xlu0
        %v2320 = vpop.trf.xlu0
        %v2321 = vpop.trf.xlu0
        %v2322 = vpop.trf.xlu0
        %v2323 = vpop.trf.xlu0
        %v2324 = vpop.trf.xlu0
        %v2325 = vpop.trf.xlu0
        %v2326 = vpop.trf.xlu0
        %2327 = vxpose.xlu0.c.b16.start [1/8] %v621, 128
        %2328 = vxpose.xlu0.c.b16.cont [2/8] 0, 128
        %2329 = vxpose.xlu0.c.b16.cont [3/8] 0, 128
        %2330 = vxpose.xlu0.c.b16.cont [4/8] 0, 128
        %2331 = vxpose.xlu0.c.b16.cont [5/8] 0, 128
        %2332 = vxpose.xlu0.c.b16.cont [6/8] 0, 128
        %2333 = vxpose.xlu0.c.b16.cont [7/8] 0, 128
        %2334 = vxpose.xlu0.c.b16.end [8/8] 0, 128
        %v2335 = vpop.trf.xlu0
        %v2336 = vpop.trf.xlu0
        %v2337 = vpop.trf.xlu0
        %v2338 = vpop.trf.xlu0
        %v2339 = vpop.trf.xlu0
        %v2340 = vpop.trf.xlu0
        %v2341 = vpop.trf.xlu0
        %v2342 = vpop.trf.xlu0
        %2343 = vxpose.xlu0.c.b16.start [1/8] %v655, 128
        %2344 = vxpose.xlu0.c.b16.cont [2/8] 0, 128
        %2345 = vxpose.xlu0.c.b16.cont [3/8] 0, 128
        %2346 = vxpose.xlu0.c.b16.cont [4/8] 0, 128
        %2347 = vxpose.xlu0.c.b16.cont [5/8] 0, 128
        %2348 = vxpose.xlu0.c.b16.cont [6/8] 0, 128
        %2349 = vxpose.xlu0.c.b16.cont [7/8] 0, 128
        %2350 = vxpose.xlu0.c.b16.end [8/8] 0, 128
        %v2351 = vpop.trf.xlu0
        %v2352 = vpop.trf.xlu0
        %v2353 = vpop.trf.xlu0
        %v2354 = vpop.trf.xlu0
        %v2355 = vpop.trf.xlu0
        %v2356 = vpop.trf.xlu0
        %v2357 = vpop.trf.xlu0
        %v2358 = vpop.trf.xlu0
        %v2361 = vpack.i.b16 %v2255, %v2239
        %v2363 = vshrl.u32 %v2239, 16
        %v2364 = vshrl.u32 %v2255, 16
        %v2365 = vpack.i.b16 %v2364, %v2363
        %v2369 = vpack.i.b16 %v2287, %v2271
        %v2371 = vshrl.u32 %v2271, 16
        %v2372 = vshrl.u32 %v2287, 16
        %v2373 = vpack.i.b16 %v2372, %v2371
        %v2377 = vpack.i.b16 %v2319, %v2303
        %v2379 = vshrl.u32 %v2303, 16
        %v2380 = vshrl.u32 %v2319, 16
        %v2381 = vpack.i.b16 %v2380, %v2379
        %v2385 = vpack.i.b16 %v2351, %v2335
        %v2387 = vshrl.u32 %v2335, 16
        %v2388 = vshrl.u32 %v2351, 16
        %v2389 = vpack.i.b16 %v2388, %v2387
        %v2393 = vpack.i.b16 %v2256, %v2240
        %v2395 = vshrl.u32 %v2240, 16
        %v2396 = vshrl.u32 %v2256, 16
        %v2397 = vpack.i.b16 %v2396, %v2395
        %v2401 = vpack.i.b16 %v2288, %v2272
        %v2403 = vshrl.u32 %v2272, 16
        %v2404 = vshrl.u32 %v2288, 16
        %v2405 = vpack.i.b16 %v2404, %v2403
        %v2409 = vpack.i.b16 %v2320, %v2304
        %v2411 = vshrl.u32 %v2304, 16
        %v2412 = vshrl.u32 %v2320, 16
        %v2413 = vpack.i.b16 %v2412, %v2411
        %v2417 = vpack.i.b16 %v2352, %v2336
        %v2419 = vshrl.u32 %v2336, 16
        %v2420 = vshrl.u32 %v2352, 16
        %v2421 = vpack.i.b16 %v2420, %v2419
        %v2423 = vcombine.low %v2361, %v2377
        %v2424 = vcombine.high %v2361, %v2377
        %v2426 = vunpack.c.l.s4 1983009808
        %v2427 = vunpack.c.0.s8 %v2426
        %v2428 = vlaneseq
        %v2429 = vshrl.u32 %v2428, 7
        %v2430 = vsub.s32 %v2427, %v2429
        %v2431 = vrot.slane %v2423, %v2430
        %v2433 = vunpack.c.l.s4 1983009808
        %v2434 = vunpack.c.0.s8 %v2433
        %v2435 = vlaneseq
        %v2436 = vshrl.u32 %v2435, 7
        %v2437 = vsub.s32 %v2434, %v2436
        %v2438 = vrot.slane %v2424, %v2437
        %v2439 = vcombine.low %v2369, %v2385
        %v2440 = vcombine.high %v2369, %v2385
        %v2442 = vunpack.c.l.s4 1983009808
        %v2443 = vunpack.c.0.s8 %v2442
        %v2444 = vlaneseq
        %v2445 = vshrl.u32 %v2444, 7
        %v2446 = vsub.s32 %v2443, %v2445
        %v2447 = vrot.slane %v2439, %v2446
        %v2449 = vunpack.c.l.s4 1983009808
        %v2450 = vunpack.c.0.s8 %v2449
        %v2451 = vlaneseq
        %v2452 = vshrl.u32 %v2451, 7
        %v2453 = vsub.s32 %v2450, %v2452
        %v2454 = vrot.slane %v2440, %v2453
        %v2455 = vcombine.low %v2431, %v2447
        %v2456 = vcombine.high %v2431, %v2447
        %v2458 = vunpack.c.l.s4 1934713408
        %v2459 = vunpack.c.0.s8 %v2458
        %v2460 = vlaneseq
        %v2461 = vshrl.u32 %v2460, 7
        %v2462 = vsub.s32 %v2459, %v2461
        %v2463 = vrot.slane %v2455, %v2462
        %v2465 = vunpack.c.l.s4 1934713408
        %v2466 = vunpack.c.0.s8 %v2465
        %v2467 = vlaneseq
        %v2468 = vshrl.u32 %v2467, 7
        %v2469 = vsub.s32 %v2466, %v2468
        %v2470 = vrot.slane %v2456, %v2469
        %v2471 = vcombine.low %v2438, %v2454
        %v2472 = vcombine.high %v2438, %v2454
        %v2474 = vunpack.c.l.s4 1934713408
        %v2475 = vunpack.c.0.s8 %v2474
        %v2476 = vlaneseq
        %v2477 = vshrl.u32 %v2476, 7
        %v2478 = vsub.s32 %v2475, %v2477
        %v2479 = vrot.slane %v2471, %v2478
        %v2481 = vunpack.c.l.s4 1934713408
        %v2482 = vunpack.c.0.s8 %v2481
        %v2483 = vlaneseq
        %v2484 = vshrl.u32 %v2483, 7
        %v2485 = vsub.s32 %v2482, %v2484
        %v2486 = vrot.slane %v2472, %v2485
        %v2487 = vcombine.high %v2463, 0
        %v2488 = vcombine.high %v2470, 0
        %v2489 = vcombine.high %v2479, 0
        %v2490 = vcombine.high %v2486, 0
        %v2491 = vcombine.low %v2365, %v2381
        %v2492 = vcombine.high %v2365, %v2381
        %v2494 = vunpack.c.l.s4 1983009808
        %v2495 = vunpack.c.0.s8 %v2494
        %v2496 = vlaneseq
        %v2497 = vshrl.u32 %v2496, 7
        %v2498 = vsub.s32 %v2495, %v2497
        %v2499 = vrot.slane %v2491, %v2498
        %v2501 = vunpack.c.l.s4 1983009808
        %v2502 = vunpack.c.0.s8 %v2501
        %v2503 = vlaneseq
        %v2504 = vshrl.u32 %v2503, 7
        %v2505 = vsub.s32 %v2502, %v2504
        %v2506 = vrot.slane %v2492, %v2505
        %v2507 = vcombine.low %v2373, %v2389
        %v2508 = vcombine.high %v2373, %v2389
        %v2510 = vunpack.c.l.s4 1983009808
        %v2511 = vunpack.c.0.s8 %v2510
        %v2512 = vlaneseq
        %v2513 = vshrl.u32 %v2512, 7
        %v2514 = vsub.s32 %v2511, %v2513
        %v2515 = vrot.slane %v2507, %v2514
        %v2517 = vunpack.c.l.s4 1983009808
        %v2518 = vunpack.c.0.s8 %v2517
        %v2519 = vlaneseq
        %v2520 = vshrl.u32 %v2519, 7
        %v2521 = vsub.s32 %v2518, %v2520
        %v2522 = vrot.slane %v2508, %v2521
        %v2523 = vcombine.low %v2499, %v2515
        %v2524 = vcombine.high %v2499, %v2515
        %v2526 = vunpack.c.l.s4 1934713408
        %v2527 = vunpack.c.0.s8 %v2526
        %v2528 = vlaneseq
        %v2529 = vshrl.u32 %v2528, 7
        %v2530 = vsub.s32 %v2527, %v2529
        %v2531 = vrot.slane %v2523, %v2530
        %v2533 = vunpack.c.l.s4 1934713408
        %v2534 = vunpack.c.0.s8 %v2533
        %v2535 = vlaneseq
        %v2536 = vshrl.u32 %v2535, 7
        %v2537 = vsub.s32 %v2534, %v2536
        %v2538 = vrot.slane %v2524, %v2537
        %v2539 = vcombine.low %v2506, %v2522
        %v2540 = vcombine.high %v2506, %v2522
        %v2542 = vunpack.c.l.s4 1934713408
        %v2543 = vunpack.c.0.s8 %v2542
        %v2544 = vlaneseq
        %v2545 = vshrl.u32 %v2544, 7
        %v2546 = vsub.s32 %v2543, %v2545
        %v2547 = vrot.slane %v2539, %v2546
        %v2549 = vunpack.c.l.s4 1934713408
        %v2550 = vunpack.c.0.s8 %v2549
        %v2551 = vlaneseq
        %v2552 = vshrl.u32 %v2551, 7
        %v2553 = vsub.s32 %v2550, %v2552
        %v2554 = vrot.slane %v2540, %v2553
        %v2555 = vcombine.high %v2531, 0
        %v2556 = vcombine.high %v2538, 0
        %v2557 = vcombine.high %v2547, 0
        %v2558 = vcombine.high %v2554, 0
        %v2559 = vcombine.low %v2393, %v2409
        %v2560 = vcombine.high %v2393, %v2409
        %v2562 = vunpack.c.l.s4 1983009808
        %v2563 = vunpack.c.0.s8 %v2562
        %v2564 = vlaneseq
        %v2565 = vshrl.u32 %v2564, 7
        %v2566 = vsub.s32 %v2563, %v2565
        %v2567 = vrot.slane %v2559, %v2566
        %v2569 = vunpack.c.l.s4 1983009808
        %v2570 = vunpack.c.0.s8 %v2569
        %v2571 = vlaneseq
        %v2572 = vshrl.u32 %v2571, 7
        %v2573 = vsub.s32 %v2570, %v2572
        %v2574 = vrot.slane %v2560, %v2573
        %v2575 = vcombine.low %v2401, %v2417
        %v2576 = vcombine.high %v2401, %v2417
        %v2578 = vunpack.c.l.s4 1983009808
        %v2579 = vunpack.c.0.s8 %v2578
        %v2580 = vlaneseq
        %v2581 = vshrl.u32 %v2580, 7
        %v2582 = vsub.s32 %v2579, %v2581
        %v2583 = vrot.slane %v2575, %v2582
        %v2585 = vunpack.c.l.s4 1983009808
        %v2586 = vunpack.c.0.s8 %v2585
        %v2587 = vlaneseq
        %v2588 = vshrl.u32 %v2587, 7
        %v2589 = vsub.s32 %v2586, %v2588
        %v2590 = vrot.slane %v2576, %v2589
        %v2591 = vcombine.low %v2567, %v2583
        %v2592 = vcombine.high %v2567, %v2583
        %v2594 = vunpack.c.l.s4 1934713408
        %v2595 = vunpack.c.0.s8 %v2594
        %v2596 = vlaneseq
        %v2597 = vshrl.u32 %v2596, 7
        %v2598 = vsub.s32 %v2595, %v2597
        %v2599 = vrot.slane %v2591, %v2598
        %v2601 = vunpack.c.l.s4 1934713408
        %v2602 = vunpack.c.0.s8 %v2601
        %v2603 = vlaneseq
        %v2604 = vshrl.u32 %v2603, 7
        %v2605 = vsub.s32 %v2602, %v2604
        %v2606 = vrot.slane %v2592, %v2605
        %v2607 = vcombine.low %v2574, %v2590
        %v2608 = vcombine.high %v2574, %v2590
        %v2610 = vunpack.c.l.s4 1934713408
        %v2611 = vunpack.c.0.s8 %v2610
        %v2612 = vlaneseq
        %v2613 = vshrl.u32 %v2612, 7
        %v2614 = vsub.s32 %v2611, %v2613
        %v2615 = vrot.slane %v2607, %v2614
        %v2617 = vunpack.c.l.s4 1934713408
        %v2618 = vunpack.c.0.s8 %v2617
        %v2619 = vlaneseq
        %v2620 = vshrl.u32 %v2619, 7
        %v2621 = vsub.s32 %v2618, %v2620
        %v2622 = vrot.slane %v2608, %v2621
        %v2623 = vcombine.high %v2599, 0
        %v2624 = vcombine.high %v2606, 0
        %v2625 = vcombine.high %v2615, 0
        %v2626 = vcombine.high %v2622, 0
        %v2627 = vcombine.low %v2397, %v2413
        %v2628 = vcombine.high %v2397, %v2413
        %v2630 = vunpack.c.l.s4 1983009808
        %v2631 = vunpack.c.0.s8 %v2630
        %v2632 = vlaneseq
        %v2633 = vshrl.u32 %v2632, 7
        %v2634 = vsub.s32 %v2631, %v2633
        %v2635 = vrot.slane %v2627, %v2634
        %v2637 = vunpack.c.l.s4 1983009808
        %v2638 = vunpack.c.0.s8 %v2637
        %v2639 = vlaneseq
        %v2640 = vshrl.u32 %v2639, 7
        %v2641 = vsub.s32 %v2638, %v2640
        %v2642 = vrot.slane %v2628, %v2641
        %v2643 = vcombine.low %v2405, %v2421
        %v2644 = vcombine.high %v2405, %v2421
        %v2646 = vunpack.c.l.s4 1983009808
        %v2647 = vunpack.c.0.s8 %v2646
        %v2648 = vlaneseq
        %v2649 = vshrl.u32 %v2648, 7
        %v2650 = vsub.s32 %v2647, %v2649
        %v2651 = vrot.slane %v2643, %v2650
        %v2653 = vunpack.c.l.s4 1983009808
        %v2654 = vunpack.c.0.s8 %v2653
        %v2655 = vlaneseq
        %v2656 = vshrl.u32 %v2655, 7
        %v2657 = vsub.s32 %v2654, %v2656
        %v2658 = vrot.slane %v2644, %v2657
        %v2659 = vcombine.low %v2635, %v2651
        %v2660 = vcombine.high %v2635, %v2651
        %v2662 = vunpack.c.l.s4 1934713408
        %v2663 = vunpack.c.0.s8 %v2662
        %v2664 = vlaneseq
        %v2665 = vshrl.u32 %v2664, 7
        %v2666 = vsub.s32 %v2663, %v2665
        %v2667 = vrot.slane %v2659, %v2666
        %v2669 = vunpack.c.l.s4 1934713408
        %v2670 = vunpack.c.0.s8 %v2669
        %v2671 = vlaneseq
        %v2672 = vshrl.u32 %v2671, 7
        %v2673 = vsub.s32 %v2670, %v2672
        %v2674 = vrot.slane %v2660, %v2673
        %v2675 = vcombine.low %v2642, %v2658
        %v2676 = vcombine.high %v2642, %v2658
        %v2678 = vunpack.c.l.s4 1934713408
        %v2679 = vunpack.c.0.s8 %v2678
        %v2680 = vlaneseq
        %v2681 = vshrl.u32 %v2680, 7
        %v2682 = vsub.s32 %v2679, %v2681
        %v2683 = vrot.slane %v2675, %v2682
        %v2685 = vunpack.c.l.s4 1934713408
        %v2686 = vunpack.c.0.s8 %v2685
        %v2687 = vlaneseq
        %v2688 = vshrl.u32 %v2687, 7
        %v2689 = vsub.s32 %v2686, %v2688
        %v2690 = vrot.slane %v2676, %v2689
        %v2691 = vcombine.high %v2667, 0
        %v2692 = vcombine.high %v2674, 0
        %v2693 = vcombine.high %v2683, 0
        %v2694 = vcombine.high %v2690, 0
        %2695 = vxpose.xlu0.c.b16.start [1/8] %v2463, 128
        %2696 = vxpose.xlu0.c.b16.cont [2/8] 0, 128
        %2697 = vxpose.xlu0.c.b16.cont [3/8] 0, 128
        %2698 = vxpose.xlu0.c.b16.cont [4/8] 0, 128
        %2699 = vxpose.xlu0.c.b16.cont [5/8] 0, 128
        %2700 = vxpose.xlu0.c.b16.cont [6/8] 0, 128
        %2701 = vxpose.xlu0.c.b16.cont [7/8] 0, 128
        %2702 = vxpose.xlu0.c.b16.end [8/8] 0, 128
        %v2703 = vpop.trf.xlu0
        %v2704 = vpop.trf.xlu0
        %v2705 = vpop.trf.xlu0
        %v2706 = vpop.trf.xlu0
        %v2707 = vpop.trf.xlu0
        %v2708 = vpop.trf.xlu0
        %v2709 = vpop.trf.xlu0
        %v2710 = vpop.trf.xlu0
        %2711 = vxpose.xlu0.c.b16.start [1/8] %v2531, 128
        %2712 = vxpose.xlu0.c.b16.cont [2/8] 0, 128
        %2713 = vxpose.xlu0.c.b16.cont [3/8] 0, 128
        %2714 = vxpose.xlu0.c.b16.cont [4/8] 0, 128
        %2715 = vxpose.xlu0.c.b16.cont [5/8] 0, 128
        %2716 = vxpose.xlu0.c.b16.cont [6/8] 0, 128
        %2717 = vxpose.xlu0.c.b16.cont [7/8] 0, 128
        %2718 = vxpose.xlu0.c.b16.end [8/8] 0, 128
        %v2719 = vpop.trf.xlu0
        %v2720 = vpop.trf.xlu0
        %v2721 = vpop.trf.xlu0
        %v2722 = vpop.trf.xlu0
        %v2723 = vpop.trf.xlu0
        %v2724 = vpop.trf.xlu0
        %v2725 = vpop.trf.xlu0
        %v2726 = vpop.trf.xlu0
        %2727 = vxpose.xlu0.c.b16.start [1/8] %v2487, 128
        %2728 = vxpose.xlu0.c.b16.cont [2/8] 0, 128
        %2729 = vxpose.xlu0.c.b16.cont [3/8] 0, 128
        %2730 = vxpose.xlu0.c.b16.cont [4/8] 0, 128
        %2731 = vxpose.xlu0.c.b16.cont [5/8] 0, 128
        %2732 = vxpose.xlu0.c.b16.cont [6/8] 0, 128
        %2733 = vxpose.xlu0.c.b16.cont [7/8] 0, 128
        %2734 = vxpose.xlu0.c.b16.end [8/8] 0, 128
        %v2735 = vpop.trf.xlu0
        %v2736 = vpop.trf.xlu0
        %v2737 = vpop.trf.xlu0
        %v2738 = vpop.trf.xlu0
        %v2739 = vpop.trf.xlu0
        %v2740 = vpop.trf.xlu0
        %v2741 = vpop.trf.xlu0
        %v2742 = vpop.trf.xlu0
        %2743 = vxpose.xlu0.c.b16.start [1/8] %v2555, 128
        %2744 = vxpose.xlu0.c.b16.cont [2/8] 0, 128
        %2745 = vxpose.xlu0.c.b16.cont [3/8] 0, 128
        %2746 = vxpose.xlu0.c.b16.cont [4/8] 0, 128
        %2747 = vxpose.xlu0.c.b16.cont [5/8] 0, 128
        %2748 = vxpose.xlu0.c.b16.cont [6/8] 0, 128
        %2749 = vxpose.xlu0.c.b16.cont [7/8] 0, 128
        %2750 = vxpose.xlu0.c.b16.end [8/8] 0, 128
        %v2751 = vpop.trf.xlu0
        %v2752 = vpop.trf.xlu0
        %v2753 = vpop.trf.xlu0
        %v2754 = vpop.trf.xlu0
        %v2755 = vpop.trf.xlu0
        %v2756 = vpop.trf.xlu0
        %v2757 = vpop.trf.xlu0
        %v2758 = vpop.trf.xlu0
        %2759 = vxpose.xlu0.c.b16.start [1/8] %v2470, 128
        %2760 = vxpose.xlu0.c.b16.cont [2/8] 0, 128
        %2761 = vxpose.xlu0.c.b16.cont [3/8] 0, 128
        %2762 = vxpose.xlu0.c.b16.cont [4/8] 0, 128
        %2763 = vxpose.xlu0.c.b16.cont [5/8] 0, 128
        %2764 = vxpose.xlu0.c.b16.cont [6/8] 0, 128
        %2765 = vxpose.xlu0.c.b16.cont [7/8] 0, 128
        %2766 = vxpose.xlu0.c.b16.end [8/8] 0, 128
        %v2767 = vpop.trf.xlu0
        %v2768 = vpop.trf.xlu0
        %v2769 = vpop.trf.xlu0
        %v2770 = vpop.trf.xlu0
        %v2771 = vpop.trf.xlu0
        %v2772 = vpop.trf.xlu0
        %v2773 = vpop.trf.xlu0
        %v2774 = vpop.trf.xlu0
        %2775 = vxpose.xlu0.c.b16.start [1/8] %v2538, 128
        %2776 = vxpose.xlu0.c.b16.cont [2/8] 0, 128
        %2777 = vxpose.xlu0.c.b16.cont [3/8] 0, 128
        %2778 = vxpose.xlu0.c.b16.cont [4/8] 0, 128
        %2779 = vxpose.xlu0.c.b16.cont [5/8] 0, 128
        %2780 = vxpose.xlu0.c.b16.cont [6/8] 0, 128
        %2781 = vxpose.xlu0.c.b16.cont [7/8] 0, 128
        %2782 = vxpose.xlu0.c.b16.end [8/8] 0, 128
        %v2783 = vpop.trf.xlu0
        %v2784 = vpop.trf.xlu0
        %v2785 = vpop.trf.xlu0
        %v2786 = vpop.trf.xlu0
        %v2787 = vpop.trf.xlu0
        %v2788 = vpop.trf.xlu0
        %v2789 = vpop.trf.xlu0
        %v2790 = vpop.trf.xlu0
        %2791 = vxpose.xlu0.c.b16.start [1/8] %v2488, 128
        %2792 = vxpose.xlu0.c.b16.cont [2/8] 0, 128
        %2793 = vxpose.xlu0.c.b16.cont [3/8] 0, 128
        %2794 = vxpose.xlu0.c.b16.cont [4/8] 0, 128
        %2795 = vxpose.xlu0.c.b16.cont [5/8] 0, 128
        %2796 = vxpose.xlu0.c.b16.cont [6/8] 0, 128
        %2797 = vxpose.xlu0.c.b16.cont [7/8] 0, 128
        %2798 = vxpose.xlu0.c.b16.end [8/8] 0, 128
        %v2799 = vpop.trf.xlu0
        %v2800 = vpop.trf.xlu0
        %v2801 = vpop.trf.xlu0
        %v2802 = vpop.trf.xlu0
        %v2803 = vpop.trf.xlu0
        %v2804 = vpop.trf.xlu0
        %v2805 = vpop.trf.xlu0
        %v2806 = vpop.trf.xlu0
        %2807 = vxpose.xlu0.c.b16.start [1/8] %v2556, 128
        %2808 = vxpose.xlu0.c.b16.cont [2/8] 0, 128
        %2809 = vxpose.xlu0.c.b16.cont [3/8] 0, 128
        %2810 = vxpose.xlu0.c.b16.cont [4/8] 0, 128
        %2811 = vxpose.xlu0.c.b16.cont [5/8] 0, 128
        %2812 = vxpose.xlu0.c.b16.cont [6/8] 0, 128
        %2813 = vxpose.xlu0.c.b16.cont [7/8] 0, 128
        %2814 = vxpose.xlu0.c.b16.end [8/8] 0, 128
        %v2815 = vpop.trf.xlu0
        %v2816 = vpop.trf.xlu0
        %v2817 = vpop.trf.xlu0
        %v2818 = vpop.trf.xlu0
        %v2819 = vpop.trf.xlu0
        %v2820 = vpop.trf.xlu0
        %v2821 = vpop.trf.xlu0
        %v2822 = vpop.trf.xlu0
        %2823 = vxpose.xlu0.c.b16.start [1/8] %v2479, 128
        %2824 = vxpose.xlu0.c.b16.cont [2/8] 0, 128
        %2825 = vxpose.xlu0.c.b16.cont [3/8] 0, 128
        %2826 = vxpose.xlu0.c.b16.cont [4/8] 0, 128
        %2827 = vxpose.xlu0.c.b16.cont [5/8] 0, 128
        %2828 = vxpose.xlu0.c.b16.cont [6/8] 0, 128
        %2829 = vxpose.xlu0.c.b16.cont [7/8] 0, 128
        %2830 = vxpose.xlu0.c.b16.end [8/8] 0, 128
        %v2831 = vpop.trf.xlu0
        %v2832 = vpop.trf.xlu0
        %v2833 = vpop.trf.xlu0
        %v2834 = vpop.trf.xlu0
        %v2835 = vpop.trf.xlu0
        %v2836 = vpop.trf.xlu0
        %v2837 = vpop.trf.xlu0
        %v2838 = vpop.trf.xlu0
        %2839 = vxpose.xlu0.c.b16.start [1/8] %v2547, 128
        %2840 = vxpose.xlu0.c.b16.cont [2/8] 0, 128
        %2841 = vxpose.xlu0.c.b16.cont [3/8] 0, 128
        %2842 = vxpose.xlu0.c.b16.cont [4/8] 0, 128
        %2843 = vxpose.xlu0.c.b16.cont [5/8] 0, 128
        %2844 = vxpose.xlu0.c.b16.cont [6/8] 0, 128
        %2845 = vxpose.xlu0.c.b16.cont [7/8] 0, 128
        %2846 = vxpose.xlu0.c.b16.end [8/8] 0, 128
        %v2847 = vpop.trf.xlu0
        %v2848 = vpop.trf.xlu0
        %v2849 = vpop.trf.xlu0
        %v2850 = vpop.trf.xlu0
        %v2851 = vpop.trf.xlu0
        %v2852 = vpop.trf.xlu0
        %v2853 = vpop.trf.xlu0
        %v2854 = vpop.trf.xlu0
        %2855 = vxpose.xlu0.c.b16.start [1/8] %v2489, 128
        %2856 = vxpose.xlu0.c.b16.cont [2/8] 0, 128
        %2857 = vxpose.xlu0.c.b16.cont [3/8] 0, 128
        %2858 = vxpose.xlu0.c.b16.cont [4/8] 0, 128
        %2859 = vxpose.xlu0.c.b16.cont [5/8] 0, 128
        %2860 = vxpose.xlu0.c.b16.cont [6/8] 0, 128
        %2861 = vxpose.xlu0.c.b16.cont [7/8] 0, 128
        %2862 = vxpose.xlu0.c.b16.end [8/8] 0, 128
        %v2863 = vpop.trf.xlu0
        %v2864 = vpop.trf.xlu0
        %v2865 = vpop.trf.xlu0
        %v2866 = vpop.trf.xlu0
        %v2867 = vpop.trf.xlu0
        %v2868 = vpop.trf.xlu0
        %v2869 = vpop.trf.xlu0
        %v2870 = vpop.trf.xlu0
        %2871 = vxpose.xlu0.c.b16.start [1/8] %v2557, 128
        %2872 = vxpose.xlu0.c.b16.cont [2/8] 0, 128
        %2873 = vxpose.xlu0.c.b16.cont [3/8] 0, 128
        %2874 = vxpose.xlu0.c.b16.cont [4/8] 0, 128
        %2875 = vxpose.xlu0.c.b16.cont [5/8] 0, 128
        %2876 = vxpose.xlu0.c.b16.cont [6/8] 0, 128
        %2877 = vxpose.xlu0.c.b16.cont [7/8] 0, 128
        %2878 = vxpose.xlu0.c.b16.end [8/8] 0, 128
        %v2879 = vpop.trf.xlu0
        %v2880 = vpop.trf.xlu0
        %v2881 = vpop.trf.xlu0
        %v2882 = vpop.trf.xlu0
        %v2883 = vpop.trf.xlu0
        %v2884 = vpop.trf.xlu0
        %v2885 = vpop.trf.xlu0
        %v2886 = vpop.trf.xlu0
        %2887 = vxpose.xlu0.c.b16.start [1/8] %v2486, 128
        %2888 = vxpose.xlu0.c.b16.cont [2/8] 0, 128
        %2889 = vxpose.xlu0.c.b16.cont [3/8] 0, 128
        %2890 = vxpose.xlu0.c.b16.cont [4/8] 0, 128
        %2891 = vxpose.xlu0.c.b16.cont [5/8] 0, 128
        %2892 = vxpose.xlu0.c.b16.cont [6/8] 0, 128
        %2893 = vxpose.xlu0.c.b16.cont [7/8] 0, 128
        %2894 = vxpose.xlu0.c.b16.end [8/8] 0, 128
        %v2895 = vpop.trf.xlu0
        %v2896 = vpop.trf.xlu0
        %v2897 = vpop.trf.xlu0
        %v2898 = vpop.trf.xlu0
        %v2899 = vpop.trf.xlu0
        %v2900 = vpop.trf.xlu0
        %v2901 = vpop.trf.xlu0
        %v2902 = vpop.trf.xlu0
        %2903 = vxpose.xlu0.c.b16.start [1/8] %v2554, 128
        %2904 = vxpose.xlu0.c.b16.cont [2/8] 0, 128
        %2905 = vxpose.xlu0.c.b16.cont [3/8] 0, 128
        %2906 = vxpose.xlu0.c.b16.cont [4/8] 0, 128
        %2907 = vxpose.xlu0.c.b16.cont [5/8] 0, 128
        %2908 = vxpose.xlu0.c.b16.cont [6/8] 0, 128
        %2909 = vxpose.xlu0.c.b16.cont [7/8] 0, 128
        %2910 = vxpose.xlu0.c.b16.end [8/8] 0, 128
        %v2911 = vpop.trf.xlu0
        %v2912 = vpop.trf.xlu0
        %v2913 = vpop.trf.xlu0
        %v2914 = vpop.trf.xlu0
        %v2915 = vpop.trf.xlu0
        %v2916 = vpop.trf.xlu0
        %v2917 = vpop.trf.xlu0
        %v2918 = vpop.trf.xlu0
        %2919 = vxpose.xlu0.c.b16.start [1/8] %v2490, 128
        %2920 = vxpose.xlu0.c.b16.cont [2/8] 0, 128
        %2921 = vxpose.xlu0.c.b16.cont [3/8] 0, 128
        %2922 = vxpose.xlu0.c.b16.cont [4/8] 0, 128
        %2923 = vxpose.xlu0.c.b16.cont [5/8] 0, 128
        %2924 = vxpose.xlu0.c.b16.cont [6/8] 0, 128
        %2925 = vxpose.xlu0.c.b16.cont [7/8] 0, 128
        %2926 = vxpose.xlu0.c.b16.end [8/8] 0, 128
        %v2927 = vpop.trf.xlu0
        %v2928 = vpop.trf.xlu0
        %v2929 = vpop.trf.xlu0
        %v2930 = vpop.trf.xlu0
        %v2931 = vpop.trf.xlu0
        %v2932 = vpop.trf.xlu0
        %v2933 = vpop.trf.xlu0
        %v2934 = vpop.trf.xlu0
        %2935 = vxpose.xlu0.c.b16.start [1/8] %v2558, 128
        %2936 = vxpose.xlu0.c.b16.cont [2/8] 0, 128
        %2937 = vxpose.xlu0.c.b16.cont [3/8] 0, 128
        %2938 = vxpose.xlu0.c.b16.cont [4/8] 0, 128
        %2939 = vxpose.xlu0.c.b16.cont [5/8] 0, 128
        %2940 = vxpose.xlu0.c.b16.cont [6/8] 0, 128
        %2941 = vxpose.xlu0.c.b16.cont [7/8] 0, 128
        %2942 = vxpose.xlu0.c.b16.end [8/8] 0, 128
        %v2943 = vpop.trf.xlu0
        %v2944 = vpop.trf.xlu0
        %v2945 = vpop.trf.xlu0
        %v2946 = vpop.trf.xlu0
        %v2947 = vpop.trf.xlu0
        %v2948 = vpop.trf.xlu0
        %v2949 = vpop.trf.xlu0
        %v2950 = vpop.trf.xlu0
        %2951 = vxpose.xlu0.c.b16.start [1/8] %v2599, 128
        %2952 = vxpose.xlu0.c.b16.cont [2/8] 0, 128
        %2953 = vxpose.xlu0.c.b16.cont [3/8] 0, 128
        %2954 = vxpose.xlu0.c.b16.cont [4/8] 0, 128
        %2955 = vxpose.xlu0.c.b16.cont [5/8] 0, 128
        %2956 = vxpose.xlu0.c.b16.cont [6/8] 0, 128
        %2957 = vxpose.xlu0.c.b16.cont [7/8] 0, 128
        %2958 = vxpose.xlu0.c.b16.end [8/8] 0, 128
        %v2959 = vpop.trf.xlu0
        %v2960 = vpop.trf.xlu0
        %v2961 = vpop.trf.xlu0
        %v2962 = vpop.trf.xlu0
        %v2963 = vpop.trf.xlu0
        %v2964 = vpop.trf.xlu0
        %v2965 = vpop.trf.xlu0
        %v2966 = vpop.trf.xlu0
        %2967 = vxpose.xlu0.c.b16.start [1/8] %v2667, 128
        %2968 = vxpose.xlu0.c.b16.cont [2/8] 0, 128
        %2969 = vxpose.xlu0.c.b16.cont [3/8] 0, 128
        %2970 = vxpose.xlu0.c.b16.cont [4/8] 0, 128
        %2971 = vxpose.xlu0.c.b16.cont [5/8] 0, 128
        %2972 = vxpose.xlu0.c.b16.cont [6/8] 0, 128
        %2973 = vxpose.xlu0.c.b16.cont [7/8] 0, 128
        %2974 = vxpose.xlu0.c.b16.end [8/8] 0, 128
        %v2975 = vpop.trf.xlu0
        %v2976 = vpop.trf.xlu0
        %v2977 = vpop.trf.xlu0
        %v2978 = vpop.trf.xlu0
        %v2979 = vpop.trf.xlu0
        %v2980 = vpop.trf.xlu0
        %v2981 = vpop.trf.xlu0
        %v2982 = vpop.trf.xlu0
        %2983 = vxpose.xlu0.c.b16.start [1/8] %v2623, 128
        %2984 = vxpose.xlu0.c.b16.cont [2/8] 0, 128
        %2985 = vxpose.xlu0.c.b16.cont [3/8] 0, 128
        %2986 = vxpose.xlu0.c.b16.cont [4/8] 0, 128
        %2987 = vxpose.xlu0.c.b16.cont [5/8] 0, 128
        %2988 = vxpose.xlu0.c.b16.cont [6/8] 0, 128
        %2989 = vxpose.xlu0.c.b16.cont [7/8] 0, 128
        %2990 = vxpose.xlu0.c.b16.end [8/8] 0, 128
        %v2991 = vpop.trf.xlu0
        %v2992 = vpop.trf.xlu0
        %v2993 = vpop.trf.xlu0
        %v2994 = vpop.trf.xlu0
        %v2995 = vpop.trf.xlu0
        %v2996 = vpop.trf.xlu0
        %v2997 = vpop.trf.xlu0
        %v2998 = vpop.trf.xlu0
        %2999 = vxpose.xlu0.c.b16.start [1/8] %v2691, 128
        %3000 = vxpose.xlu0.c.b16.cont [2/8] 0, 128
        %3001 = vxpose.xlu0.c.b16.cont [3/8] 0, 128
        %3002 = vxpose.xlu0.c.b16.cont [4/8] 0, 128
        %3003 = vxpose.xlu0.c.b16.cont [5/8] 0, 128
        %3004 = vxpose.xlu0.c.b16.cont [6/8] 0, 128
        %3005 = vxpose.xlu0.c.b16.cont [7/8] 0, 128
        %3006 = vxpose.xlu0.c.b16.end [8/8] 0, 128
        %v3007 = vpop.trf.xlu0
        %v3008 = vpop.trf.xlu0
        %v3009 = vpop.trf.xlu0
        %v3010 = vpop.trf.xlu0
        %v3011 = vpop.trf.xlu0
        %v3012 = vpop.trf.xlu0
        %v3013 = vpop.trf.xlu0
        %v3014 = vpop.trf.xlu0
        %3015 = vxpose.xlu0.c.b16.start [1/8] %v2606, 128
        %3016 = vxpose.xlu0.c.b16.cont [2/8] 0, 128
        %3017 = vxpose.xlu0.c.b16.cont [3/8] 0, 128
        %3018 = vxpose.xlu0.c.b16.cont [4/8] 0, 128
        %3019 = vxpose.xlu0.c.b16.cont [5/8] 0, 128
        %3020 = vxpose.xlu0.c.b16.cont [6/8] 0, 128
        %3021 = vxpose.xlu0.c.b16.cont [7/8] 0, 128
        %3022 = vxpose.xlu0.c.b16.end [8/8] 0, 128
        %v3023 = vpop.trf.xlu0
        %v3024 = vpop.trf.xlu0
        %v3025 = vpop.trf.xlu0
        %v3026 = vpop.trf.xlu0
        %v3027 = vpop.trf.xlu0
        %v3028 = vpop.trf.xlu0
        %v3029 = vpop.trf.xlu0
        %v3030 = vpop.trf.xlu0
        %3031 = vxpose.xlu0.c.b16.start [1/8] %v2674, 128
        %3032 = vxpose.xlu0.c.b16.cont [2/8] 0, 128
        %3033 = vxpose.xlu0.c.b16.cont [3/8] 0, 128
        %3034 = vxpose.xlu0.c.b16.cont [4/8] 0, 128
        %3035 = vxpose.xlu0.c.b16.cont [5/8] 0, 128
        %3036 = vxpose.xlu0.c.b16.cont [6/8] 0, 128
        %3037 = vxpose.xlu0.c.b16.cont [7/8] 0, 128
        %3038 = vxpose.xlu0.c.b16.end [8/8] 0, 128
        %v3039 = vpop.trf.xlu0
        %v3040 = vpop.trf.xlu0
        %v3041 = vpop.trf.xlu0
        %v3042 = vpop.trf.xlu0
        %v3043 = vpop.trf.xlu0
        %v3044 = vpop.trf.xlu0
        %v3045 = vpop.trf.xlu0
        %v3046 = vpop.trf.xlu0
        %3047 = vxpose.xlu0.c.b16.start [1/8] %v2624, 128
        %3048 = vxpose.xlu0.c.b16.cont [2/8] 0, 128
        %3049 = vxpose.xlu0.c.b16.cont [3/8] 0, 128
        %3050 = vxpose.xlu0.c.b16.cont [4/8] 0, 128
        %3051 = vxpose.xlu0.c.b16.cont [5/8] 0, 128
        %3052 = vxpose.xlu0.c.b16.cont [6/8] 0, 128
        %3053 = vxpose.xlu0.c.b16.cont [7/8] 0, 128
        %3054 = vxpose.xlu0.c.b16.end [8/8] 0, 128
        %v3055 = vpop.trf.xlu0
        %v3056 = vpop.trf.xlu0
        %v3057 = vpop.trf.xlu0
        %v3058 = vpop.trf.xlu0
        %v3059 = vpop.trf.xlu0
        %v3060 = vpop.trf.xlu0
        %v3061 = vpop.trf.xlu0
        %v3062 = vpop.trf.xlu0
        %3063 = vxpose.xlu0.c.b16.start [1/8] %v2692, 128
        %3064 = vxpose.xlu0.c.b16.cont [2/8] 0, 128
        %3065 = vxpose.xlu0.c.b16.cont [3/8] 0, 128
        %3066 = vxpose.xlu0.c.b16.cont [4/8] 0, 128
        %3067 = vxpose.xlu0.c.b16.cont [5/8] 0, 128
        %3068 = vxpose.xlu0.c.b16.cont [6/8] 0, 128
        %3069 = vxpose.xlu0.c.b16.cont [7/8] 0, 128
        %3070 = vxpose.xlu0.c.b16.end [8/8] 0, 128
        %v3071 = vpop.trf.xlu0
        %v3072 = vpop.trf.xlu0
        %v3073 = vpop.trf.xlu0
        %v3074 = vpop.trf.xlu0
        %v3075 = vpop.trf.xlu0
        %v3076 = vpop.trf.xlu0
        %v3077 = vpop.trf.xlu0
        %v3078 = vpop.trf.xlu0
        %3079 = vxpose.xlu0.c.b16.start [1/8] %v2615, 128
        %3080 = vxpose.xlu0.c.b16.cont [2/8] 0, 128
        %3081 = vxpose.xlu0.c.b16.cont [3/8] 0, 128
        %3082 = vxpose.xlu0.c.b16.cont [4/8] 0, 128
        %3083 = vxpose.xlu0.c.b16.cont [5/8] 0, 128
        %3084 = vxpose.xlu0.c.b16.cont [6/8] 0, 128
        %3085 = vxpose.xlu0.c.b16.cont [7/8] 0, 128
        %3086 = vxpose.xlu0.c.b16.end [8/8] 0, 128
        %v3087 = vpop.trf.xlu0
        %v3088 = vpop.trf.xlu0
        %v3089 = vpop.trf.xlu0
        %v3090 = vpop.trf.xlu0
        %v3091 = vpop.trf.xlu0
        %v3092 = vpop.trf.xlu0
        %v3093 = vpop.trf.xlu0
        %v3094 = vpop.trf.xlu0
        %3095 = vxpose.xlu0.c.b16.start [1/8] %v2683, 128
        %3096 = vxpose.xlu0.c.b16.cont [2/8] 0, 128
        %3097 = vxpose.xlu0.c.b16.cont [3/8] 0, 128
        %3098 = vxpose.xlu0.c.b16.cont [4/8] 0, 128
        %3099 = vxpose.xlu0.c.b16.cont [5/8] 0, 128
        %3100 = vxpose.xlu0.c.b16.cont [6/8] 0, 128
        %3101 = vxpose.xlu0.c.b16.cont [7/8] 0, 128
        %3102 = vxpose.xlu0.c.b16.end [8/8] 0, 128
        %v3103 = vpop.trf.xlu0
        %v3104 = vpop.trf.xlu0
        %v3105 = vpop.trf.xlu0
        %v3106 = vpop.trf.xlu0
        %v3107 = vpop.trf.xlu0
        %v3108 = vpop.trf.xlu0
        %v3109 = vpop.trf.xlu0
        %v3110 = vpop.trf.xlu0
        %3111 = vxpose.xlu0.c.b16.start [1/8] %v2625, 128
        %3112 = vxpose.xlu0.c.b16.cont [2/8] 0, 128
        %3113 = vxpose.xlu0.c.b16.cont [3/8] 0, 128
        %3114 = vxpose.xlu0.c.b16.cont [4/8] 0, 128
        %3115 = vxpose.xlu0.c.b16.cont [5/8] 0, 128
        %3116 = vxpose.xlu0.c.b16.cont [6/8] 0, 128
        %3117 = vxpose.xlu0.c.b16.cont [7/8] 0, 128
        %3118 = vxpose.xlu0.c.b16.end [8/8] 0, 128
        %v3119 = vpop.trf.xlu0
        %v3120 = vpop.trf.xlu0
        %v3121 = vpop.trf.xlu0
        %v3122 = vpop.trf.xlu0
        %v3123 = vpop.trf.xlu0
        %v3124 = vpop.trf.xlu0
        %v3125 = vpop.trf.xlu0
        %v3126 = vpop.trf.xlu0
        %3127 = vxpose.xlu0.c.b16.start [1/8] %v2693, 128
        %3128 = vxpose.xlu0.c.b16.cont [2/8] 0, 128
        %3129 = vxpose.xlu0.c.b16.cont [3/8] 0, 128
        %3130 = vxpose.xlu0.c.b16.cont [4/8] 0, 128
        %3131 = vxpose.xlu0.c.b16.cont [5/8] 0, 128
        %3132 = vxpose.xlu0.c.b16.cont [6/8] 0, 128
        %3133 = vxpose.xlu0.c.b16.cont [7/8] 0, 128
        %3134 = vxpose.xlu0.c.b16.end [8/8] 0, 128
        %v3135 = vpop.trf.xlu0
        %v3136 = vpop.trf.xlu0
        %v3137 = vpop.trf.xlu0
        %v3138 = vpop.trf.xlu0
        %v3139 = vpop.trf.xlu0
        %v3140 = vpop.trf.xlu0
        %v3141 = vpop.trf.xlu0
        %v3142 = vpop.trf.xlu0
        %3143 = vxpose.xlu0.c.b16.start [1/8] %v2622, 128
        %3144 = vxpose.xlu0.c.b16.cont [2/8] 0, 128
        %3145 = vxpose.xlu0.c.b16.cont [3/8] 0, 128
        %3146 = vxpose.xlu0.c.b16.cont [4/8] 0, 128
        %3147 = vxpose.xlu0.c.b16.cont [5/8] 0, 128
        %3148 = vxpose.xlu0.c.b16.cont [6/8] 0, 128
        %3149 = vxpose.xlu0.c.b16.cont [7/8] 0, 128
        %3150 = vxpose.xlu0.c.b16.end [8/8] 0, 128
        %v3151 = vpop.trf.xlu0
        %v3152 = vpop.trf.xlu0
        %v3153 = vpop.trf.xlu0
        %v3154 = vpop.trf.xlu0
        %v3155 = vpop.trf.xlu0
        %v3156 = vpop.trf.xlu0
        %v3157 = vpop.trf.xlu0
        %v3158 = vpop.trf.xlu0
        %3159 = vxpose.xlu0.c.b16.start [1/8] %v2690, 128
        %3160 = vxpose.xlu0.c.b16.cont [2/8] 0, 128
        %3161 = vxpose.xlu0.c.b16.cont [3/8] 0, 128
        %3162 = vxpose.xlu0.c.b16.cont [4/8] 0, 128
        %3163 = vxpose.xlu0.c.b16.cont [5/8] 0, 128
        %3164 = vxpose.xlu0.c.b16.cont [6/8] 0, 128
        %3165 = vxpose.xlu0.c.b16.cont [7/8] 0, 128
        %3166 = vxpose.xlu0.c.b16.end [8/8] 0, 128
        %v3167 = vpop.trf.xlu0
        %v3168 = vpop.trf.xlu0
        %v3169 = vpop.trf.xlu0
        %v3170 = vpop.trf.xlu0
        %v3171 = vpop.trf.xlu0
        %v3172 = vpop.trf.xlu0
        %v3173 = vpop.trf.xlu0
        %v3174 = vpop.trf.xlu0
        %3175 = vxpose.xlu0.c.b16.start [1/8] %v2626, 128
        %3176 = vxpose.xlu0.c.b16.cont [2/8] 0, 128
        %3177 = vxpose.xlu0.c.b16.cont [3/8] 0, 128
        %3178 = vxpose.xlu0.c.b16.cont [4/8] 0, 128
        %3179 = vxpose.xlu0.c.b16.cont [5/8] 0, 128
        %3180 = vxpose.xlu0.c.b16.cont [6/8] 0, 128
        %3181 = vxpose.xlu0.c.b16.cont [7/8] 0, 128
        %3182 = vxpose.xlu0.c.b16.end [8/8] 0, 128
        %v3183 = vpop.trf.xlu0
        %v3184 = vpop.trf.xlu0
        %v3185 = vpop.trf.xlu0
        %v3186 = vpop.trf.xlu0
        %v3187 = vpop.trf.xlu0
        %v3188 = vpop.trf.xlu0
        %v3189 = vpop.trf.xlu0
        %v3190 = vpop.trf.xlu0
        %3191 = vxpose.xlu0.c.b16.start [1/8] %v2694, 128
        %3192 = vxpose.xlu0.c.b16.cont [2/8] 0, 128
        %3193 = vxpose.xlu0.c.b16.cont [3/8] 0, 128
        %3194 = vxpose.xlu0.c.b16.cont [4/8] 0, 128
        %3195 = vxpose.xlu0.c.b16.cont [5/8] 0, 128
        %3196 = vxpose.xlu0.c.b16.cont [6/8] 0, 128
        %3197 = vxpose.xlu0.c.b16.cont [7/8] 0, 128
        %3198 = vxpose.xlu0.c.b16.end [8/8] 0, 128
        %v3199 = vpop.trf.xlu0
        %v3200 = vpop.trf.xlu0
        %v3201 = vpop.trf.xlu0
        %v3202 = vpop.trf.xlu0
        %v3203 = vpop.trf.xlu0
        %v3204 = vpop.trf.xlu0
        %v3205 = vpop.trf.xlu0
        %v3206 = vpop.trf.xlu0
        %v3207 = vcombine.low %v2703, %v2767
        %v3209 = vunpack.c.l.s4 1983009808
        %v3210 = vunpack.c.0.s8 %v3209
        %v3211 = vlaneseq
        %v3212 = vshrl.u32 %v3211, 7
        %v3213 = vsub.s32 %v3210, %v3212
        %v3214 = vrot.slane %v3207, %v3213
        %v3215 = vcombine.low %v2735, %v2799
        %v3217 = vunpack.c.l.s4 1983009808
        %v3218 = vunpack.c.0.s8 %v3217
        %v3219 = vlaneseq
        %v3220 = vshrl.u32 %v3219, 7
        %v3221 = vsub.s32 %v3218, %v3220
        %v3222 = vrot.slane %v3215, %v3221
        %v3223 = vcombine.low %v2831, %v2895
        %v3225 = vunpack.c.l.s4 1983009808
        %v3226 = vunpack.c.0.s8 %v3225
        %v3227 = vlaneseq
        %v3228 = vshrl.u32 %v3227, 7
        %v3229 = vsub.s32 %v3226, %v3228
        %v3230 = vrot.slane %v3223, %v3229
        %v3231 = vcombine.low %v2863, %v2927
        %v3233 = vunpack.c.l.s4 1983009808
        %v3234 = vunpack.c.0.s8 %v3233
        %v3235 = vlaneseq
        %v3236 = vshrl.u32 %v3235, 7
        %v3237 = vsub.s32 %v3234, %v3236
        %v3238 = vrot.slane %v3231, %v3237
        %v3239 = vcombine.low %v3214, %v3222
        %v3241 = vunpack.c.l.s4 1934713408
        %v3242 = vunpack.c.0.s8 %v3241
        %v3243 = vlaneseq
        %v3244 = vshrl.u32 %v3243, 7
        %v3245 = vsub.s32 %v3242, %v3244
        %v3246 = vrot.slane %v3239, %v3245
        %v3247 = vcombine.low %v3230, %v3238
        %v3249 = vunpack.c.l.s4 1934713408
        %v3250 = vunpack.c.0.s8 %v3249
        %v3251 = vlaneseq
        %v3252 = vshrl.u32 %v3251, 7
        %v3253 = vsub.s32 %v3250, %v3252
        %v3254 = vrot.slane %v3247, %v3253
        %v3255 = vcombine.low %v3246, %v3254
        %v3256 = vcombine.high %v3246, %v3254
        %v3257 = vcombine.low %v2719, %v2783
        %v3259 = vunpack.c.l.s4 1983009808
        %v3260 = vunpack.c.0.s8 %v3259
        %v3261 = vlaneseq
        %v3262 = vshrl.u32 %v3261, 7
        %v3263 = vsub.s32 %v3260, %v3262
        %v3264 = vrot.slane %v3257, %v3263
        %v3265 = vcombine.low %v2751, %v2815
        %v3267 = vunpack.c.l.s4 1983009808
        %v3268 = vunpack.c.0.s8 %v3267
        %v3269 = vlaneseq
        %v3270 = vshrl.u32 %v3269, 7
        %v3271 = vsub.s32 %v3268, %v3270
        %v3272 = vrot.slane %v3265, %v3271
        %v3273 = vcombine.low %v2847, %v2911
        %v3275 = vunpack.c.l.s4 1983009808
        %v3276 = vunpack.c.0.s8 %v3275
        %v3277 = vlaneseq
        %v3278 = vshrl.u32 %v3277, 7
        %v3279 = vsub.s32 %v3276, %v3278
        %v3280 = vrot.slane %v3273, %v3279
        %v3281 = vcombine.low %v2879, %v2943
        %v3283 = vunpack.c.l.s4 1983009808
        %v3284 = vunpack.c.0.s8 %v3283
        %v3285 = vlaneseq
        %v3286 = vshrl.u32 %v3285, 7
        %v3287 = vsub.s32 %v3284, %v3286
        %v3288 = vrot.slane %v3281, %v3287
        %v3289 = vcombine.low %v3264, %v3272
        %v3291 = vunpack.c.l.s4 1934713408
        %v3292 = vunpack.c.0.s8 %v3291
        %v3293 = vlaneseq
        %v3294 = vshrl.u32 %v3293, 7
        %v3295 = vsub.s32 %v3292, %v3294
        %v3296 = vrot.slane %v3289, %v3295
        %v3297 = vcombine.low %v3280, %v3288
        %v3299 = vunpack.c.l.s4 1934713408
        %v3300 = vunpack.c.0.s8 %v3299
        %v3301 = vlaneseq
        %v3302 = vshrl.u32 %v3301, 7
        %v3303 = vsub.s32 %v3300, %v3302
        %v3304 = vrot.slane %v3297, %v3303
        %v3305 = vcombine.low %v3296, %v3304
        %v3306 = vcombine.high %v3296, %v3304
        %v3307 = vcombine.low %v2959, %v3023
        %v3309 = vunpack.c.l.s4 1983009808
        %v3310 = vunpack.c.0.s8 %v3309
        %v3311 = vlaneseq
        %v3312 = vshrl.u32 %v3311, 7
        %v3313 = vsub.s32 %v3310, %v3312
        %v3314 = vrot.slane %v3307, %v3313
        %v3315 = vcombine.low %v2991, %v3055
        %v3317 = vunpack.c.l.s4 1983009808
        %v3318 = vunpack.c.0.s8 %v3317
        %v3319 = vlaneseq
        %v3320 = vshrl.u32 %v3319, 7
        %v3321 = vsub.s32 %v3318, %v3320
        %v3322 = vrot.slane %v3315, %v3321
        %v3323 = vcombine.low %v3087, %v3151
        %v3325 = vunpack.c.l.s4 1983009808
        %v3326 = vunpack.c.0.s8 %v3325
        %v3327 = vlaneseq
        %v3328 = vshrl.u32 %v3327, 7
        %v3329 = vsub.s32 %v3326, %v3328
        %v3330 = vrot.slane %v3323, %v3329
        %v3331 = vcombine.low %v3119, %v3183
        %v3333 = vunpack.c.l.s4 1983009808
        %v3334 = vunpack.c.0.s8 %v3333
        %v3335 = vlaneseq
        %v3336 = vshrl.u32 %v3335, 7
        %v3337 = vsub.s32 %v3334, %v3336
        %v3338 = vrot.slane %v3331, %v3337
        %v3339 = vcombine.low %v3314, %v3322
        %v3341 = vunpack.c.l.s4 1934713408
        %v3342 = vunpack.c.0.s8 %v3341
        %v3343 = vlaneseq
        %v3344 = vshrl.u32 %v3343, 7
        %v3345 = vsub.s32 %v3342, %v3344
        %v3346 = vrot.slane %v3339, %v3345
        %v3347 = vcombine.low %v3330, %v3338
        %v3349 = vunpack.c.l.s4 1934713408
        %v3350 = vunpack.c.0.s8 %v3349
        %v3351 = vlaneseq
        %v3352 = vshrl.u32 %v3351, 7
        %v3353 = vsub.s32 %v3350, %v3352
        %v3354 = vrot.slane %v3347, %v3353
        %v3355 = vcombine.low %v3346, %v3354
        %v3356 = vcombine.high %v3346, %v3354
        %v3357 = vcombine.low %v2975, %v3039
        %v3359 = vunpack.c.l.s4 1983009808
        %v3360 = vunpack.c.0.s8 %v3359
        %v3361 = vlaneseq
        %v3362 = vshrl.u32 %v3361, 7
        %v3363 = vsub.s32 %v3360, %v3362
        %v3364 = vrot.slane %v3357, %v3363
        %v3365 = vcombine.low %v3007, %v3071
        %v3367 = vunpack.c.l.s4 1983009808
        %v3368 = vunpack.c.0.s8 %v3367
        %v3369 = vlaneseq
        %v3370 = vshrl.u32 %v3369, 7
        %v3371 = vsub.s32 %v3368, %v3370
        %v3372 = vrot.slane %v3365, %v3371
        %v3373 = vcombine.low %v3103, %v3167
        %v3375 = vunpack.c.l.s4 1983009808
        %v3376 = vunpack.c.0.s8 %v3375
        %v3377 = vlaneseq
        %v3378 = vshrl.u32 %v3377, 7
        %v3379 = vsub.s32 %v3376, %v3378
        %v3380 = vrot.slane %v3373, %v3379
        %v3381 = vcombine.low %v3135, %v3199
        %v3383 = vunpack.c.l.s4 1983009808
        %v3384 = vunpack.c.0.s8 %v3383
        %v3385 = vlaneseq
        %v3386 = vshrl.u32 %v3385, 7
        %v3387 = vsub.s32 %v3384, %v3386
        %v3388 = vrot.slane %v3381, %v3387
        %v3389 = vcombine.low %v3364, %v3372
        %v3391 = vunpack.c.l.s4 1934713408
        %v3392 = vunpack.c.0.s8 %v3391
        %v3393 = vlaneseq
        %v3394 = vshrl.u32 %v3393, 7
        %v3395 = vsub.s32 %v3392, %v3394
        %v3396 = vrot.slane %v3389, %v3395
        %v3397 = vcombine.low %v3380, %v3388
        %v3399 = vunpack.c.l.s4 1934713408
        %v3400 = vunpack.c.0.s8 %v3399
        %v3401 = vlaneseq
        %v3402 = vshrl.u32 %v3401, 7
        %v3403 = vsub.s32 %v3400, %v3402
        %v3404 = vrot.slane %v3397, %v3403
        %v3405 = vcombine.low %v3396, %v3404
        %v3406 = vcombine.high %v3396, %v3404
        %v3409 = vpack.i.b16 %v3305, %v3255
        %v3410 = vshrl.u32 %v3255, 16
        %v3411 = vshrl.u32 %v3305, 16
        %v3412 = vpack.i.b16 %v3411, %v3410
        %v3415 = vpack.i.b16 %v3306, %v3256
        %v3416 = vshrl.u32 %v3256, 16
        %v3417 = vshrl.u32 %v3306, 16
        %v3418 = vpack.i.b16 %v3417, %v3416
        %v3421 = vpack.i.b16 %v3405, %v3355
        %v3422 = vshrl.u32 %v3355, 16
        %v3423 = vshrl.u32 %v3405, 16
        %v3424 = vpack.i.b16 %v3423, %v3422
        %v3427 = vpack.i.b16 %v3406, %v3356
        %v3428 = vshrl.u32 %v3356, 16
        %v3429 = vshrl.u32 %v3406, 16
        %v3430 = vpack.i.b16 %v3429, %v3428
        %v3432 = vsel %vm2177, %v3409, 0
        %v3435 = vsel %vm2177, %v3421, 0
        %v3438 = vsel %vm2177, %v2222, 0
        %3440 = vmatprep.subr.bf16.mxu0 0
        %3441 = vmatpush1.bf16.xpose.msra.mxu0 %v3438
        %3442 = vmatprep.subr.bf16.mxu0 0
        %3443 = vmatpush1.bf16.xpose.msra.mxu0 0
        %3444 = vmatprep.subr.bf16.mxu0 0
        %3445 = vmatpush1.bf16.xpose.msra.mxu0 0
        %3446 = vmatprep.subr.bf16.mxu0 0
        %3447 = vmatpush1.bf16.xpose.msra.mxu0 0
        %3448 = vmatprep.subr.bf16.mxu0 0
        %3449 = vmatpush1.bf16.xpose.msra.mxu0 0
        %3450 = vmatprep.subr.bf16.mxu0 0
        %3451 = vmatpush1.bf16.xpose.msra.mxu0 0
        %3452 = vmatprep.subr.bf16.mxu0 0
        %3453 = vmatpush1.bf16.xpose.msra.mxu0 0
        %3454 = vmatprep.subr.bf16.mxu0 0
        %3455 = vmatpush1.bf16.xpose.msra.mxu0 0
        %3456 = vmatprep.subr.bf16.mxu0 0
        %3457 = vmatpush1.bf16.xpose.msra.mxu0 0
        %3458 = vmatprep.subr.bf16.mxu0 0
        %3459 = vmatpush1.bf16.xpose.msra.mxu0 0
        %3460 = vmatprep.subr.bf16.mxu0 0
        %3461 = vmatpush1.bf16.xpose.msra.mxu0 0
        %3462 = vmatprep.subr.bf16.mxu0 0
        %3463 = vmatpush1.bf16.xpose.msra.mxu0 0
        %3464 = vmatprep.subr.bf16.mxu0 0
        %3465 = vmatpush1.bf16.xpose.msra.mxu0 0
        %3466 = vmatprep.subr.bf16.mxu0 0
        %3467 = vmatpush1.bf16.xpose.msra.mxu0 0
        %3468 = vmatprep.subr.bf16.mxu0 0
        %3469 = vmatpush1.bf16.xpose.msra.mxu0 0
        %3470 = vmatprep.subr.bf16.mxu0 0
        %3471 = vmatpush1.bf16.xpose.msra.mxu0 0
        %3472 = vmatprep.mubr.bf16.mxu0 0
        %3473 = vmatmul.mubr.bf16.gmra.mrb[0].mxu0 %v3432
        %v3474 = vpop.f32.mrb[0].mxu0
        %v3475 = vadd.f32 0.0, %v3474
        %v3476 = vpop.f32.mrb[0].mxu0
        %v3477 = vpop.f32.mrb[0].mxu0
        %v3478 = vadd.f32 0.0, %v3477
        %v3479 = vpop.f32.mrb[0].mxu0
        %3480 = vmatprep.mubr.bf16.mxu0 0
        %3481 = vmatmul.mubr.bf16.gmra.mrb[0].mxu0 %v3435
        %v3482 = vpop.f32.mrb[0].mxu0
        %v3483 = vadd.f32 0.0, %v3482
        %v3484 = vpop.f32.mrb[0].mxu0
        %v3485 = vpop.f32.mrb[0].mxu0
        %v3486 = vadd.f32 0.0, %v3485
        %v3487 = vpop.f32.mrb[0].mxu0
        %3488 = vdwg.mxu0
        %v3490 = vsel %vm2177, %v3412, 0
        %v3493 = vsel %vm2177, %v3424, 0
        %v3496 = vsel %vm2177, %v2223, 0
        %3498 = vmatprep.subr.bf16.mxu0 0
        %3499 = vmatpush1.bf16.xpose.msra.mxu0 %v3496
        %3500 = vmatprep.subr.bf16.mxu0 0
        %3501 = vmatpush1.bf16.xpose.msra.mxu0 0
        %3502 = vmatprep.subr.bf16.mxu0 0
        %3503 = vmatpush1.bf16.xpose.msra.mxu0 0
        %3504 = vmatprep.subr.bf16.mxu0 0
        %3505 = vmatpush1.bf16.xpose.msra.mxu0 0
        %3506 = vmatprep.subr.bf16.mxu0 0
        %3507 = vmatpush1.bf16.xpose.msra.mxu0 0
        %3508 = vmatprep.subr.bf16.mxu0 0
        %3509 = vmatpush1.bf16.xpose.msra.mxu0 0
        %3510 = vmatprep.subr.bf16.mxu0 0
        %3511 = vmatpush1.bf16.xpose.msra.mxu0 0
        %3512 = vmatprep.subr.bf16.mxu0 0
        %3513 = vmatpush1.bf16.xpose.msra.mxu0 0
        %3514 = vmatprep.subr.bf16.mxu0 0
        %3515 = vmatpush1.bf16.xpose.msra.mxu0 0
        %3516 = vmatprep.subr.bf16.mxu0 0
        %3517 = vmatpush1.bf16.xpose.msra.mxu0 0
        %3518 = vmatprep.subr.bf16.mxu0 0
        %3519 = vmatpush1.bf16.xpose.msra.mxu0 0
        %3520 = vmatprep.subr.bf16.mxu0 0
        %3521 = vmatpush1.bf16.xpose.msra.mxu0 0
        %3522 = vmatprep.subr.bf16.mxu0 0
        %3523 = vmatpush1.bf16.xpose.msra.mxu0 0
        %3524 = vmatprep.subr.bf16.mxu0 0
        %3525 = vmatpush1.bf16.xpose.msra.mxu0 0
        %3526 = vmatprep.subr.bf16.mxu0 0
        %3527 = vmatpush1.bf16.xpose.msra.mxu0 0
        %3528 = vmatprep.subr.bf16.mxu0 0
        %3529 = vmatpush1.bf16.xpose.msra.mxu0 0
        %3530 = vmatprep.mubr.bf16.mxu0 0
        %3531 = vmatmul.mubr.bf16.gmra.mrb[0].mxu0 %v3490
        %v3532 = vpop.f32.mrb[0].mxu0
        %v3533 = vadd.f32 0.0, %v3532
        %v3534 = vpop.f32.mrb[0].mxu0
        %v3535 = vpop.f32.mrb[0].mxu0
        %v3536 = vadd.f32 0.0, %v3535
        %v3537 = vpop.f32.mrb[0].mxu0
        %3538 = vmatprep.mubr.bf16.mxu0 0
        %3539 = vmatmul.mubr.bf16.gmra.mrb[0].mxu0 %v3493
        %v3540 = vpop.f32.mrb[0].mxu0
        %v3541 = vadd.f32 0.0, %v3540
        %v3542 = vpop.f32.mrb[0].mxu0
        %v3543 = vpop.f32.mrb[0].mxu0
        %v3544 = vadd.f32 0.0, %v3543
        %v3545 = vpop.f32.mrb[0].mxu0
        %3546 = vdwg.mxu0
        %v3548 = vsel %vm2177, %v3415, 0
        %v3551 = vsel %vm2177, %v3427, 0
        %v3554 = vsel %vm2177, %v2224, 0
        %3556 = vmatprep.subr.bf16.mxu0 0
        %3557 = vmatpush1.bf16.xpose.msra.mxu0 %v3554
        %3558 = vmatprep.subr.bf16.mxu0 0
        %3559 = vmatpush1.bf16.xpose.msra.mxu0 0
        %3560 = vmatprep.subr.bf16.mxu0 0
        %3561 = vmatpush1.bf16.xpose.msra.mxu0 0
        %3562 = vmatprep.subr.bf16.mxu0 0
        %3563 = vmatpush1.bf16.xpose.msra.mxu0 0
        %3564 = vmatprep.subr.bf16.mxu0 0
        %3565 = vmatpush1.bf16.xpose.msra.mxu0 0
        %3566 = vmatprep.subr.bf16.mxu0 0
        %3567 = vmatpush1.bf16.xpose.msra.mxu0 0
        %3568 = vmatprep.subr.bf16.mxu0 0
        %3569 = vmatpush1.bf16.xpose.msra.mxu0 0
        %3570 = vmatprep.subr.bf16.mxu0 0
        %3571 = vmatpush1.bf16.xpose.msra.mxu0 0
        %3572 = vmatprep.subr.bf16.mxu0 0
        %3573 = vmatpush1.bf16.xpose.msra.mxu0 0
        %3574 = vmatprep.subr.bf16.mxu0 0
        %3575 = vmatpush1.bf16.xpose.msra.mxu0 0
        %3576 = vmatprep.subr.bf16.mxu0 0
        %3577 = vmatpush1.bf16.xpose.msra.mxu0 0
        %3578 = vmatprep.subr.bf16.mxu0 0
        %3579 = vmatpush1.bf16.xpose.msra.mxu0 0
        %3580 = vmatprep.subr.bf16.mxu0 0
        %3581 = vmatpush1.bf16.xpose.msra.mxu0 0
        %3582 = vmatprep.subr.bf16.mxu0 0
        %3583 = vmatpush1.bf16.xpose.msra.mxu0 0
        %3584 = vmatprep.subr.bf16.mxu0 0
        %3585 = vmatpush1.bf16.xpose.msra.mxu0 0
        %3586 = vmatprep.subr.bf16.mxu0 0
        %3587 = vmatpush1.bf16.xpose.msra.mxu0 0
        %3588 = vmatprep.mubr.bf16.mxu0 0
        %3589 = vmatmul.mubr.bf16.gmra.mrb[0].mxu0 %v3548
        %v3590 = vpop.f32.mrb[0].mxu0
        %v3591 = vadd.f32 0.0, %v3590
        %v3592 = vpop.f32.mrb[0].mxu0
        %v3593 = vpop.f32.mrb[0].mxu0
        %v3594 = vadd.f32 0.0, %v3593
        %v3595 = vpop.f32.mrb[0].mxu0
        %3596 = vmatprep.mubr.bf16.mxu0 0
        %3597 = vmatmul.mubr.bf16.gmra.mrb[0].mxu0 %v3551
        %v3598 = vpop.f32.mrb[0].mxu0
        %v3599 = vadd.f32 0.0, %v3598
        %v3600 = vpop.f32.mrb[0].mxu0
        %v3601 = vpop.f32.mrb[0].mxu0
        %v3602 = vadd.f32 0.0, %v3601
        %v3603 = vpop.f32.mrb[0].mxu0
        %3604 = vdwg.mxu0
        %v3606 = vsel %vm2177, %v3418, 0
        %v3609 = vsel %vm2177, %v3430, 0
        %v3612 = vsel %vm2177, %v2225, 0
        %3614 = vmatprep.subr.bf16.mxu0 0
        %3615 = vmatpush1.bf16.xpose.msra.mxu0 %v3612
        %3616 = vmatprep.subr.bf16.mxu0 0
        %3617 = vmatpush1.bf16.xpose.msra.mxu0 0
        %3618 = vmatprep.subr.bf16.mxu0 0
        %3619 = vmatpush1.bf16.xpose.msra.mxu0 0
        %3620 = vmatprep.subr.bf16.mxu0 0
        %3621 = vmatpush1.bf16.xpose.msra.mxu0 0
        %3622 = vmatprep.subr.bf16.mxu0 0
        %3623 = vmatpush1.bf16.xpose.msra.mxu0 0
        %3624 = vmatprep.subr.bf16.mxu0 0
        %3625 = vmatpush1.bf16.xpose.msra.mxu0 0
        %3626 = vmatprep.subr.bf16.mxu0 0
        %3627 = vmatpush1.bf16.xpose.msra.mxu0 0
        %3628 = vmatprep.subr.bf16.mxu0 0
        %3629 = vmatpush1.bf16.xpose.msra.mxu0 0
        %3630 = vmatprep.subr.bf16.mxu0 0
        %3631 = vmatpush1.bf16.xpose.msra.mxu0 0
        %3632 = vmatprep.subr.bf16.mxu0 0
        %3633 = vmatpush1.bf16.xpose.msra.mxu0 0
        %3634 = vmatprep.subr.bf16.mxu0 0
        %3635 = vmatpush1.bf16.xpose.msra.mxu0 0
        %3636 = vmatprep.subr.bf16.mxu0 0
        %3637 = vmatpush1.bf16.xpose.msra.mxu0 0
        %3638 = vmatprep.subr.bf16.mxu0 0
        %3639 = vmatpush1.bf16.xpose.msra.mxu0 0
        %3640 = vmatprep.subr.bf16.mxu0 0
        %3641 = vmatpush1.bf16.xpose.msra.mxu0 0
        %3642 = vmatprep.subr.bf16.mxu0 0
        %3643 = vmatpush1.bf16.xpose.msra.mxu0 0
        %3644 = vmatprep.subr.bf16.mxu0 0
        %3645 = vmatpush1.bf16.xpose.msra.mxu0 0
        %3646 = vmatprep.mubr.bf16.mxu0 0
        %3647 = vmatmul.mubr.bf16.gmra.mrb[0].mxu0 %v3606
        %v3648 = vpop.f32.mrb[0].mxu0
        %v3649 = vadd.f32 0.0, %v3648
        %v3650 = vpop.f32.mrb[0].mxu0
        %v3651 = vpop.f32.mrb[0].mxu0
        %v3652 = vadd.f32 0.0, %v3651
        %v3653 = vpop.f32.mrb[0].mxu0
        %3654 = vmatprep.mubr.bf16.mxu0 0
        %3655 = vmatmul.mubr.bf16.gmra.mrb[0].mxu0 %v3609
        %v3656 = vpop.f32.mrb[0].mxu0
        %v3657 = vadd.f32 0.0, %v3656
        %v3658 = vpop.f32.mrb[0].mxu0
        %v3659 = vpop.f32.mrb[0].mxu0
        %v3660 = vadd.f32 0.0, %v3659
        %v3661 = vpop.f32.mrb[0].mxu0
        %3662 = vdwg.mxu0
        %3663 = vxpose.xlu0.b32.start [1/16] %v3475, 128
        %3664 = vxpose.xlu0.b32.cont [2/16] %v3478, 128
        %3665 = vxpose.xlu0.b32.cont [3/16] %v3483, 128
        %3666 = vxpose.xlu0.b32.cont [4/16] %v3486, 128
        %3667 = vxpose.xlu0.b32.cont [5/16] 0.0, 128
        %3668 = vxpose.xlu0.b32.cont [6/16] 0.0, 128
        %3669 = vxpose.xlu0.b32.cont [7/16] 0.0, 128
        %3670 = vxpose.xlu0.b32.cont [8/16] 0.0, 128
        %3671 = vxpose.xlu0.b32.cont [9/16] 0.0, 128
        %3672 = vxpose.xlu0.b32.cont [10/16] 0.0, 128
        %3673 = vxpose.xlu0.b32.cont [11/16] 0.0, 128
        %3674 = vxpose.xlu0.b32.cont [12/16] 0.0, 128
        %3675 = vxpose.xlu0.b32.cont [13/16] 0.0, 128
        %3676 = vxpose.xlu0.b32.cont [14/16] 0.0, 128
        %3677 = vxpose.xlu0.b32.cont [15/16] 0.0, 128
        %3678 = vxpose.xlu0.b32.end [16/16] 0.0, 128
        %v3679 = vpop.trf.xlu0
        %v3680 = vpop.trf.xlu0
        %v3681 = vpop.trf.xlu0
        %v3682 = vpop.trf.xlu0
        %v3683 = vpop.trf.xlu0
        %v3684 = vpop.trf.xlu0
        %v3685 = vpop.trf.xlu0
        %v3686 = vpop.trf.xlu0
        %v3687 = vpop.trf.xlu0
        %v3688 = vpop.trf.xlu0
        %v3689 = vpop.trf.xlu0
        %v3690 = vpop.trf.xlu0
        %v3691 = vpop.trf.xlu0
        %v3692 = vpop.trf.xlu0
        %v3693 = vpop.trf.xlu0
        %v3694 = vpop.trf.xlu0
        %3695 = vxpose.xlu0.b32.start [1/16] %v3533, 128
        %3696 = vxpose.xlu0.b32.cont [2/16] %v3536, 128
        %3697 = vxpose.xlu0.b32.cont [3/16] %v3541, 128
        %3698 = vxpose.xlu0.b32.cont [4/16] %v3544, 128
        %3699 = vxpose.xlu0.b32.cont [5/16] 0.0, 128
        %3700 = vxpose.xlu0.b32.cont [6/16] 0.0, 128
        %3701 = vxpose.xlu0.b32.cont [7/16] 0.0, 128
        %3702 = vxpose.xlu0.b32.cont [8/16] 0.0, 128
        %3703 = vxpose.xlu0.b32.cont [9/16] 0.0, 128
        %3704 = vxpose.xlu0.b32.cont [10/16] 0.0, 128
        %3705 = vxpose.xlu0.b32.cont [11/16] 0.0, 128
        %3706 = vxpose.xlu0.b32.cont [12/16] 0.0, 128
        %3707 = vxpose.xlu0.b32.cont [13/16] 0.0, 128
        %3708 = vxpose.xlu0.b32.cont [14/16] 0.0, 128
        %3709 = vxpose.xlu0.b32.cont [15/16] 0.0, 128
        %3710 = vxpose.xlu0.b32.end [16/16] 0.0, 128
        %v3711 = vpop.trf.xlu0
        %v3712 = vpop.trf.xlu0
        %v3713 = vpop.trf.xlu0
        %v3714 = vpop.trf.xlu0
        %v3715 = vpop.trf.xlu0
        %v3716 = vpop.trf.xlu0
        %v3717 = vpop.trf.xlu0
        %v3718 = vpop.trf.xlu0
        %v3719 = vpop.trf.xlu0
        %v3720 = vpop.trf.xlu0
        %v3721 = vpop.trf.xlu0
        %v3722 = vpop.trf.xlu0
        %v3723 = vpop.trf.xlu0
        %v3724 = vpop.trf.xlu0
        %v3725 = vpop.trf.xlu0
        %v3726 = vpop.trf.xlu0
        %3727 = vxpose.xlu0.b32.start [1/16] %v3591, 128
        %3728 = vxpose.xlu0.b32.cont [2/16] %v3594, 128
        %3729 = vxpose.xlu0.b32.cont [3/16] %v3599, 128
        %3730 = vxpose.xlu0.b32.cont [4/16] %v3602, 128
        %3731 = vxpose.xlu0.b32.cont [5/16] 0.0, 128
        %3732 = vxpose.xlu0.b32.cont [6/16] 0.0, 128
        %3733 = vxpose.xlu0.b32.cont [7/16] 0.0, 128
        %3734 = vxpose.xlu0.b32.cont [8/16] 0.0, 128
        %3735 = vxpose.xlu0.b32.cont [9/16] 0.0, 128
        %3736 = vxpose.xlu0.b32.cont [10/16] 0.0, 128
        %3737 = vxpose.xlu0.b32.cont [11/16] 0.0, 128
        %3738 = vxpose.xlu0.b32.cont [12/16] 0.0, 128
        %3739 = vxpose.xlu0.b32.cont [13/16] 0.0, 128
        %3740 = vxpose.xlu0.b32.cont [14/16] 0.0, 128
        %3741 = vxpose.xlu0.b32.cont [15/16] 0.0, 128
        %3742 = vxpose.xlu0.b32.end [16/16] 0.0, 128
        %v3743 = vpop.trf.xlu0
        %v3744 = vpop.trf.xlu0
        %v3745 = vpop.trf.xlu0
        %v3746 = vpop.trf.xlu0
        %v3747 = vpop.trf.xlu0
        %v3748 = vpop.trf.xlu0
        %v3749 = vpop.trf.xlu0
        %v3750 = vpop.trf.xlu0
        %v3751 = vpop.trf.xlu0
        %v3752 = vpop.trf.xlu0
        %v3753 = vpop.trf.xlu0
        %v3754 = vpop.trf.xlu0
        %v3755 = vpop.trf.xlu0
        %v3756 = vpop.trf.xlu0
        %v3757 = vpop.trf.xlu0
        %v3758 = vpop.trf.xlu0
        %3759 = vxpose.xlu0.b32.start [1/16] %v3649, 128
        %3760 = vxpose.xlu0.b32.cont [2/16] %v3652, 128
        %3761 = vxpose.xlu0.b32.cont [3/16] %v3657, 128
        %3762 = vxpose.xlu0.b32.cont [4/16] %v3660, 128
        %3763 = vxpose.xlu0.b32.cont [5/16] 0.0, 128
        %3764 = vxpose.xlu0.b32.cont [6/16] 0.0, 128
        %3765 = vxpose.xlu0.b32.cont [7/16] 0.0, 128
        %3766 = vxpose.xlu0.b32.cont [8/16] 0.0, 128
        %3767 = vxpose.xlu0.b32.cont [9/16] 0.0, 128
        %3768 = vxpose.xlu0.b32.cont [10/16] 0.0, 128
        %3769 = vxpose.xlu0.b32.cont [11/16] 0.0, 128
        %3770 = vxpose.xlu0.b32.cont [12/16] 0.0, 128
        %3771 = vxpose.xlu0.b32.cont [13/16] 0.0, 128
        %3772 = vxpose.xlu0.b32.cont [14/16] 0.0, 128
        %3773 = vxpose.xlu0.b32.cont [15/16] 0.0, 128
        %3774 = vxpose.xlu0.b32.end [16/16] 0.0, 128
        %v3775 = vpop.trf.xlu0
        %v3776 = vpop.trf.xlu0
        %v3777 = vpop.trf.xlu0
        %v3778 = vpop.trf.xlu0
        %v3779 = vpop.trf.xlu0
        %v3780 = vpop.trf.xlu0
        %v3781 = vpop.trf.xlu0
        %v3782 = vpop.trf.xlu0
        %v3783 = vpop.trf.xlu0
        %v3784 = vpop.trf.xlu0
        %v3785 = vpop.trf.xlu0
        %v3786 = vpop.trf.xlu0
        %v3787 = vpop.trf.xlu0
        %v3788 = vpop.trf.xlu0
        %v3789 = vpop.trf.xlu0
        %v3790 = vpop.trf.xlu0
        %v3791 = vcombine.low %v3679, %v3743
        %v3792 = vcombine.high %v3679, %v3743
        %v3794 = vunpack.c.l.s4 1983009808
        %v3795 = vunpack.c.0.s8 %v3794
        %v3796 = vlaneseq
        %v3797 = vshrl.u32 %v3796, 7
        %v3798 = vsub.s32 %v3795, %v3797
        %v3799 = vrot.slane %v3791, %v3798
        %v3801 = vunpack.c.l.s4 1983009808
        %v3802 = vunpack.c.0.s8 %v3801
        %v3803 = vlaneseq
        %v3804 = vshrl.u32 %v3803, 7
        %v3805 = vsub.s32 %v3802, %v3804
        %v3806 = vrot.slane %v3792, %v3805
        %v3807 = vcombine.low %v3711, %v3775
        %v3808 = vcombine.high %v3711, %v3775
        %v3810 = vunpack.c.l.s4 1983009808
        %v3811 = vunpack.c.0.s8 %v3810
        %v3812 = vlaneseq
        %v3813 = vshrl.u32 %v3812, 7
        %v3814 = vsub.s32 %v3811, %v3813
        %v3815 = vrot.slane %v3807, %v3814
        %v3817 = vunpack.c.l.s4 1983009808
        %v3818 = vunpack.c.0.s8 %v3817
        %v3819 = vlaneseq
        %v3820 = vshrl.u32 %v3819, 7
        %v3821 = vsub.s32 %v3818, %v3820
        %v3822 = vrot.slane %v3808, %v3821
        %v3823 = vcombine.low %v3799, %v3815
        %v3824 = vcombine.high %v3799, %v3815
        %v3826 = vunpack.c.l.s4 1934713408
        %v3827 = vunpack.c.0.s8 %v3826
        %v3828 = vlaneseq
        %v3829 = vshrl.u32 %v3828, 7
        %v3830 = vsub.s32 %v3827, %v3829
        %v3831 = vrot.slane %v3823, %v3830
        %v3833 = vunpack.c.l.s4 1934713408
        %v3834 = vunpack.c.0.s8 %v3833
        %v3835 = vlaneseq
        %v3836 = vshrl.u32 %v3835, 7
        %v3837 = vsub.s32 %v3834, %v3836
        %v3838 = vrot.slane %v3824, %v3837
        %v3839 = vcombine.low %v3806, %v3822
        %v3840 = vcombine.high %v3806, %v3822
        %v3842 = vunpack.c.l.s4 1934713408
        %v3843 = vunpack.c.0.s8 %v3842
        %v3844 = vlaneseq
        %v3845 = vshrl.u32 %v3844, 7
        %v3846 = vsub.s32 %v3843, %v3845
        %v3847 = vrot.slane %v3839, %v3846
        %v3849 = vunpack.c.l.s4 1934713408
        %v3850 = vunpack.c.0.s8 %v3849
        %v3851 = vlaneseq
        %v3852 = vshrl.u32 %v3851, 7
        %v3853 = vsub.s32 %v3850, %v3852
        %v3854 = vrot.slane %v3840, %v3853
        %v3855 = vcombine.high %v3831, 0.0
        %v3856 = vcombine.high %v3838, 0.0
        %v3857 = vcombine.high %v3847, 0.0
        %v3858 = vcombine.high %v3854, 0.0
        %v3859 = vcombine.low %v3831, %v3838
        %v3861 = vunpack.c.l.s4 1983009808
        %v3862 = vunpack.c.0.s8 %v3861
        %v3863 = vlaneseq
        %v3864 = vshrl.u32 %v3863, 7
        %v3865 = vsub.s32 %v3862, %v3864
        %v3866 = vrot.slane %v3859, %v3865
        %v3867 = vcombine.low %v3855, %v3856
        %v3869 = vunpack.c.l.s4 1983009808
        %v3870 = vunpack.c.0.s8 %v3869
        %v3871 = vlaneseq
        %v3872 = vshrl.u32 %v3871, 7
        %v3873 = vsub.s32 %v3870, %v3872
        %v3874 = vrot.slane %v3867, %v3873
        %v3875 = vcombine.low %v3847, %v3854
        %v3877 = vunpack.c.l.s4 1983009808
        %v3878 = vunpack.c.0.s8 %v3877
        %v3879 = vlaneseq
        %v3880 = vshrl.u32 %v3879, 7
        %v3881 = vsub.s32 %v3878, %v3880
        %v3882 = vrot.slane %v3875, %v3881
        %v3883 = vcombine.low %v3857, %v3858
        %v3885 = vunpack.c.l.s4 1983009808
        %v3886 = vunpack.c.0.s8 %v3885
        %v3887 = vlaneseq
        %v3888 = vshrl.u32 %v3887, 7
        %v3889 = vsub.s32 %v3886, %v3888
        %v3890 = vrot.slane %v3883, %v3889
        %v3891 = vcombine.low %v3866, %v3874
        %v3892 = vcombine.high %v3866, %v3874
        %v3894 = vunpack.c.l.s4 1934713408
        %v3895 = vunpack.c.0.s8 %v3894
        %v3896 = vlaneseq
        %v3897 = vshrl.u32 %v3896, 7
        %v3898 = vsub.s32 %v3895, %v3897
        %v3899 = vrot.slane %v3891, %v3898
        %v3901 = vunpack.c.l.s4 1934713408
        %v3902 = vunpack.c.0.s8 %v3901
        %v3903 = vlaneseq
        %v3904 = vshrl.u32 %v3903, 7
        %v3905 = vsub.s32 %v3902, %v3904
        %v3906 = vrot.slane %v3892, %v3905
        %v3907 = vcombine.low %v3882, %v3890
        %v3908 = vcombine.high %v3882, %v3890
        %v3910 = vunpack.c.l.s4 1934713408
        %v3911 = vunpack.c.0.s8 %v3910
        %v3912 = vlaneseq
        %v3913 = vshrl.u32 %v3912, 7
        %v3914 = vsub.s32 %v3911, %v3913
        %v3915 = vrot.slane %v3907, %v3914
        %v3917 = vunpack.c.l.s4 1934713408
        %v3918 = vunpack.c.0.s8 %v3917
        %v3919 = vlaneseq
        %v3920 = vshrl.u32 %v3919, 7
        %v3921 = vsub.s32 %v3918, %v3920
        %v3922 = vrot.slane %v3908, %v3921
        %v3923 = vcombine.low %v3899, %v3915
        %v3924 = vcombine.high %v3899, %v3915
        %v3925 = vcombine.low %v3906, %v3922
        %v3926 = vcombine.high %v3906, %v3922
        %3928 = vrot.lane.b32.xlu0 %v3924, 32
        %v3929 = vpop.permute.xlu0 %3928
        %3932 = vrot.lane.b32.xlu0 %v3925, 64
        %v3933 = vpop.permute.xlu0 %3932
        %3936 = vrot.lane.b32.xlu0 %v3926, 96
        %v3937 = vpop.permute.xlu0 %3936
        %v3939 = vsel %vm1993, %v3923, %v3929
        %vm3940 = vcmask 523264
        %v3941 = vsel %vm3940, %v3939, %v3933
        %vm3942 = vcmask 785408
        %v3943 = vsel %vm3942, %v3941, %v3937
        %v3944 = vpack.c.bf16 %v3943, %v3943
        %v3961 = vunpack.c.l.b16 %v463
        %v3962 = vunpack.c.l.b16 %v464
        %v3963 = vunpack.c.l.b16 %v465
        %v3964 = vunpack.c.l.b16 %v466
        %v3965 = vunpack.c.l.b16 %v467
        %v3966 = vunpack.c.l.b16 %v468
        %v3967 = vunpack.c.l.b16 %v469
        %v3968 = vunpack.c.l.b16 %v470
        %v3969 = vunpack.c.l.b16 %v471
        %v3970 = vunpack.c.l.b16 %v472
        %v3971 = vunpack.c.l.b16 %v473
        %v3972 = vunpack.c.l.b16 %v474
        %v3973 = vunpack.c.l.b16 %v475
        %v3974 = vunpack.c.l.b16 %v476
        %v3975 = vunpack.c.l.b16 %v477
        %v3976 = vunpack.c.l.b16 %v478
        %v3977 = vpack.c.b16 %v3962, %v3961
        %v3978 = vpack.c.b16 %v3964, %v3963
        %v3979 = vpack.c.b16 %v3966, %v3965
        %v3980 = vpack.c.b16 %v3968, %v3967
        %v3981 = vpack.c.b16 %v3970, %v3969
        %v3982 = vpack.c.b16 %v3972, %v3971
        %v3983 = vpack.c.b16 %v3974, %v3973
        %v3984 = vpack.c.b16 %v3976, %v3975
        %3993 = vmatprep.subr.bf16.mxu0 0
        %3994 = vmatpush1.bf16.msra.mxu0 %v3977
        %3995 = vmatprep.subr.bf16.mxu0 0
        %3996 = vmatpush1.bf16.msra.mxu0 %v3978
        %3997 = vmatprep.subr.bf16.mxu0 0
        %3998 = vmatpush1.bf16.msra.mxu0 %v3979
        %3999 = vmatprep.subr.bf16.mxu0 0
        %4000 = vmatpush1.bf16.msra.mxu0 %v3980
        %4001 = vmatprep.subr.bf16.mxu0 0
        %4002 = vmatpush1.bf16.msra.mxu0 %v3981
        %4003 = vmatprep.subr.bf16.mxu0 0
        %4004 = vmatpush1.bf16.msra.mxu0 %v3982
        %4005 = vmatprep.subr.bf16.mxu0 0
        %4006 = vmatpush1.bf16.msra.mxu0 %v3983
        %4007 = vmatprep.subr.bf16.mxu0 0
        %4008 = vmatpush1.bf16.msra.mxu0 %v3984
        %4009 = vmatprep.subr.bf16.mxu0 0
        %4010 = vmatpush1.bf16.msra.mxu0 0
        %4011 = vmatprep.subr.bf16.mxu0 0
        %4012 = vmatpush1.bf16.msra.mxu0 0
        %4013 = vmatprep.subr.bf16.mxu0 0
        %4014 = vmatpush1.bf16.msra.mxu0 0
        %4015 = vmatprep.subr.bf16.mxu0 0
        %4016 = vmatpush1.bf16.msra.mxu0 0
        %4017 = vmatprep.subr.bf16.mxu0 0
        %4018 = vmatpush1.bf16.msra.mxu0 0
        %4019 = vmatprep.subr.bf16.mxu0 0
        %4020 = vmatpush1.bf16.msra.mxu0 0
        %4021 = vmatprep.subr.bf16.mxu0 0
        %4022 = vmatpush1.bf16.msra.mxu0 0
        %4023 = vmatprep.subr.bf16.mxu0 0
        %4024 = vmatpush1.bf16.msra.mxu0 0
        %4025 = vmatprep.mubr.bf16.mxu0 0
        %4026 = vmatmul.mubr.bf16.gmra.mrb[0].mxu0 %v3944
        %v4027 = vpop.f32.mrb[0].mxu0
        %v4028 = vadd.f32 %v771, %v4027
        %v4029 = vpop.f32.mrb[0].mxu0
        %v4030 = vpop.f32.mrb[0].mxu0
        %v4031 = vpop.f32.mrb[0].mxu0
        %4032 = vdwg.mxu0
        %4033 = vadd.xlane.f32.xlu0 %v4028
        %v4034 = vpop.xlane.xlu0 %4033
        %v4035 = vrcp.pop 128.0
        %v4036 = vmul.f32 %v4034, %v4035
        %v4037 = vsub.f32 %v4028, %v4036
        %v4038 = vmul.f32 %v4037, %v4037
        %4039 = vadd.xlane.f32.xlu0 %v4038
        %v4040 = vpop.xlane.xlu0 %4039
        %v4041 = vmul.f32 %v4040, %v4035
        %v4042 = vadd.f32 %v4041, 1e-05
        %v4043 = vrsqrt.pop %v4042
        %v4044 = vmul.f32 %v4037, %v4043
        %4045 = vst [vmem:[%s432] sm:$0xff] %v4044
        %s4046 = sand.u32 %s204, 1
        %s4047 = scalar_lea.sflag [#allocation4], %s4046
        %s4048 = sand.u32 %s204, 1
        %s4049 = smul.addr %s4048, 8
        %s4050 = scalar_lea.vmem [#allocation11], %s4049
        %s4051 = sand.u32 %s232, 1
        %s4052 = scalar_lea.sflag [#allocation13], %s4051
        %s4053 = sand.u32 %s232, 1
        %s4054 = smul.addr %s4053, 16
        %s4055 = scalar_lea.vmem [#allocation12], %s4054
        // Predicated region
        $region65: #{tpu_custom_call.1} parent=43 // pred_check
          %p4056 = pneg %p214
        $region66: #{tpu_custom_call.1} parent=43 // pred_check_branch
          %4058 = sbr.rel (%p4056) target = $region68
        $region67: #{tpu_custom_call.1} parent=43 // pred_region
          %s4060 = ssub.s32 128, 128
          %4061 = vsyncadd %s4047, %s4060
          %s4062 = sadd.s32 %s37, %s36
          %s4063 = smul.addr %s4062, 128
          %s4064 = scalar_lea.hbm %s6, %s4063
          %s4066 = sshll.u32 %s4050, 4
          %s4067 = int_to_ptr.vmem [resolvable:$true] %s4066
          %4069 = dma.vmem_to_hbm [thread:$0]  %s4067, 128, %s4064, %s4047
        $region68: #{tpu_custom_call.1} parent=43 // pred_fallthru
          _
        // Predicated region
        $region69: #{tpu_custom_call.1} parent=43 // pred_check
          %p4070 = pneg %p242
        $region70: #{tpu_custom_call.1} parent=43 // pred_check_branch
          %4072 = sbr.rel (%p4070) target = $region72
        $region71: #{tpu_custom_call.1} parent=43 // pred_region
          %s4074 = ssub.s32 256, 256
          %4075 = vsyncadd %s4052, %s4074
          %s4076 = smul.addr %s36, 4
          %s4077 = sadd.s32 %s37, %s4076
          %s4078 = smul.addr %s4077, 64
          %s4079 = scalar_lea.hbm %s7, %s4078
          %s4080 = sshll.u32 %s4055, 4
          %s4081 = int_to_ptr.vmem [resolvable:$true] %s4080
          %4086 = dma.vmem_to_hbm [thread:$0]  %s4081, 256, %s4079, %s4052, 64, 64, 4
        $region72: #{tpu_custom_call.1} parent=43 // pred_fallthru
          _
      $region44: #{tpu_custom_call.1} parent=5 // pred_fallthru
        _
      %p4087 = scmp.le.s32.totalorder 2, %s27
      // Predicated region
      $region73: #{tpu_custom_call.1} parent=5 // pred_check
        %p4088 = pneg %p4087
      $region74: #{tpu_custom_call.1} parent=5 // pred_check_branch
        %4090 = sbr.rel (%p4088) target = $region76
      $region75: #{tpu_custom_call.1} parent=5 // pred_region
        %s4091 = ssub.s32 %s27, 2
        // Predicated region
        $region77: #{tpu_custom_call.1} parent=75 // pred_check
          %p4092 = pneg %p220
        $region78: #{tpu_custom_call.1} parent=75 // pred_check_branch
          %4094 = sbr.rel (%p4092) target = $region80
        $region79: #{tpu_custom_call.1} parent=75 // pred_region
          %s4095 = sand.u32 %s205, 1
          %s4096 = scalar_lea.sflag [#allocation4], %s4095
          %s4097 = sand.u32 %s205, 1
          %s4098 = smul.addr %s4097, 8
          %s4099 = scalar_lea.vmem [#allocation11], %s4098
          %4100 = dma.done %s4096, 128
        $region80: #{tpu_custom_call.1} parent=75 // pred_fallthru
          _
        // Predicated region
        $region81: #{tpu_custom_call.1} parent=75 // pred_check
          %p4101 = pneg %p248
        $region82: #{tpu_custom_call.1} parent=75 // pred_check_branch
          %4103 = sbr.rel (%p4101) target = $region84
        $region83: #{tpu_custom_call.1} parent=75 // pred_region
          %s4104 = sand.u32 %s233, 1
          %s4105 = scalar_lea.sflag [#allocation13], %s4104
          %s4106 = sand.u32 %s233, 1
          %s4107 = smul.addr %s4106, 16
          %s4108 = scalar_lea.vmem [#allocation12], %s4107
          %4109 = dma.done %s4105, 256
        $region84: #{tpu_custom_call.1} parent=75 // pred_fallthru
          _
      $region76: #{tpu_custom_call.1} parent=5 // pred_fallthru
        _
    $region6: #{tpu_custom_call.1} parent=1 // loop_footer
      %s31 = sadd.s32 1, %s27
    $region7: #{tpu_custom_call.1} parent=1 // loop_footer_branch
      %26 = sbr.rel target = $region3
    $region8: #{tpu_custom_call.1} parent=1 // loop_exit
      _
    %4110 = vsyncpa [#allocation3], 1
    %s4111 = scalar_lea.sflag [#allocation3], 1
    %4112 = vsyncpa %s4111, 1
    %4113 = vsyncpa [#allocation6], 1
    %s4114 = scalar_lea.sflag [#allocation6], 1
    %4115 = vsyncpa %s4114, 1
    %4116 = vsyncpa [#allocation9], 1
    %4117 = vsyncpa [#allocation4], 1
    %s4118 = scalar_lea.sflag [#allocation4], 1
    %4119 = vsyncpa %s4118, 1
    %4120 = vsyncpa [#allocation13], 1
    %s4121 = scalar_lea.sflag [#allocation13], 1
    %4122 = vsyncpa %s4121, 1

</llo_original>
